<compile_context>
chip_gen: v7x
topology: tpu7x:2x2x1
jax: 0.10.0
libtpu: 0.0.40
codegen_flags: <defaults>
</compile_context>

<pallas_src>
import functools

import jax
import jax.numpy as jnp
from jax.experimental import pallas as pl
from jax.experimental.pallas import tpu as pltpu


def _agg_pna_kernel(x_ref, d_ref, w1_ref, b1_ref, w2_ref, b2_ref, o_ref, h_ref,
                    *, avg_d, f_x):
    x = x_ref[...]                        # [TM, F_x] fp32
    d = d_ref[...]                        # [TM, 1]   fp32

    # Degree scalers (fp32, EUP/VPU work — has slack next to the MXU).
    log_d = jnp.log(d + 1.0)              # [TM, 1]
    s_amp = log_d * (1.0 / avg_d)         # amplification scaler
    s_att = avg_d / log_d                 # attenuation scaler (inf where d == 0)
    s_att = jnp.where(jnp.isinf(s_att), jnp.zeros_like(s_att), s_att)

    # h = [x, x*s_amp, x*s_att] concatenated on the feature axis, materialized in a
    # bf16 VMEM scratch (pieces cast as they are stored) so the first GEMM is one
    # K=3*F_x contraction and the scratch store/reload bytes are halved vs fp32.
    h_ref[:, 0 * f_x:1 * f_x] = x.astype(jnp.bfloat16)
    h_ref[:, 1 * f_x:2 * f_x] = (x * s_amp).astype(jnp.bfloat16)
    h_ref[:, 2 * f_x:3 * f_x] = (x * s_att).astype(jnp.bfloat16)

    # posttrans MLP: Linear -> ReLU -> (Dropout = identity) -> Linear
    # bf16 MXU inputs, fp32 accumulation.  bias+ReLU+cast fused so the materialized
    # inter-GEMM activation is bf16.
    z = jnp.dot(h_ref[...], w1_ref[...], preferred_element_type=jnp.float32)
    z = jnp.maximum(z + b1_ref[...], 0.0).astype(jnp.bfloat16)   # [TM, H] bf16

    out = jnp.dot(z, w2_ref[...], preferred_element_type=jnp.float32)
    out = out + b2_ref[...]
    o_ref[...] = out.astype(o_ref.dtype)


def _num_tensorcores():
    """2 TensorCores per chip on v7x, 1 on v5e/v6e."""
    try:
        kind = jax.devices()[0].device_kind.lower()
    except Exception:
        return 1
    return 2 if "v7" in kind else 1


def _choose_tm(n, block_m):
    """Node tile: as large as possible (amortizes per-grid-step overhead), multiple
    of 8, bounded by the padded node count.  On multi-TensorCore chips (v7x) cap it
    so the parallel grid axis keeps >= 2 blocks per core."""
    n8 = max(8, ((n + 7) // 8) * 8)
    tm = min(block_m, n8)
    tm = max(8, (tm // 8) * 8)
    ntc = _num_tensorcores()
    if ntc > 1:
        min_blocks = 2 * ntc
        if pl.cdiv(n8, tm) < min_blocks and n8 >= min_blocks * 8:
            tm = max(8, (pl.cdiv(n8, min_blocks) // 8) * 8)
    return tm


def prepare_agg_pna_params(w1, b1, w2, b2):
    """One-time parameter staging: bf16 weight casts + bias reshapes are hoisted out
    of the per-call path (they would otherwise add an HBM read/write op on the
    critical path of a few-microsecond kernel)."""
    return (w1.astype(jnp.bfloat16),
            b1.reshape(1, -1).astype(jnp.float32),
            w2.astype(jnp.bfloat16),
            b2.reshape(1, -1).astype(jnp.float32))


def agg_func_pna(x, d, params, avg_d, *, block_m=1024):
    """x: [N, A*E] float32, d: [N] float32 node degrees, params from
    prepare_agg_pna_params."""
    w1_bf, b1_2, w2_bf, b2_2 = params
    n, f_x = x.shape
    f_h, hidden = w1_bf.shape              # f_h = 3 * f_x
    e = w2_bf.shape[1]
    assert f_h == 3 * f_x and w2_bf.shape[0] == hidden

    tm = _choose_tm(n, block_m)
    n_pad = ((n + tm - 1) // tm) * tm

    x_p = x.astype(jnp.float32)
    d_p = d.reshape(-1).astype(jnp.float32)
    if n_pad != n:
        x_p = jnp.pad(x_p, ((0, n_pad - n), (0, 0)))
        d_p = jnp.pad(d_p, ((0, n_pad - n),))
    d2 = d_p.reshape(n_pad, 1)

    kernel = functools.partial(_agg_pna_kernel, avg_d=float(avg_d), f_x=f_x)

    grid = (pl.cdiv(n_pad, tm),)

    cost = pl.CostEstimate(
        flops=2 * n_pad * (f_h * hidden + hidden * e),
        transcendentals=n_pad,
        bytes_accessed=(n_pad * f_x * 4 + n_pad * 4            # x, d
                        + f_h * hidden * 2 + hidden * 4        # w1 (bf16), b1
                        + hidden * e * 2 + e * 4               # w2 (bf16), b2
                        + n_pad * e * 4),                      # out
    )

    out = pl.pallas_call(
        kernel,
        out_shape=jax.ShapeDtypeStruct((n_pad, e), jnp.float32),
        grid=grid,
        in_specs=[
            pl.BlockSpec((tm, f_x), lambda i: (i, 0)),         # x: streams with grid
            pl.BlockSpec((tm, 1), lambda i: (i, 0)),           # d: streams with grid
            pl.BlockSpec((f_h, hidden), lambda i: (0, 0)),     # W1: VMEM-resident
            pl.BlockSpec((1, hidden), lambda i: (0, 0)),       # b1
            pl.BlockSpec((hidden, e), lambda i: (0, 0)),       # W2
            pl.BlockSpec((1, e), lambda i: (0, 0)),            # b2
        ],
        out_specs=pl.BlockSpec((tm, e), lambda i: (i, 0)),
        # bf16 concat scratch (halves store/reload bytes vs fp32).
        scratch_shapes=[pltpu.VMEM((tm, f_h), jnp.bfloat16)],
        compiler_params=pltpu.CompilerParams(
            dimension_semantics=("parallel",)),
        cost_estimate=cost,
    )(x_p, d2, w1_bf, b1_2, w2_bf, b2_2)

    return out[:n]


def _reference(x, d, w1, b1, w2, b2, avg_d, matmul_dtype=jnp.float32):
    """Pure-JAX reference of the PyTorch module (optionally with bf16 matmul inputs)."""
    log_d = jnp.log(d + 1.0)[:, None]
    s_amp = log_d / avg_d
    s_att = avg_d / log_d
    s_att = jnp.where(jnp.isinf(s_att), 0.0, s_att)
    h = jnp.concatenate([x, x * s_amp, x * s_att], axis=1)
    z = jnp.dot(h.astype(matmul_dtype), w1.astype(matmul_dtype),
                preferred_element_type=jnp.float32) + b1[None, :]
    z = jnp.maximum(z, 0.0)
    return jnp.dot(z.astype(matmul_dtype), w2.astype(matmul_dtype),
                   preferred_element_type=jnp.float32) + b2[None, :]


if __name__ == "__main__":
    # Configuration implied by Agg_func.__init__:
    #   aggregators = ['mean', 'max']                               -> A = 2
    #   scalers     = ['identity', 'amplification', 'attenuation']  -> S = 3
    #   embedding_size E = 32
    E, A, S = 32, 2, 3
    N = 300                # exercises tail padding (and a multi-block grid below)
    F_X = A * E            # 64   (x already holds concatenated aggregator outputs)
    F_H = S * F_X          # 192  (posttrans in_features)
    HID = 4 * F_H          # 768  (posttrans hidden_size)
    AVG_D = 2.5

    key = jax.random.PRNGKey(0)
    kx, kd, k1, k2, k3, k4 = jax.random.split(key, 6)

    x = jax.random.normal(kx, (N, F_X), dtype=jnp.float32)
    d = jax.random.randint(kd, (N,), 0, 10).astype(jnp.float32)
    d = d.at[0].set(0.0)   # exercise the attenuation inf -> 0 branch

    w1 = jax.random.normal(k1, (F_H, HID), dtype=jnp.float32) * 0.05
    b1 = jax.random.normal(k2, (HID,), dtype=jnp.float32) * 0.01
    w2 = jax.random.normal(k3, (HID, E), dtype=jnp.float32) * 0.05
    b2 = jax.random.normal(k4, (E,), dtype=jnp.float32) * 0.01

    # Parameters staged once (bf16 cast / bias reshape hoisted off the call path).
    params = prepare_agg_pna_params(w1, b1, w2, b2)

    # Default (single large node tile) and a forced small tile (multi-block grid).
    out = agg_func_pna(x, d, params, AVG_D)
    out_small = agg_func_pna(x, d, params, AVG_D, block_m=128)
    jax.block_until_ready(out)
    jax.block_until_ready(out_small)
    assert out.shape == (N, E) and out_small.shape == (N, E)

    # Tight check against a reference that uses the same bf16-input / fp32-accum GEMMs.
    ref_bf16 = _reference(x, d, w1, b1, w2, b2, AVG_D, matmul_dtype=jnp.bfloat16)
    assert jnp.allclose(out, ref_bf16, atol=1e-2, rtol=1e-2)
    assert jnp.allclose(out_small, ref_bf16, atol=1e-2, rtol=1e-2)

    # Looser check against the full-fp32 reference (bf16 MXU inputs introduce ~1% error).
    ref_f32 = _reference(x, d, w1, b1, w2, b2, AVG_D, matmul_dtype=jnp.float32)
    rel_err = jnp.max(jnp.abs(out - ref_f32)) / (jnp.max(jnp.abs(ref_f32)) + 1e-6)
    assert rel_err < 5e-2

    print("KERNEL_OK")
</pallas_src>

<mosaic_0001>
module attributes {stable_mosaic.version = 11 : i64} {
  func.func @_agg_pna_kernel(%arg0: i32, %arg1: memref<304x64xf32, #tpu.memory_space<vmem>>, %arg2: memref<304x1xf32, #tpu.memory_space<vmem>>, %arg3: memref<192x768xbf16, #tpu.memory_space<vmem>>, %arg4: memref<1x768xf32, #tpu.memory_space<vmem>>, %arg5: memref<768x32xbf16, #tpu.memory_space<vmem>>, %arg6: memref<1x32xf32, #tpu.memory_space<vmem>>, %arg7: memref<304x32xf32, #tpu.memory_space<vmem>>, %arg8: memref<304x192xbf16, #tpu.memory_space<vmem>>) attributes {dimension_semantics = [#tpu.dimension_semantics<parallel>], iteration_bounds = array<i64: 1>, scalar_prefetch = 0 : i64, scratch_operands = 1 : i64, tpu.core_type = #tpu.core_type<tc>, window_params = [{transform_indices = @transform_0, window_bounds = array<i64: 304, 64>}, {transform_indices = @transform_1, window_bounds = array<i64: 304, 1>}, {pipeline_mode = #tpu.pipeline_mode<synchronous>, transform_indices = @transform_2, window_bounds = array<i64: 192, 768>}, {pipeline_mode = #tpu.pipeline_mode<synchronous>, transform_indices = @transform_3, window_bounds = array<i64: 1, 768>}, {pipeline_mode = #tpu.pipeline_mode<synchronous>, transform_indices = @transform_4, window_bounds = array<i64: 768, 32>}, {pipeline_mode = #tpu.pipeline_mode<synchronous>, transform_indices = @transform_5, window_bounds = array<i64: 1, 32>}, {transform_indices = @transform_6, window_bounds = array<i64: 304, 32>}]} {
    %c0 = arith.constant 0 : index
    %c0_0 = arith.constant 0 : index
    %0 = vector.load %arg1[%c0, %c0_0] : memref<304x64xf32, #tpu.memory_space<vmem>>, vector<304x64xf32>
    %c0_1 = arith.constant 0 : index
    %c0_2 = arith.constant 0 : index
    %1 = vector.load %arg2[%c0_1, %c0_2] : memref<304x1xf32, #tpu.memory_space<vmem>>, vector<304x1xf32>
    %cst = arith.constant 1.000000e+00 : f32
    %2 = vector.broadcast %cst : f32 to vector<304x1xf32>
    %3 = arith.addf %1, %2 : vector<304x1xf32>
    %4 = math.log %3 : vector<304x1xf32>
    %cst_3 = arith.constant 4.000000e-01 : f32
    %5 = vector.broadcast %cst_3 : f32 to vector<304x1xf32>
    %6 = arith.mulf %4, %5 : vector<304x1xf32>
    %cst_4 = arith.constant 2.500000e+00 : f32
    %7 = vector.broadcast %cst_4 : f32 to vector<304x1xf32>
    %8 = arith.divf %7, %4 : vector<304x1xf32>
    %9 = math.absf %8 : vector<304x1xf32>
    %cst_5 = arith.constant 0x7F800000 : f32
    %10 = vector.broadcast %cst_5 : f32 to vector<304x1xf32>
    %11 = arith.cmpf oeq, %9, %10 : vector<304x1xf32>
    %cst_6 = arith.constant 0.000000e+00 : f32
    %12 = vector.broadcast %cst_6 : f32 to vector<304x1xf32>
    %13 = arith.select %11, %12, %8 : vector<304x1xi1>, vector<304x1xf32>
    %14 = arith.truncf %0 : vector<304x64xf32> to vector<304x64xbf16>
    %c0_7 = arith.constant 0 : index
    %c0_8 = arith.constant 0 : index
    %15 = vector.load %arg8[%c0_7, %c0_8] : memref<304x192xbf16, #tpu.memory_space<vmem>>, vector<304x64xbf16>
    tpu.vector_store %arg8[%c0_7, %c0_8], %14 {strides = array<i32>} : memref<304x192xbf16, #tpu.memory_space<vmem>>, vector<304x64xbf16>,
    %16 = vector.broadcast %6 : vector<304x1xf32> to vector<304x64xf32>
    %17 = arith.mulf %0, %16 : vector<304x64xf32>
    %18 = arith.truncf %17 : vector<304x64xf32> to vector<304x64xbf16>
    %c0_9 = arith.constant 0 : index
    %c64 = arith.constant 64 : index
    %19 = vector.load %arg8[%c0_9, %c64] : memref<304x192xbf16, #tpu.memory_space<vmem>>, vector<304x64xbf16>
    tpu.vector_store %arg8[%c0_9, %c64], %18 {strides = array<i32>} : memref<304x192xbf16, #tpu.memory_space<vmem>>, vector<304x64xbf16>,
    %20 = vector.broadcast %13 : vector<304x1xf32> to vector<304x64xf32>
    %21 = arith.mulf %0, %20 : vector<304x64xf32>
    %22 = arith.truncf %21 : vector<304x64xf32> to vector<304x64xbf16>
    %c0_10 = arith.constant 0 : index
    %c128 = arith.constant 128 : index
    %23 = vector.load %arg8[%c0_10, %c128] : memref<304x192xbf16, #tpu.memory_space<vmem>>, vector<304x64xbf16>
    tpu.vector_store %arg8[%c0_10, %c128], %22 {strides = array<i32>} : memref<304x192xbf16, #tpu.memory_space<vmem>>, vector<304x64xbf16>,
    %c0_11 = arith.constant 0 : index
    %c0_12 = arith.constant 0 : index
    %24 = vector.load %arg8[%c0_11, %c0_12] : memref<304x192xbf16, #tpu.memory_space<vmem>>, vector<304x192xbf16>
    %c0_13 = arith.constant 0 : index
    %c0_14 = arith.constant 0 : index
    %25 = vector.load %arg3[%c0_13, %c0_14] : memref<192x768xbf16, #tpu.memory_space<vmem>>, vector<192x768xbf16>
    %cst_15 = arith.constant dense<0.000000e+00> : vector<304x768xf32>
    %26 = tpu.matmul %24, %25, %cst_15 {dimension_numbers = #tpu.dot_dimension_numbers<[1], [0], [0], [1], [0, 0, 1, 1], [], []>} : vector<304x192xbf16>, vector<192x768xbf16>, vector<304x768xf32> -> vector<304x768xf32>
    %c0_16 = arith.constant 0 : index
    %c0_17 = arith.constant 0 : index
    %27 = vector.load %arg4[%c0_16, %c0_17] : memref<1x768xf32, #tpu.memory_space<vmem>>, vector<1x768xf32>
    %28 = vector.broadcast %27 : vector<1x768xf32> to vector<304x768xf32>
    %29 = arith.addf %26, %28 : vector<304x768xf32>
    %cst_18 = arith.constant 0.000000e+00 : f32
    %30 = vector.broadcast %cst_18 : f32 to vector<304x768xf32>
    %31 = arith.maximumf %29, %30 : vector<304x768xf32>
    %32 = arith.truncf %31 : vector<304x768xf32> to vector<304x768xbf16>
    %c0_19 = arith.constant 0 : index
    %c0_20 = arith.constant 0 : index
    %33 = vector.load %arg5[%c0_19, %c0_20] : memref<768x32xbf16, #tpu.memory_space<vmem>>, vector<768x32xbf16>
    %cst_21 = arith.constant dense<0.000000e+00> : vector<304x32xf32>
    %34 = tpu.matmul %32, %33, %cst_21 {dimension_numbers = #tpu.dot_dimension_numbers<[1], [0], [0], [1], [0, 0, 1, 1], [], []>} : vector<304x768xbf16>, vector<768x32xbf16>, vector<304x32xf32> -> vector<304x32xf32>
    %c0_22 = arith.constant 0 : index
    %c0_23 = arith.constant 0 : index
    %35 = vector.load %arg6[%c0_22, %c0_23] : memref<1x32xf32, #tpu.memory_space<vmem>>, vector<1x32xf32>
    %36 = vector.broadcast %35 : vector<1x32xf32> to vector<304x32xf32>
    %37 = arith.addf %34, %36 : vector<304x32xf32>
    %c0_24 = arith.constant 0 : index
    %c0_25 = arith.constant 0 : index
    %38 = vector.load %arg7[%c0_24, %c0_25] : memref<304x32xf32, #tpu.memory_space<vmem>>, vector<304x32xf32>
    tpu.vector_store %arg7[%c0_24, %c0_25], %37 {strides = array<i32>} : memref<304x32xf32, #tpu.memory_space<vmem>>, vector<304x32xf32>,
    return
  }
  func.func @transform_0(%arg0: i32) -> (i32, i32) {
    %c0_i32 = arith.constant 0 : i32
    %c0_i32_0 = arith.constant 0 : i32
    return %arg0, %c0_i32 : i32, i32
  }
  func.func @transform_1(%arg0: i32) -> (i32, i32) {
    %c0_i32 = arith.constant 0 : i32
    %c0_i32_0 = arith.constant 0 : i32
    return %arg0, %c0_i32 : i32, i32
  }
  func.func @transform_2(%arg0: i32) -> (i32, i32) {
    %c0_i32 = arith.constant 0 : i32
    %c0_i32_0 = arith.constant 0 : i32
    %c0_i32_1 = arith.constant 0 : i32
    return %c0_i32, %c0_i32_0 : i32, i32
  }
  func.func @transform_3(%arg0: i32) -> (i32, i32) {
    %c0_i32 = arith.constant 0 : i32
    %c0_i32_0 = arith.constant 0 : i32
    %c0_i32_1 = arith.constant 0 : i32
    return %c0_i32, %c0_i32_0 : i32, i32
  }
  func.func @transform_4(%arg0: i32) -> (i32, i32) {
    %c0_i32 = arith.constant 0 : i32
    %c0_i32_0 = arith.constant 0 : i32
    %c0_i32_1 = arith.constant 0 : i32
    return %c0_i32, %c0_i32_0 : i32, i32
  }
  func.func @transform_5(%arg0: i32) -> (i32, i32) {
    %c0_i32 = arith.constant 0 : i32
    %c0_i32_0 = arith.constant 0 : i32
    %c0_i32_1 = arith.constant 0 : i32
    return %c0_i32, %c0_i32_0 : i32, i32
  }
  func.func @transform_6(%arg0: i32) -> (i32, i32) {
    %c0_i32 = arith.constant 0 : i32
    %c0_i32_0 = arith.constant 0 : i32
    return %arg0, %c0_i32 : i32, i32
  }
}

</mosaic_0001>

<llo_original>
// kernel: tpu_custom_call.1
$region0: #{tpu_custom_call.1}
  #allocation0 [shape = 'u32[]', space=smem, size = 0x4, offset = 0x4, fixed_abs, tag = 'smem constant byte address 0x4 - core index']
  #allocation1 [shape = 'u32[144,128]{1,0:T(1,128)}', space=vmem, size = 0x12000, scoped, tag = 'internal scratch']
  #allocation2 [shape = 'bf16[304,192]{1,0:T(16,128)(2,1)}', space=vmem, size = 0x26000, scoped, tag = 'scratch operand']
  %s0 = inlined_call_operand.vmem [shape: f32[304,64], index: 0, kind: input, shape index: {}]
  %s1 = inlined_call_operand.vmem [shape: f32[304,1], index: 1, kind: input, shape index: {}]
  %s2 = inlined_call_operand.vmem [shape: bf16[192,768], index: 2, kind: input, shape index: {}]
  %s3 = inlined_call_operand.vmem [shape: f32[1,768], index: 3, kind: input, shape index: {}]
  %s4 = inlined_call_operand.vmem [shape: bf16[768,32], index: 4, kind: input, shape index: {}]
  %s5 = inlined_call_operand.vmem [shape: f32[1,32], index: 5, kind: input, shape index: {}]
  %s6 = inlined_call_operand.vmem [shape: f32[304,32], index: 6, kind: output, shape index: {}]
  %s7 = sld [smem:[#allocation0]]
  $region34: #{tpu_custom_call.1} parent=0
    _
  %s9 = ssub.s32 1, %s7
  %s10 = scalar_select 0, %s9, %s7
  // Predicated region
  $region2: #{tpu_custom_call.1} parent=0 // pred_check
    _
  $region3: #{tpu_custom_call.1} parent=0 // pred_check_branch
    %12 = sbr.rel (0) target = $region5
  $region4: #{tpu_custom_call.1} parent=0 // pred_region
    _
  $region5: #{tpu_custom_call.1} parent=0 // pred_fallthru
    _
  // Predicated region
  $region6: #{tpu_custom_call.1} parent=0 // pred_check
    _
  $region7: #{tpu_custom_call.1} parent=0 // pred_check_branch
    %14 = sbr.rel (0) target = $region9
  $region8: #{tpu_custom_call.1} parent=0 // pred_region
    _
  $region9: #{tpu_custom_call.1} parent=0 // pred_fallthru
    _
  // Predicated region
  $region10: #{tpu_custom_call.1} parent=0 // pred_check
    _
  $region11: #{tpu_custom_call.1} parent=0 // pred_check_branch
    %16 = sbr.rel (0) target = $region13
  $region12: #{tpu_custom_call.1} parent=0 // pred_region
    _
  $region13: #{tpu_custom_call.1} parent=0 // pred_fallthru
    _
  // Predicated region
  $region14: #{tpu_custom_call.1} parent=0 // pred_check
    _
  $region15: #{tpu_custom_call.1} parent=0 // pred_check_branch
    %18 = sbr.rel (0) target = $region17
  $region16: #{tpu_custom_call.1} parent=0 // pred_region
    _
  $region17: #{tpu_custom_call.1} parent=0 // pred_fallthru
    _
  // Predicated region
  $region18: #{tpu_custom_call.1} parent=0 // pred_check
    _
  $region19: #{tpu_custom_call.1} parent=0 // pred_check_branch
    %20 = sbr.rel (0) target = $region21
  $region20: #{tpu_custom_call.1} parent=0 // pred_region
    _
  $region21: #{tpu_custom_call.1} parent=0 // pred_fallthru
    _
  // Predicated region
  $region22: #{tpu_custom_call.1} parent=0 // pred_check
    _
  $region23: #{tpu_custom_call.1} parent=0 // pred_check_branch
    %22 = sbr.rel (0) target = $region25
  $region24: #{tpu_custom_call.1} parent=0 // pred_region
    _
  $region25: #{tpu_custom_call.1} parent=0 // pred_fallthru
    _
  %v24 = vld [vmem:[%s0] sm:$0xff]
  %v25 = vld [vmem:[%s0 + $0x8] sm:$0xff]
  %v26 = vld [vmem:[%s0 + $0x10] sm:$0xff]
  %v27 = vld [vmem:[%s0 + $0x18] sm:$0xff]
  %v28 = vld [vmem:[%s0 + $0x20] sm:$0xff]
  %v29 = vld [vmem:[%s0 + $0x28] sm:$0xff]
  %v30 = vld [vmem:[%s0 + $0x30] sm:$0xff]
  %v31 = vld [vmem:[%s0 + $0x38] sm:$0xff]
  %v32 = vld [vmem:[%s0 + $0x40] sm:$0xff]
  %v33 = vld [vmem:[%s0 + $0x48] sm:$0xff]
  %v34 = vld [vmem:[%s0 + $0x50] sm:$0xff]
  %v35 = vld [vmem:[%s0 + $0x58] sm:$0xff]
  %v36 = vld [vmem:[%s0 + $0x60] sm:$0xff]
  %v37 = vld [vmem:[%s0 + $0x68] sm:$0xff]
  %v38 = vld [vmem:[%s0 + $0x70] sm:$0xff]
  %v39 = vld [vmem:[%s0 + $0x78] sm:$0xff]
  %v40 = vld [vmem:[%s0 + $0x80] sm:$0xff]
  %v41 = vld [vmem:[%s0 + $0x88] sm:$0xff]
  %v42 = vld [vmem:[%s0 + $0x90] sm:$0xff]
  %v43 = vld [vmem:[%s0 + $0x98] sm:$0xff]
  %v44 = vld [vmem:[%s0 + $0xa0] sm:$0xff]
  %v45 = vld [vmem:[%s0 + $0xa8] sm:$0xff]
  %v46 = vld [vmem:[%s0 + $0xb0] sm:$0xff]
  %v47 = vld [vmem:[%s0 + $0xb8] sm:$0xff]
  %v48 = vld [vmem:[%s0 + $0xc0] sm:$0xff]
  %v49 = vld [vmem:[%s0 + $0xc8] sm:$0xff]
  %v50 = vld [vmem:[%s0 + $0xd0] sm:$0xff]
  %v51 = vld [vmem:[%s0 + $0xd8] sm:$0xff]
  %v52 = vld [vmem:[%s0 + $0xe0] sm:$0xff]
  %v53 = vld [vmem:[%s0 + $0xe8] sm:$0xff]
  %v54 = vld [vmem:[%s0 + $0xf0] sm:$0xff]
  %v55 = vld [vmem:[%s0 + $0xf8] sm:$0xff]
  %v56 = vld [vmem:[%s0 + $0x100] sm:$0xff]
  %v57 = vld [vmem:[%s0 + $0x108] sm:$0xff]
  %v58 = vld [vmem:[%s0 + $0x110] sm:$0xff]
  %v59 = vld [vmem:[%s0 + $0x118] sm:$0xff]
  %v60 = vld [vmem:[%s0 + $0x120] sm:$0xff]
  %v61 = vld [vmem:[%s0 + $0x128] sm:$0xff]
  %v62 = vld [vmem:[%s1] sm:$0xff]
  %v63 = vld [vmem:[%s1 + $0x8] sm:$0xff]
  %v64 = vld [vmem:[%s1 + $0x10] sm:$0xff]
  %v65 = vld [vmem:[%s1 + $0x18] sm:$0xff]
  %v66 = vld [vmem:[%s1 + $0x20] sm:$0xff]
  %v67 = vld [vmem:[%s1 + $0x28] sm:$0xff]
  %v68 = vld [vmem:[%s1 + $0x30] sm:$0xff]
  %v69 = vld [vmem:[%s1 + $0x38] sm:$0xff]
  %v70 = vld [vmem:[%s1 + $0x40] sm:$0xff]
  %v71 = vld [vmem:[%s1 + $0x48] sm:$0xff]
  %v72 = vld [vmem:[%s1 + $0x50] sm:$0xff]
  %v73 = vld [vmem:[%s1 + $0x58] sm:$0xff]
  %v74 = vld [vmem:[%s1 + $0x60] sm:$0xff]
  %v75 = vld [vmem:[%s1 + $0x68] sm:$0xff]
  %v76 = vld [vmem:[%s1 + $0x70] sm:$0xff]
  %v77 = vld [vmem:[%s1 + $0x78] sm:$0xff]
  %v78 = vld [vmem:[%s1 + $0x80] sm:$0xff]
  %v79 = vld [vmem:[%s1 + $0x88] sm:$0xff]
  %v80 = vld [vmem:[%s1 + $0x90] sm:$0xff]
  %v81 = vld [vmem:[%s1 + $0x98] sm:$0xff]
  %v82 = vld [vmem:[%s1 + $0xa0] sm:$0xff]
  %v83 = vld [vmem:[%s1 + $0xa8] sm:$0xff]
  %v84 = vld [vmem:[%s1 + $0xb0] sm:$0xff]
  %v85 = vld [vmem:[%s1 + $0xb8] sm:$0xff]
  %v86 = vld [vmem:[%s1 + $0xc0] sm:$0xff]
  %v87 = vld [vmem:[%s1 + $0xc8] sm:$0xff]
  %v88 = vld [vmem:[%s1 + $0xd0] sm:$0xff]
  %v89 = vld [vmem:[%s1 + $0xd8] sm:$0xff]
  %v90 = vld [vmem:[%s1 + $0xe0] sm:$0xff]
  %v91 = vld [vmem:[%s1 + $0xe8] sm:$0xff]
  %v92 = vld [vmem:[%s1 + $0xf0] sm:$0xff]
  %v93 = vld [vmem:[%s1 + $0xf8] sm:$0xff]
  %v94 = vld [vmem:[%s1 + $0x100] sm:$0xff]
  %v95 = vld [vmem:[%s1 + $0x108] sm:$0xff]
  %v96 = vld [vmem:[%s1 + $0x110] sm:$0xff]
  %v97 = vld [vmem:[%s1 + $0x118] sm:$0xff]
  %v98 = vld [vmem:[%s1 + $0x120] sm:$0xff]
  %v99 = vld [vmem:[%s1 + $0x128] sm:$0xff]
  %v100 = vadd.f32 %v62, 1.0
  %v101 = vadd.f32 %v63, 1.0
  %v102 = vadd.f32 %v64, 1.0
  %v103 = vadd.f32 %v65, 1.0
  %v104 = vadd.f32 %v66, 1.0
  %v105 = vadd.f32 %v67, 1.0
  %v106 = vadd.f32 %v68, 1.0
  %v107 = vadd.f32 %v69, 1.0
  %v108 = vadd.f32 %v70, 1.0
  %v109 = vadd.f32 %v71, 1.0
  %v110 = vadd.f32 %v72, 1.0
  %v111 = vadd.f32 %v73, 1.0
  %v112 = vadd.f32 %v74, 1.0
  %v113 = vadd.f32 %v75, 1.0
  %v114 = vadd.f32 %v76, 1.0
  %v115 = vadd.f32 %v77, 1.0
  %v116 = vadd.f32 %v78, 1.0
  %v117 = vadd.f32 %v79, 1.0
  %v118 = vadd.f32 %v80, 1.0
  %v119 = vadd.f32 %v81, 1.0
  %v120 = vadd.f32 %v82, 1.0
  %v121 = vadd.f32 %v83, 1.0
  %v122 = vadd.f32 %v84, 1.0
  %v123 = vadd.f32 %v85, 1.0
  %v124 = vadd.f32 %v86, 1.0
  %v125 = vadd.f32 %v87, 1.0
  %v126 = vadd.f32 %v88, 1.0
  %v127 = vadd.f32 %v89, 1.0
  %v128 = vadd.f32 %v90, 1.0
  %v129 = vadd.f32 %v91, 1.0
  %v130 = vadd.f32 %v92, 1.0
  %v131 = vadd.f32 %v93, 1.0
  %v132 = vadd.f32 %v94, 1.0
  %v133 = vadd.f32 %v95, 1.0
  %v134 = vadd.f32 %v96, 1.0
  %v135 = vadd.f32 %v97, 1.0
  %v136 = vadd.f32 %v98, 1.0
  %v137 = vadd.f32 %v99, 1.0
  %v138 = vlog2.pop %v100
  %v139 = vmul.f32 %v138, 0.6931472
  %v140 = vlog2.pop %v101
  %v141 = vmul.f32 %v140, 0.6931472
  %v142 = vlog2.pop %v102
  %v143 = vmul.f32 %v142, 0.6931472
  %v144 = vlog2.pop %v103
  %v145 = vmul.f32 %v144, 0.6931472
  %v146 = vlog2.pop %v104
  %v147 = vmul.f32 %v146, 0.6931472
  %v148 = vlog2.pop %v105
  %v149 = vmul.f32 %v148, 0.6931472
  %v150 = vlog2.pop %v106
  %v151 = vmul.f32 %v150, 0.6931472
  %v152 = vlog2.pop %v107
  %v153 = vmul.f32 %v152, 0.6931472
  %v154 = vlog2.pop %v108
  %v155 = vmul.f32 %v154, 0.6931472
  %v156 = vlog2.pop %v109
  %v157 = vmul.f32 %v156, 0.6931472
  %v158 = vlog2.pop %v110
  %v159 = vmul.f32 %v158, 0.6931472
  %v160 = vlog2.pop %v111
  %v161 = vmul.f32 %v160, 0.6931472
  %v162 = vlog2.pop %v112
  %v163 = vmul.f32 %v162, 0.6931472
  %v164 = vlog2.pop %v113
  %v165 = vmul.f32 %v164, 0.6931472
  %v166 = vlog2.pop %v114
  %v167 = vmul.f32 %v166, 0.6931472
  %v168 = vlog2.pop %v115
  %v169 = vmul.f32 %v168, 0.6931472
  %v170 = vlog2.pop %v116
  %v171 = vmul.f32 %v170, 0.6931472
  %v172 = vlog2.pop %v117
  %v173 = vmul.f32 %v172, 0.6931472
  %v174 = vlog2.pop %v118
  %v175 = vmul.f32 %v174, 0.6931472
  %v176 = vlog2.pop %v119
  %v177 = vmul.f32 %v176, 0.6931472
  %v178 = vlog2.pop %v120
  %v179 = vmul.f32 %v178, 0.6931472
  %v180 = vlog2.pop %v121
  %v181 = vmul.f32 %v180, 0.6931472
  %v182 = vlog2.pop %v122
  %v183 = vmul.f32 %v182, 0.6931472
  %v184 = vlog2.pop %v123
  %v185 = vmul.f32 %v184, 0.6931472
  %v186 = vlog2.pop %v124
  %v187 = vmul.f32 %v186, 0.6931472
  %v188 = vlog2.pop %v125
  %v189 = vmul.f32 %v188, 0.6931472
  %v190 = vlog2.pop %v126
  %v191 = vmul.f32 %v190, 0.6931472
  %v192 = vlog2.pop %v127
  %v193 = vmul.f32 %v192, 0.6931472
  %v194 = vlog2.pop %v128
  %v195 = vmul.f32 %v194, 0.6931472
  %v196 = vlog2.pop %v129
  %v197 = vmul.f32 %v196, 0.6931472
  %v198 = vlog2.pop %v130
  %v199 = vmul.f32 %v198, 0.6931472
  %v200 = vlog2.pop %v131
  %v201 = vmul.f32 %v200, 0.6931472
  %v202 = vlog2.pop %v132
  %v203 = vmul.f32 %v202, 0.6931472
  %v204 = vlog2.pop %v133
  %v205 = vmul.f32 %v204, 0.6931472
  %v206 = vlog2.pop %v134
  %v207 = vmul.f32 %v206, 0.6931472
  %v208 = vlog2.pop %v135
  %v209 = vmul.f32 %v208, 0.6931472
  %v210 = vlog2.pop %v136
  %v211 = vmul.f32 %v210, 0.6931472
  %v212 = vlog2.pop %v137
  %v213 = vmul.f32 %v212, 0.6931472
  %v214 = vmul.f32 %v139, 0.4
  %v215 = vmul.f32 %v141, 0.4
  %v216 = vmul.f32 %v143, 0.4
  %v217 = vmul.f32 %v145, 0.4
  %v218 = vmul.f32 %v147, 0.4
  %v219 = vmul.f32 %v149, 0.4
  %v220 = vmul.f32 %v151, 0.4
  %v221 = vmul.f32 %v153, 0.4
  %v222 = vmul.f32 %v155, 0.4
  %v223 = vmul.f32 %v157, 0.4
  %v224 = vmul.f32 %v159, 0.4
  %v225 = vmul.f32 %v161, 0.4
  %v226 = vmul.f32 %v163, 0.4
  %v227 = vmul.f32 %v165, 0.4
  %v228 = vmul.f32 %v167, 0.4
  %v229 = vmul.f32 %v169, 0.4
  %v230 = vmul.f32 %v171, 0.4
  %v231 = vmul.f32 %v173, 0.4
  %v232 = vmul.f32 %v175, 0.4
  %v233 = vmul.f32 %v177, 0.4
  %v234 = vmul.f32 %v179, 0.4
  %v235 = vmul.f32 %v181, 0.4
  %v236 = vmul.f32 %v183, 0.4
  %v237 = vmul.f32 %v185, 0.4
  %v238 = vmul.f32 %v187, 0.4
  %v239 = vmul.f32 %v189, 0.4
  %v240 = vmul.f32 %v191, 0.4
  %v241 = vmul.f32 %v193, 0.4
  %v242 = vmul.f32 %v195, 0.4
  %v243 = vmul.f32 %v197, 0.4
  %v244 = vmul.f32 %v199, 0.4
  %v245 = vmul.f32 %v201, 0.4
  %v246 = vmul.f32 %v203, 0.4
  %v247 = vmul.f32 %v205, 0.4
  %v248 = vmul.f32 %v207, 0.4
  %v249 = vmul.f32 %v209, 0.4
  %v250 = vmul.f32 %v211, 0.4
  %v251 = vmul.f32 %v213, 0.4
  %v252 = vrcp.pop %v139
  %v253 = vmul.f32 2.5, %v252
  %v254 = vrcp.pop %v141
  %v255 = vmul.f32 2.5, %v254
  %v256 = vrcp.pop %v143
  %v257 = vmul.f32 2.5, %v256
  %v258 = vrcp.pop %v145
  %v259 = vmul.f32 2.5, %v258
  %v260 = vrcp.pop %v147
  %v261 = vmul.f32 2.5, %v260
  %v262 = vrcp.pop %v149
  %v263 = vmul.f32 2.5, %v262
  %v264 = vrcp.pop %v151
  %v265 = vmul.f32 2.5, %v264
  %v266 = vrcp.pop %v153
  %v267 = vmul.f32 2.5, %v266
  %v268 = vrcp.pop %v155
  %v269 = vmul.f32 2.5, %v268
  %v270 = vrcp.pop %v157
  %v271 = vmul.f32 2.5, %v270
  %v272 = vrcp.pop %v159
  %v273 = vmul.f32 2.5, %v272
  %v274 = vrcp.pop %v161
  %v275 = vmul.f32 2.5, %v274
  %v276 = vrcp.pop %v163
  %v277 = vmul.f32 2.5, %v276
  %v278 = vrcp.pop %v165
  %v279 = vmul.f32 2.5, %v278
  %v280 = vrcp.pop %v167
  %v281 = vmul.f32 2.5, %v280
  %v282 = vrcp.pop %v169
  %v283 = vmul.f32 2.5, %v282
  %v284 = vrcp.pop %v171
  %v285 = vmul.f32 2.5, %v284
  %v286 = vrcp.pop %v173
  %v287 = vmul.f32 2.5, %v286
  %v288 = vrcp.pop %v175
  %v289 = vmul.f32 2.5, %v288
  %v290 = vrcp.pop %v177
  %v291 = vmul.f32 2.5, %v290
  %v292 = vrcp.pop %v179
  %v293 = vmul.f32 2.5, %v292
  %v294 = vrcp.pop %v181
  %v295 = vmul.f32 2.5, %v294
  %v296 = vrcp.pop %v183
  %v297 = vmul.f32 2.5, %v296
  %v298 = vrcp.pop %v185
  %v299 = vmul.f32 2.5, %v298
  %v300 = vrcp.pop %v187
  %v301 = vmul.f32 2.5, %v300
  %v302 = vrcp.pop %v189
  %v303 = vmul.f32 2.5, %v302
  %v304 = vrcp.pop %v191
  %v305 = vmul.f32 2.5, %v304
  %v306 = vrcp.pop %v193
  %v307 = vmul.f32 2.5, %v306
  %v308 = vrcp.pop %v195
  %v309 = vmul.f32 2.5, %v308
  %v310 = vrcp.pop %v197
  %v311 = vmul.f32 2.5, %v310
  %v312 = vrcp.pop %v199
  %v313 = vmul.f32 2.5, %v312
  %v314 = vrcp.pop %v201
  %v315 = vmul.f32 2.5, %v314
  %v316 = vrcp.pop %v203
  %v317 = vmul.f32 2.5, %v316
  %v318 = vrcp.pop %v205
  %v319 = vmul.f32 2.5, %v318
  %v320 = vrcp.pop %v207
  %v321 = vmul.f32 2.5, %v320
  %v322 = vrcp.pop %v209
  %v323 = vmul.f32 2.5, %v322
  %v324 = vrcp.pop %v211
  %v325 = vmul.f32 2.5, %v324
  %v326 = vrcp.pop %v213
  %v327 = vmul.f32 2.5, %v326
  %v328 = vand.u32 2147483647, %v253
  %v329 = vand.u32 2147483647, %v255
  %v330 = vand.u32 2147483647, %v257
  %v331 = vand.u32 2147483647, %v259
  %v332 = vand.u32 2147483647, %v261
  %v333 = vand.u32 2147483647, %v263
  %v334 = vand.u32 2147483647, %v265
  %v335 = vand.u32 2147483647, %v267
  %v336 = vand.u32 2147483647, %v269
  %v337 = vand.u32 2147483647, %v271
  %v338 = vand.u32 2147483647, %v273
  %v339 = vand.u32 2147483647, %v275
  %v340 = vand.u32 2147483647, %v277
  %v341 = vand.u32 2147483647, %v279
  %v342 = vand.u32 2147483647, %v281
  %v343 = vand.u32 2147483647, %v283
  %v344 = vand.u32 2147483647, %v285
  %v345 = vand.u32 2147483647, %v287
  %v346 = vand.u32 2147483647, %v289
  %v347 = vand.u32 2147483647, %v291
  %v348 = vand.u32 2147483647, %v293
  %v349 = vand.u32 2147483647, %v295
  %v350 = vand.u32 2147483647, %v297
  %v351 = vand.u32 2147483647, %v299
  %v352 = vand.u32 2147483647, %v301
  %v353 = vand.u32 2147483647, %v303
  %v354 = vand.u32 2147483647, %v305
  %v355 = vand.u32 2147483647, %v307
  %v356 = vand.u32 2147483647, %v309
  %v357 = vand.u32 2147483647, %v311
  %v358 = vand.u32 2147483647, %v313
  %v359 = vand.u32 2147483647, %v315
  %v360 = vand.u32 2147483647, %v317
  %v361 = vand.u32 2147483647, %v319
  %v362 = vand.u32 2147483647, %v321
  %v363 = vand.u32 2147483647, %v323
  %v364 = vand.u32 2147483647, %v325
  %v365 = vand.u32 2147483647, %v327
  %vm366 = vcmp.eq.f32.partialorder %v328, inf
  %vm367 = vcmp.eq.f32.partialorder %v329, inf
  %vm368 = vcmp.eq.f32.partialorder %v330, inf
  %vm369 = vcmp.eq.f32.partialorder %v331, inf
  %vm370 = vcmp.eq.f32.partialorder %v332, inf
  %vm371 = vcmp.eq.f32.partialorder %v333, inf
  %vm372 = vcmp.eq.f32.partialorder %v334, inf
  %vm373 = vcmp.eq.f32.partialorder %v335, inf
  %vm374 = vcmp.eq.f32.partialorder %v336, inf
  %vm375 = vcmp.eq.f32.partialorder %v337, inf
  %vm376 = vcmp.eq.f32.partialorder %v338, inf
  %vm377 = vcmp.eq.f32.partialorder %v339, inf
  %vm378 = vcmp.eq.f32.partialorder %v340, inf
  %vm379 = vcmp.eq.f32.partialorder %v341, inf
  %vm380 = vcmp.eq.f32.partialorder %v342, inf
  %vm381 = vcmp.eq.f32.partialorder %v343, inf
  %vm382 = vcmp.eq.f32.partialorder %v344, inf
  %vm383 = vcmp.eq.f32.partialorder %v345, inf
  %vm384 = vcmp.eq.f32.partialorder %v346, inf
  %vm385 = vcmp.eq.f32.partialorder %v347, inf
  %vm386 = vcmp.eq.f32.partialorder %v348, inf
  %vm387 = vcmp.eq.f32.partialorder %v349, inf
  %vm388 = vcmp.eq.f32.partialorder %v350, inf
  %vm389 = vcmp.eq.f32.partialorder %v351, inf
  %vm390 = vcmp.eq.f32.partialorder %v352, inf
  %vm391 = vcmp.eq.f32.partialorder %v353, inf
  %vm392 = vcmp.eq.f32.partialorder %v354, inf
  %vm393 = vcmp.eq.f32.partialorder %v355, inf
  %vm394 = vcmp.eq.f32.partialorder %v356, inf
  %vm395 = vcmp.eq.f32.partialorder %v357, inf
  %vm396 = vcmp.eq.f32.partialorder %v358, inf
  %vm397 = vcmp.eq.f32.partialorder %v359, inf
  %vm398 = vcmp.eq.f32.partialorder %v360, inf
  %vm399 = vcmp.eq.f32.partialorder %v361, inf
  %vm400 = vcmp.eq.f32.partialorder %v362, inf
  %vm401 = vcmp.eq.f32.partialorder %v363, inf
  %vm402 = vcmp.eq.f32.partialorder %v364, inf
  %vm403 = vcmp.eq.f32.partialorder %v365, inf
  %v404 = vsel %vm366, 0.0, %v253
  %v405 = vsel %vm367, 0.0, %v255
  %v406 = vsel %vm368, 0.0, %v257
  %v407 = vsel %vm369, 0.0, %v259
  %v408 = vsel %vm370, 0.0, %v261
  %v409 = vsel %vm371, 0.0, %v263
  %v410 = vsel %vm372, 0.0, %v265
  %v411 = vsel %vm373, 0.0, %v267
  %v412 = vsel %vm374, 0.0, %v269
  %v413 = vsel %vm375, 0.0, %v271
  %v414 = vsel %vm376, 0.0, %v273
  %v415 = vsel %vm377, 0.0, %v275
  %v416 = vsel %vm378, 0.0, %v277
  %v417 = vsel %vm379, 0.0, %v279
  %v418 = vsel %vm380, 0.0, %v281
  %v419 = vsel %vm381, 0.0, %v283
  %v420 = vsel %vm382, 0.0, %v285
  %v421 = vsel %vm383, 0.0, %v287
  %v422 = vsel %vm384, 0.0, %v289
  %v423 = vsel %vm385, 0.0, %v291
  %v424 = vsel %vm386, 0.0, %v293
  %v425 = vsel %vm387, 0.0, %v295
  %v426 = vsel %vm388, 0.0, %v297
  %v427 = vsel %vm389, 0.0, %v299
  %v428 = vsel %vm390, 0.0, %v301
  %v429 = vsel %vm391, 0.0, %v303
  %v430 = vsel %vm392, 0.0, %v305
  %v431 = vsel %vm393, 0.0, %v307
  %v432 = vsel %vm394, 0.0, %v309
  %v433 = vsel %vm395, 0.0, %v311
  %v434 = vsel %vm396, 0.0, %v313
  %v435 = vsel %vm397, 0.0, %v315
  %v436 = vsel %vm398, 0.0, %v317
  %v437 = vsel %vm399, 0.0, %v319
  %v438 = vsel %vm400, 0.0, %v321
  %v439 = vsel %vm401, 0.0, %v323
  %v440 = vsel %vm402, 0.0, %v325
  %v441 = vsel %vm403, 0.0, %v327
  %v442 = vpack.c.bf16 %v25, %v24
  %v443 = vpack.c.bf16 %v27, %v26
  %v444 = vpack.c.bf16 %v29, %v28
  %v445 = vpack.c.bf16 %v31, %v30
  %v446 = vpack.c.bf16 %v33, %v32
  %v447 = vpack.c.bf16 %v35, %v34
  %v448 = vpack.c.bf16 %v37, %v36
  %v449 = vpack.c.bf16 %v39, %v38
  %v450 = vpack.c.bf16 %v41, %v40
  %v451 = vpack.c.bf16 %v43, %v42
  %v452 = vpack.c.bf16 %v45, %v44
  %v453 = vpack.c.bf16 %v47, %v46
  %v454 = vpack.c.bf16 %v49, %v48
  %v455 = vpack.c.bf16 %v51, %v50
  %v456 = vpack.c.bf16 %v53, %v52
  %v457 = vpack.c.bf16 %v55, %v54
  %v458 = vpack.c.bf16 %v57, %v56
  %v459 = vpack.c.bf16 %v59, %v58
  %v460 = vpack.c.bf16 %v61, %v60
  %vm461 = vcmask 523264
  %462 = vst.msk [vmem:[#allocation2] sm:$0xff] %vm461, %v442
  %463 = vst.msk [vmem:[#allocation2 + $0x10] sm:$0xff] %vm461, %v443
  %464 = vst.msk [vmem:[#allocation2 + $0x20] sm:$0xff] %vm461, %v444
  %465 = vst.msk [vmem:[#allocation2 + $0x30] sm:$0xff] %vm461, %v445
  %466 = vst.msk [vmem:[#allocation2 + $0x40] sm:$0xff] %vm461, %v446
  %467 = vst.msk [vmem:[#allocation2 + $0x50] sm:$0xff] %vm461, %v447
  %468 = vst.msk [vmem:[#allocation2 + $0x60] sm:$0xff] %vm461, %v448
  %469 = vst.msk [vmem:[#allocation2 + $0x70] sm:$0xff] %vm461, %v449
  %470 = vst.msk [vmem:[#allocation2 + $0x80] sm:$0xff] %vm461, %v450
  %471 = vst.msk [vmem:[#allocation2 + $0x90] sm:$0xff] %vm461, %v451
  %472 = vst.msk [vmem:[#allocation2 + $0xa0] sm:$0xff] %vm461, %v452
  %473 = vst.msk [vmem:[#allocation2 + $0xb0] sm:$0xff] %vm461, %v453
  %474 = vst.msk [vmem:[#allocation2 + $0xc0] sm:$0xff] %vm461, %v454
  %475 = vst.msk [vmem:[#allocation2 + $0xd0] sm:$0xff] %vm461, %v455
  %476 = vst.msk [vmem:[#allocation2 + $0xe0] sm:$0xff] %vm461, %v456
  %477 = vst.msk [vmem:[#allocation2 + $0xf0] sm:$0xff] %vm461, %v457
  %478 = vst.msk [vmem:[#allocation2 + $0x100] sm:$0xff] %vm461, %v458
  %479 = vst.msk [vmem:[#allocation2 + $0x110] sm:$0xff] %vm461, %v459
  %480 = vst.msk [vmem:[#allocation2 + $0x120] sm:$0xff] %vm461, %v460
  %482 = vset.pattern.permute.xlu0 0
  %483 = vperm.xlu0 %482, %v214
  %v484 = vpop.permute.xlu0 %483
  %487 = vset.pattern.permute.xlu0 0
  %488 = vperm.xlu0 %487, %v215
  %v489 = vpop.permute.xlu0 %488
  %492 = vset.pattern.permute.xlu0 0
  %493 = vperm.xlu0 %492, %v216
  %v494 = vpop.permute.xlu0 %493
  %497 = vset.pattern.permute.xlu0 0
  %498 = vperm.xlu0 %497, %v217
  %v499 = vpop.permute.xlu0 %498
  %502 = vset.pattern.permute.xlu0 0
  %503 = vperm.xlu0 %502, %v218
  %v504 = vpop.permute.xlu0 %503
  %507 = vset.pattern.permute.xlu0 0
  %508 = vperm.xlu0 %507, %v219
  %v509 = vpop.permute.xlu0 %508
  %512 = vset.pattern.permute.xlu0 0
  %513 = vperm.xlu0 %512, %v220
  %v514 = vpop.permute.xlu0 %513
  %517 = vset.pattern.permute.xlu0 0
  %518 = vperm.xlu0 %517, %v221
  %v519 = vpop.permute.xlu0 %518
  %522 = vset.pattern.permute.xlu0 0
  %523 = vperm.xlu0 %522, %v222
  %v524 = vpop.permute.xlu0 %523
  %527 = vset.pattern.permute.xlu0 0
  %528 = vperm.xlu0 %527, %v223
  %v529 = vpop.permute.xlu0 %528
  %532 = vset.pattern.permute.xlu0 0
  %533 = vperm.xlu0 %532, %v224
  %v534 = vpop.permute.xlu0 %533
  %537 = vset.pattern.permute.xlu0 0
  %538 = vperm.xlu0 %537, %v225
  %v539 = vpop.permute.xlu0 %538
  %542 = vset.pattern.permute.xlu0 0
  %543 = vperm.xlu0 %542, %v226
  %v544 = vpop.permute.xlu0 %543
  %547 = vset.pattern.permute.xlu0 0
  %548 = vperm.xlu0 %547, %v227
  %v549 = vpop.permute.xlu0 %548
  %552 = vset.pattern.permute.xlu0 0
  %553 = vperm.xlu0 %552, %v228
  %v554 = vpop.permute.xlu0 %553
  %557 = vset.pattern.permute.xlu0 0
  %558 = vperm.xlu0 %557, %v229
  %v559 = vpop.permute.xlu0 %558
  %562 = vset.pattern.permute.xlu0 0
  %563 = vperm.xlu0 %562, %v230
  %v564 = vpop.permute.xlu0 %563
  %567 = vset.pattern.permute.xlu0 0
  %568 = vperm.xlu0 %567, %v231
  %v569 = vpop.permute.xlu0 %568
  %572 = vset.pattern.permute.xlu0 0
  %573 = vperm.xlu0 %572, %v232
  %v574 = vpop.permute.xlu0 %573
  %577 = vset.pattern.permute.xlu0 0
  %578 = vperm.xlu0 %577, %v233
  %v579 = vpop.permute.xlu0 %578
  %582 = vset.pattern.permute.xlu0 0
  %583 = vperm.xlu0 %582, %v234
  %v584 = vpop.permute.xlu0 %583
  %587 = vset.pattern.permute.xlu0 0
  %588 = vperm.xlu0 %587, %v235
  %v589 = vpop.permute.xlu0 %588
  %592 = vset.pattern.permute.xlu0 0
  %593 = vperm.xlu0 %592, %v236
  %v594 = vpop.permute.xlu0 %593
  %597 = vset.pattern.permute.xlu0 0
  %598 = vperm.xlu0 %597, %v237
  %v599 = vpop.permute.xlu0 %598
  %602 = vset.pattern.permute.xlu0 0
  %603 = vperm.xlu0 %602, %v238
  %v604 = vpop.permute.xlu0 %603
  %607 = vset.pattern.permute.xlu0 0
  %608 = vperm.xlu0 %607, %v239
  %v609 = vpop.permute.xlu0 %608
  %612 = vset.pattern.permute.xlu0 0
  %613 = vperm.xlu0 %612, %v240
  %v614 = vpop.permute.xlu0 %613
  %617 = vset.pattern.permute.xlu0 0
  %618 = vperm.xlu0 %617, %v241
  %v619 = vpop.permute.xlu0 %618
  %622 = vset.pattern.permute.xlu0 0
  %623 = vperm.xlu0 %622, %v242
  %v624 = vpop.permute.xlu0 %623
  %627 = vset.pattern.permute.xlu0 0
  %628 = vperm.xlu0 %627, %v243
  %v629 = vpop.permute.xlu0 %628
  %632 = vset.pattern.permute.xlu0 0
  %633 = vperm.xlu0 %632, %v244
  %v634 = vpop.permute.xlu0 %633
  %637 = vset.pattern.permute.xlu0 0
  %638 = vperm.xlu0 %637, %v245
  %v639 = vpop.permute.xlu0 %638
  %642 = vset.pattern.permute.xlu0 0
  %643 = vperm.xlu0 %642, %v246
  %v644 = vpop.permute.xlu0 %643
  %647 = vset.pattern.permute.xlu0 0
  %648 = vperm.xlu0 %647, %v247
  %v649 = vpop.permute.xlu0 %648
  %652 = vset.pattern.permute.xlu0 0
  %653 = vperm.xlu0 %652, %v248
  %v654 = vpop.permute.xlu0 %653
  %657 = vset.pattern.permute.xlu0 0
  %658 = vperm.xlu0 %657, %v249
  %v659 = vpop.permute.xlu0 %658
  %662 = vset.pattern.permute.xlu0 0
  %663 = vperm.xlu0 %662, %v250
  %v664 = vpop.permute.xlu0 %663
  %667 = vset.pattern.permute.xlu0 0
  %668 = vperm.xlu0 %667, %v251
  %v669 = vpop.permute.xlu0 %668
  %v671 = vmul.f32 %v24, %v484
  %v672 = vmul.f32 %v25, %v489
  %v673 = vmul.f32 %v26, %v494
  %v674 = vmul.f32 %v27, %v499
  %v675 = vmul.f32 %v28, %v504
  %v676 = vmul.f32 %v29, %v509
  %v677 = vmul.f32 %v30, %v514
  %v678 = vmul.f32 %v31, %v519
  %v679 = vmul.f32 %v32, %v524
  %v680 = vmul.f32 %v33, %v529
  %v681 = vmul.f32 %v34, %v534
  %v682 = vmul.f32 %v35, %v539
  %v683 = vmul.f32 %v36, %v544
  %v684 = vmul.f32 %v37, %v549
  %v685 = vmul.f32 %v38, %v554
  %v686 = vmul.f32 %v39, %v559
  %v687 = vmul.f32 %v40, %v564
  %v688 = vmul.f32 %v41, %v569
  %v689 = vmul.f32 %v42, %v574
  %v690 = vmul.f32 %v43, %v579
  %v691 = vmul.f32 %v44, %v584
  %v692 = vmul.f32 %v45, %v589
  %v693 = vmul.f32 %v46, %v594
  %v694 = vmul.f32 %v47, %v599
  %v695 = vmul.f32 %v48, %v604
  %v696 = vmul.f32 %v49, %v609
  %v697 = vmul.f32 %v50, %v614
  %v698 = vmul.f32 %v51, %v619
  %v699 = vmul.f32 %v52, %v624
  %v700 = vmul.f32 %v53, %v629
  %v701 = vmul.f32 %v54, %v634
  %v702 = vmul.f32 %v55, %v639
  %v703 = vmul.f32 %v56, %v644
  %v704 = vmul.f32 %v57, %v649
  %v705 = vmul.f32 %v58, %v654
  %v706 = vmul.f32 %v59, %v659
  %v707 = vmul.f32 %v60, %v664
  %v708 = vmul.f32 %v61, %v669
  %v709 = vpack.c.bf16 %v672, %v671
  %v710 = vpack.c.bf16 %v674, %v673
  %v711 = vpack.c.bf16 %v676, %v675
  %v712 = vpack.c.bf16 %v678, %v677
  %v713 = vpack.c.bf16 %v680, %v679
  %v714 = vpack.c.bf16 %v682, %v681
  %v715 = vpack.c.bf16 %v684, %v683
  %v716 = vpack.c.bf16 %v686, %v685
  %v717 = vpack.c.bf16 %v688, %v687
  %v718 = vpack.c.bf16 %v690, %v689
  %v719 = vpack.c.bf16 %v692, %v691
  %v720 = vpack.c.bf16 %v694, %v693
  %v721 = vpack.c.bf16 %v696, %v695
  %v722 = vpack.c.bf16 %v698, %v697
  %v723 = vpack.c.bf16 %v700, %v699
  %v724 = vpack.c.bf16 %v702, %v701
  %v725 = vpack.c.bf16 %v704, %v703
  %v726 = vpack.c.bf16 %v706, %v705
  %v727 = vpack.c.bf16 %v708, %v707
  %747 = vrot.lane.b32.xlu0 %v709, 64
  %v748 = vpop.permute.xlu0 %747
  %749 = vrot.lane.b32.xlu0 %v710, 64
  %v750 = vpop.permute.xlu0 %749
  %751 = vrot.lane.b32.xlu0 %v711, 64
  %v752 = vpop.permute.xlu0 %751
  %753 = vrot.lane.b32.xlu0 %v712, 64
  %v754 = vpop.permute.xlu0 %753
  %755 = vrot.lane.b32.xlu0 %v713, 64
  %v756 = vpop.permute.xlu0 %755
  %757 = vrot.lane.b32.xlu0 %v714, 64
  %v758 = vpop.permute.xlu0 %757
  %759 = vrot.lane.b32.xlu0 %v715, 64
  %v760 = vpop.permute.xlu0 %759
  %761 = vrot.lane.b32.xlu0 %v716, 64
  %v762 = vpop.permute.xlu0 %761
  %763 = vrot.lane.b32.xlu0 %v717, 64
  %v764 = vpop.permute.xlu0 %763
  %765 = vrot.lane.b32.xlu0 %v718, 64
  %v766 = vpop.permute.xlu0 %765
  %767 = vrot.lane.b32.xlu0 %v719, 64
  %v768 = vpop.permute.xlu0 %767
  %769 = vrot.lane.b32.xlu0 %v720, 64
  %v770 = vpop.permute.xlu0 %769
  %771 = vrot.lane.b32.xlu0 %v721, 64
  %v772 = vpop.permute.xlu0 %771
  %773 = vrot.lane.b32.xlu0 %v722, 64
  %v774 = vpop.permute.xlu0 %773
  %775 = vrot.lane.b32.xlu0 %v723, 64
  %v776 = vpop.permute.xlu0 %775
  %777 = vrot.lane.b32.xlu0 %v724, 64
  %v778 = vpop.permute.xlu0 %777
  %779 = vrot.lane.b32.xlu0 %v725, 64
  %v780 = vpop.permute.xlu0 %779
  %781 = vrot.lane.b32.xlu0 %v726, 64
  %v782 = vpop.permute.xlu0 %781
  %783 = vrot.lane.b32.xlu0 %v727, 64
  %v784 = vpop.permute.xlu0 %783
  %vm804 = vcmask 1048064
  %805 = vst.msk [vmem:[#allocation2] sm:$0xff] %vm804, %v748
  %806 = vst.msk [vmem:[#allocation2 + $0x10] sm:$0xff] %vm804, %v750
  %807 = vst.msk [vmem:[#allocation2 + $0x20] sm:$0xff] %vm804, %v752
  %808 = vst.msk [vmem:[#allocation2 + $0x30] sm:$0xff] %vm804, %v754
  %809 = vst.msk [vmem:[#allocation2 + $0x40] sm:$0xff] %vm804, %v756
  %810 = vst.msk [vmem:[#allocation2 + $0x50] sm:$0xff] %vm804, %v758
  %811 = vst.msk [vmem:[#allocation2 + $0x60] sm:$0xff] %vm804, %v760
  %812 = vst.msk [vmem:[#allocation2 + $0x70] sm:$0xff] %vm804, %v762
  %813 = vst.msk [vmem:[#allocation2 + $0x80] sm:$0xff] %vm804, %v764
  %814 = vst.msk [vmem:[#allocation2 + $0x90] sm:$0xff] %vm804, %v766
  %815 = vst.msk [vmem:[#allocation2 + $0xa0] sm:$0xff] %vm804, %v768
  %816 = vst.msk [vmem:[#allocation2 + $0xb0] sm:$0xff] %vm804, %v770
  %817 = vst.msk [vmem:[#allocation2 + $0xc0] sm:$0xff] %vm804, %v772
  %818 = vst.msk [vmem:[#allocation2 + $0xd0] sm:$0xff] %vm804, %v774
  %819 = vst.msk [vmem:[#allocation2 + $0xe0] sm:$0xff] %vm804, %v776
  %820 = vst.msk [vmem:[#allocation2 + $0xf0] sm:$0xff] %vm804, %v778
  %821 = vst.msk [vmem:[#allocation2 + $0x100] sm:$0xff] %vm804, %v780
  %822 = vst.msk [vmem:[#allocation2 + $0x110] sm:$0xff] %vm804, %v782
  %823 = vst.msk [vmem:[#allocation2 + $0x120] sm:$0xff] %vm804, %v784
  %825 = vset.pattern.permute.xlu0 0
  %826 = vperm.xlu0 %825, %v404
  %v827 = vpop.permute.xlu0 %826
  %830 = vset.pattern.permute.xlu0 0
  %831 = vperm.xlu0 %830, %v405
  %v832 = vpop.permute.xlu0 %831
  %835 = vset.pattern.permute.xlu0 0
  %836 = vperm.xlu0 %835, %v406
  %v837 = vpop.permute.xlu0 %836
  %840 = vset.pattern.permute.xlu0 0
  %841 = vperm.xlu0 %840, %v407
  %v842 = vpop.permute.xlu0 %841
  %845 = vset.pattern.permute.xlu0 0
  %846 = vperm.xlu0 %845, %v408
  %v847 = vpop.permute.xlu0 %846
  %850 = vset.pattern.permute.xlu0 0
  %851 = vperm.xlu0 %850, %v409
  %v852 = vpop.permute.xlu0 %851
  %855 = vset.pattern.permute.xlu0 0
  %856 = vperm.xlu0 %855, %v410
  %v857 = vpop.permute.xlu0 %856
  %860 = vset.pattern.permute.xlu0 0
  %861 = vperm.xlu0 %860, %v411
  %v862 = vpop.permute.xlu0 %861
  %865 = vset.pattern.permute.xlu0 0
  %866 = vperm.xlu0 %865, %v412
  %v867 = vpop.permute.xlu0 %866
  %870 = vset.pattern.permute.xlu0 0
  %871 = vperm.xlu0 %870, %v413
  %v872 = vpop.permute.xlu0 %871
  %875 = vset.pattern.permute.xlu0 0
  %876 = vperm.xlu0 %875, %v414
  %v877 = vpop.permute.xlu0 %876
  %880 = vset.pattern.permute.xlu0 0
  %881 = vperm.xlu0 %880, %v415
  %v882 = vpop.permute.xlu0 %881
  %885 = vset.pattern.permute.xlu0 0
  %886 = vperm.xlu0 %885, %v416
  %v887 = vpop.permute.xlu0 %886
  %890 = vset.pattern.permute.xlu0 0
  %891 = vperm.xlu0 %890, %v417
  %v892 = vpop.permute.xlu0 %891
  %895 = vset.pattern.permute.xlu0 0
  %896 = vperm.xlu0 %895, %v418
  %v897 = vpop.permute.xlu0 %896
  %900 = vset.pattern.permute.xlu0 0
  %901 = vperm.xlu0 %900, %v419
  %v902 = vpop.permute.xlu0 %901
  %905 = vset.pattern.permute.xlu0 0
  %906 = vperm.xlu0 %905, %v420
  %v907 = vpop.permute.xlu0 %906
  %910 = vset.pattern.permute.xlu0 0
  %911 = vperm.xlu0 %910, %v421
  %v912 = vpop.permute.xlu0 %911
  %915 = vset.pattern.permute.xlu0 0
  %916 = vperm.xlu0 %915, %v422
  %v917 = vpop.permute.xlu0 %916
  %920 = vset.pattern.permute.xlu0 0
  %921 = vperm.xlu0 %920, %v423
  %v922 = vpop.permute.xlu0 %921
  %925 = vset.pattern.permute.xlu0 0
  %926 = vperm.xlu0 %925, %v424
  %v927 = vpop.permute.xlu0 %926
  %930 = vset.pattern.permute.xlu0 0
  %931 = vperm.xlu0 %930, %v425
  %v932 = vpop.permute.xlu0 %931
  %935 = vset.pattern.permute.xlu0 0
  %936 = vperm.xlu0 %935, %v426
  %v937 = vpop.permute.xlu0 %936
  %940 = vset.pattern.permute.xlu0 0
  %941 = vperm.xlu0 %940, %v427
  %v942 = vpop.permute.xlu0 %941
  %945 = vset.pattern.permute.xlu0 0
  %946 = vperm.xlu0 %945, %v428
  %v947 = vpop.permute.xlu0 %946
  %950 = vset.pattern.permute.xlu0 0
  %951 = vperm.xlu0 %950, %v429
  %v952 = vpop.permute.xlu0 %951
  %955 = vset.pattern.permute.xlu0 0
  %956 = vperm.xlu0 %955, %v430
  %v957 = vpop.permute.xlu0 %956
  %960 = vset.pattern.permute.xlu0 0
  %961 = vperm.xlu0 %960, %v431
  %v962 = vpop.permute.xlu0 %961
  %965 = vset.pattern.permute.xlu0 0
  %966 = vperm.xlu0 %965, %v432
  %v967 = vpop.permute.xlu0 %966
  %970 = vset.pattern.permute.xlu0 0
  %971 = vperm.xlu0 %970, %v433
  %v972 = vpop.permute.xlu0 %971
  %975 = vset.pattern.permute.xlu0 0
  %976 = vperm.xlu0 %975, %v434
  %v977 = vpop.permute.xlu0 %976
  %980 = vset.pattern.permute.xlu0 0
  %981 = vperm.xlu0 %980, %v435
  %v982 = vpop.permute.xlu0 %981
  %985 = vset.pattern.permute.xlu0 0
  %986 = vperm.xlu0 %985, %v436
  %v987 = vpop.permute.xlu0 %986
  %990 = vset.pattern.permute.xlu0 0
  %991 = vperm.xlu0 %990, %v437
  %v992 = vpop.permute.xlu0 %991
  %995 = vset.pattern.permute.xlu0 0
  %996 = vperm.xlu0 %995, %v438
  %v997 = vpop.permute.xlu0 %996
  %1000 = vset.pattern.permute.xlu0 0
  %1001 = vperm.xlu0 %1000, %v439
  %v1002 = vpop.permute.xlu0 %1001
  %1005 = vset.pattern.permute.xlu0 0
  %1006 = vperm.xlu0 %1005, %v440
  %v1007 = vpop.permute.xlu0 %1006
  %1010 = vset.pattern.permute.xlu0 0
  %1011 = vperm.xlu0 %1010, %v441
  %v1012 = vpop.permute.xlu0 %1011
  %v1014 = vmul.f32 %v24, %v827
  %v1015 = vmul.f32 %v25, %v832
  %v1016 = vmul.f32 %v26, %v837
  %v1017 = vmul.f32 %v27, %v842
  %v1018 = vmul.f32 %v28, %v847
  %v1019 = vmul.f32 %v29, %v852
  %v1020 = vmul.f32 %v30, %v857
  %v1021 = vmul.f32 %v31, %v862
  %v1022 = vmul.f32 %v32, %v867
  %v1023 = vmul.f32 %v33, %v872
  %v1024 = vmul.f32 %v34, %v877
  %v1025 = vmul.f32 %v35, %v882
  %v1026 = vmul.f32 %v36, %v887
  %v1027 = vmul.f32 %v37, %v892
  %v1028 = vmul.f32 %v38, %v897
  %v1029 = vmul.f32 %v39, %v902
  %v1030 = vmul.f32 %v40, %v907
  %v1031 = vmul.f32 %v41, %v912
  %v1032 = vmul.f32 %v42, %v917
  %v1033 = vmul.f32 %v43, %v922
  %v1034 = vmul.f32 %v44, %v927
  %v1035 = vmul.f32 %v45, %v932
  %v1036 = vmul.f32 %v46, %v937
  %v1037 = vmul.f32 %v47, %v942
  %v1038 = vmul.f32 %v48, %v947
  %v1039 = vmul.f32 %v49, %v952
  %v1040 = vmul.f32 %v50, %v957
  %v1041 = vmul.f32 %v51, %v962
  %v1042 = vmul.f32 %v52, %v967
  %v1043 = vmul.f32 %v53, %v972
  %v1044 = vmul.f32 %v54, %v977
  %v1045 = vmul.f32 %v55, %v982
  %v1046 = vmul.f32 %v56, %v987
  %v1047 = vmul.f32 %v57, %v992
  %v1048 = vmul.f32 %v58, %v997
  %v1049 = vmul.f32 %v59, %v1002
  %v1050 = vmul.f32 %v60, %v1007
  %v1051 = vmul.f32 %v61, %v1012
  %v1052 = vpack.c.bf16 %v1015, %v1014
  %v1053 = vpack.c.bf16 %v1017, %v1016
  %v1054 = vpack.c.bf16 %v1019, %v1018
  %v1055 = vpack.c.bf16 %v1021, %v1020
  %v1056 = vpack.c.bf16 %v1023, %v1022
  %v1057 = vpack.c.bf16 %v1025, %v1024
  %v1058 = vpack.c.bf16 %v1027, %v1026
  %v1059 = vpack.c.bf16 %v1029, %v1028
  %v1060 = vpack.c.bf16 %v1031, %v1030
  %v1061 = vpack.c.bf16 %v1033, %v1032
  %v1062 = vpack.c.bf16 %v1035, %v1034
  %v1063 = vpack.c.bf16 %v1037, %v1036
  %v1064 = vpack.c.bf16 %v1039, %v1038
  %v1065 = vpack.c.bf16 %v1041, %v1040
  %v1066 = vpack.c.bf16 %v1043, %v1042
  %v1067 = vpack.c.bf16 %v1045, %v1044
  %v1068 = vpack.c.bf16 %v1047, %v1046
  %v1069 = vpack.c.bf16 %v1049, %v1048
  %v1070 = vpack.c.bf16 %v1051, %v1050
  %1071 = vst.msk [vmem:[#allocation2 + $0x8] sm:$0xff] %vm461, %v1052
  %1072 = vst.msk [vmem:[#allocation2 + $0x18] sm:$0xff] %vm461, %v1053
  %1073 = vst.msk [vmem:[#allocation2 + $0x28] sm:$0xff] %vm461, %v1054
  %1074 = vst.msk [vmem:[#allocation2 + $0x38] sm:$0xff] %vm461, %v1055
  %1075 = vst.msk [vmem:[#allocation2 + $0x48] sm:$0xff] %vm461, %v1056
  %1076 = vst.msk [vmem:[#allocation2 + $0x58] sm:$0xff] %vm461, %v1057
  %1077 = vst.msk [vmem:[#allocation2 + $0x68] sm:$0xff] %vm461, %v1058
  %1078 = vst.msk [vmem:[#allocation2 + $0x78] sm:$0xff] %vm461, %v1059
  %1079 = vst.msk [vmem:[#allocation2 + $0x88] sm:$0xff] %vm461, %v1060
  %1080 = vst.msk [vmem:[#allocation2 + $0x98] sm:$0xff] %vm461, %v1061
  %1081 = vst.msk [vmem:[#allocation2 + $0xa8] sm:$0xff] %vm461, %v1062
  %1082 = vst.msk [vmem:[#allocation2 + $0xb8] sm:$0xff] %vm461, %v1063
  %1083 = vst.msk [vmem:[#allocation2 + $0xc8] sm:$0xff] %vm461, %v1064
  %1084 = vst.msk [vmem:[#allocation2 + $0xd8] sm:$0xff] %vm461, %v1065
  %1085 = vst.msk [vmem:[#allocation2 + $0xe8] sm:$0xff] %vm461, %v1066
  %1086 = vst.msk [vmem:[#allocation2 + $0xf8] sm:$0xff] %vm461, %v1067
  %1087 = vst.msk [vmem:[#allocation2 + $0x108] sm:$0xff] %vm461, %v1068
  %1088 = vst.msk [vmem:[#allocation2 + $0x118] sm:$0xff] %vm461, %v1069
  %1089 = vst.msk [vmem:[#allocation2 + $0x128] sm:$0xff] %vm461, %v1070
  %v1090 = vld [vmem:[#allocation2] sm:$0xff]
  %v1091 = vld [vmem:[#allocation2 + $0x8] sm:$0xff]
  %v1092 = vld [vmem:[#allocation2 + $0x10] sm:$0xff]
  %v1093 = vld [vmem:[#allocation2 + $0x18] sm:$0xff]
  %v1094 = vld [vmem:[#allocation2 + $0x20] sm:$0xff]
  %v1095 = vld [vmem:[#allocation2 + $0x28] sm:$0xff]
  %v1096 = vld [vmem:[#allocation2 + $0x30] sm:$0xff]
  %v1097 = vld [vmem:[#allocation2 + $0x38] sm:$0xff]
  %v1098 = vld [vmem:[#allocation2 + $0x40] sm:$0xff]
  %v1099 = vld [vmem:[#allocation2 + $0x48] sm:$0xff]
  %v1100 = vld [vmem:[#allocation2 + $0x50] sm:$0xff]
  %v1101 = vld [vmem:[#allocation2 + $0x58] sm:$0xff]
  %v1102 = vld [vmem:[#allocation2 + $0x60] sm:$0xff]
  %v1103 = vld [vmem:[#allocation2 + $0x68] sm:$0xff]
  %v1104 = vld [vmem:[#allocation2 + $0x70] sm:$0xff]
  %v1105 = vld [vmem:[#allocation2 + $0x78] sm:$0xff]
  %v1106 = vld [vmem:[#allocation2 + $0x80] sm:$0xff]
  %v1107 = vld [vmem:[#allocation2 + $0x88] sm:$0xff]
  %v1108 = vld [vmem:[#allocation2 + $0x90] sm:$0xff]
  %v1109 = vld [vmem:[#allocation2 + $0x98] sm:$0xff]
  %v1110 = vld [vmem:[#allocation2 + $0xa0] sm:$0xff]
  %v1111 = vld [vmem:[#allocation2 + $0xa8] sm:$0xff]
  %v1112 = vld [vmem:[#allocation2 + $0xb0] sm:$0xff]
  %v1113 = vld [vmem:[#allocation2 + $0xb8] sm:$0xff]
  %v1114 = vld [vmem:[#allocation2 + $0xc0] sm:$0xff]
  %v1115 = vld [vmem:[#allocation2 + $0xc8] sm:$0xff]
  %v1116 = vld [vmem:[#allocation2 + $0xd0] sm:$0xff]
  %v1117 = vld [vmem:[#allocation2 + $0xd8] sm:$0xff]
  %v1118 = vld [vmem:[#allocation2 + $0xe0] sm:$0xff]
  %v1119 = vld [vmem:[#allocation2 + $0xe8] sm:$0xff]
  %v1120 = vld [vmem:[#allocation2 + $0xf0] sm:$0xff]
  %v1121 = vld [vmem:[#allocation2 + $0xf8] sm:$0xff]
  %v1122 = vld [vmem:[#allocation2 + $0x100] sm:$0xff]
  %v1123 = vld [vmem:[#allocation2 + $0x108] sm:$0xff]
  %v1124 = vld [vmem:[#allocation2 + $0x110] sm:$0xff]
  %v1125 = vld [vmem:[#allocation2 + $0x118] sm:$0xff]
  %v1126 = vld [vmem:[#allocation2 + $0x120] sm:$0xff]
  %v1127 = vld [vmem:[#allocation2 + $0x128] sm:$0xff]
  %v1128 = vld [vmem:[%s2] sm:$0xff]
  %v1129 = vld [vmem:[%s2 + $0x8] sm:$0xff]
  %v1130 = vld [vmem:[%s2 + $0x10] sm:$0xff]
  %v1131 = vld [vmem:[%s2 + $0x18] sm:$0xff]
  %v1132 = vld [vmem:[%s2 + $0x20] sm:$0xff]
  %v1133 = vld [vmem:[%s2 + $0x28] sm:$0xff]
  %v1134 = vld [vmem:[%s2 + $0x30] sm:$0xff]
  %v1135 = vld [vmem:[%s2 + $0x38] sm:$0xff]
  %v1136 = vld [vmem:[%s2 + $0x40] sm:$0xff]
  %v1137 = vld [vmem:[%s2 + $0x48] sm:$0xff]
  %v1138 = vld [vmem:[%s2 + $0x50] sm:$0xff]
  %v1139 = vld [vmem:[%s2 + $0x58] sm:$0xff]
  %v1140 = vld [vmem:[%s2 + $0x60] sm:$0xff]
  %v1141 = vld [vmem:[%s2 + $0x68] sm:$0xff]
  %v1142 = vld [vmem:[%s2 + $0x70] sm:$0xff]
  %v1143 = vld [vmem:[%s2 + $0x78] sm:$0xff]
  %v1144 = vld [vmem:[%s2 + $0x80] sm:$0xff]
  %v1145 = vld [vmem:[%s2 + $0x88] sm:$0xff]
  %v1146 = vld [vmem:[%s2 + $0x90] sm:$0xff]
  %v1147 = vld [vmem:[%s2 + $0x98] sm:$0xff]
  %v1148 = vld [vmem:[%s2 + $0xa0] sm:$0xff]
  %v1149 = vld [vmem:[%s2 + $0xa8] sm:$0xff]
  %v1150 = vld [vmem:[%s2 + $0xb0] sm:$0xff]
  %v1151 = vld [vmem:[%s2 + $0xb8] sm:$0xff]
  %v1152 = vld [vmem:[%s2 + $0xc0] sm:$0xff]
  %v1153 = vld [vmem:[%s2 + $0xc8] sm:$0xff]
  %v1154 = vld [vmem:[%s2 + $0xd0] sm:$0xff]
  %v1155 = vld [vmem:[%s2 + $0xd8] sm:$0xff]
  %v1156 = vld [vmem:[%s2 + $0xe0] sm:$0xff]
  %v1157 = vld [vmem:[%s2 + $0xe8] sm:$0xff]
  %v1158 = vld [vmem:[%s2 + $0xf0] sm:$0xff]
  %v1159 = vld [vmem:[%s2 + $0xf8] sm:$0xff]
  %v1160 = vld [vmem:[%s2 + $0x100] sm:$0xff]
  %v1161 = vld [vmem:[%s2 + $0x108] sm:$0xff]
  %v1162 = vld [vmem:[%s2 + $0x110] sm:$0xff]
  %v1163 = vld [vmem:[%s2 + $0x118] sm:$0xff]
  %v1164 = vld [vmem:[%s2 + $0x120] sm:$0xff]
  %v1165 = vld [vmem:[%s2 + $0x128] sm:$0xff]
  %v1166 = vld [vmem:[%s2 + $0x130] sm:$0xff]
  %v1167 = vld [vmem:[%s2 + $0x138] sm:$0xff]
  %v1168 = vld [vmem:[%s2 + $0x140] sm:$0xff]
  %v1169 = vld [vmem:[%s2 + $0x148] sm:$0xff]
  %v1170 = vld [vmem:[%s2 + $0x150] sm:$0xff]
  %v1171 = vld [vmem:[%s2 + $0x158] sm:$0xff]
  %v1172 = vld [vmem:[%s2 + $0x160] sm:$0xff]
  %v1173 = vld [vmem:[%s2 + $0x168] sm:$0xff]
  %v1174 = vld [vmem:[%s2 + $0x170] sm:$0xff]
  %v1175 = vld [vmem:[%s2 + $0x178] sm:$0xff]
  %v1176 = vld [vmem:[%s2 + $0x180] sm:$0xff]
  %v1177 = vld [vmem:[%s2 + $0x188] sm:$0xff]
  %v1178 = vld [vmem:[%s2 + $0x190] sm:$0xff]
  %v1179 = vld [vmem:[%s2 + $0x198] sm:$0xff]
  %v1180 = vld [vmem:[%s2 + $0x1a0] sm:$0xff]
  %v1181 = vld [vmem:[%s2 + $0x1a8] sm:$0xff]
  %v1182 = vld [vmem:[%s2 + $0x1b0] sm:$0xff]
  %v1183 = vld [vmem:[%s2 + $0x1b8] sm:$0xff]
  %v1184 = vld [vmem:[%s2 + $0x1c0] sm:$0xff]
  %v1185 = vld [vmem:[%s2 + $0x1c8] sm:$0xff]
  %v1186 = vld [vmem:[%s2 + $0x1d0] sm:$0xff]
  %v1187 = vld [vmem:[%s2 + $0x1d8] sm:$0xff]
  %v1188 = vld [vmem:[%s2 + $0x1e0] sm:$0xff]
  %v1189 = vld [vmem:[%s2 + $0x1e8] sm:$0xff]
  %v1190 = vld [vmem:[%s2 + $0x1f0] sm:$0xff]
  %v1191 = vld [vmem:[%s2 + $0x1f8] sm:$0xff]
  %v1192 = vld [vmem:[%s2 + $0x200] sm:$0xff]
  %v1193 = vld [vmem:[%s2 + $0x208] sm:$0xff]
  %v1194 = vld [vmem:[%s2 + $0x210] sm:$0xff]
  %v1195 = vld [vmem:[%s2 + $0x218] sm:$0xff]
  %v1196 = vld [vmem:[%s2 + $0x220] sm:$0xff]
  %v1197 = vld [vmem:[%s2 + $0x228] sm:$0xff]
  %v1198 = vld [vmem:[%s2 + $0x230] sm:$0xff]
  %v1199 = vld [vmem:[%s2 + $0x238] sm:$0xff]
  %v1200 = vld [vmem:[%s3] sm:$0x3f]
  %v1202 = vlaneseq
  %v1203 = vshrl.u32 %v1202, 7
  %v1204 = vsub.s32 0, %v1203
  %v1205 = vrot.slane %v1200, %v1204
  %v1206 = vlaneseq
  %v1207 = vshrl.u32 %v1206, 7
  %v1208 = vsub.s32 1, %v1207
  %v1209 = vrot.slane %v1200, %v1208
  %v1210 = vlaneseq
  %v1211 = vshrl.u32 %v1210, 7
  %v1212 = vsub.s32 2, %v1211
  %v1213 = vrot.slane %v1200, %v1212
  %v1214 = vlaneseq
  %v1215 = vshrl.u32 %v1214, 7
  %v1216 = vsub.s32 3, %v1215
  %v1217 = vrot.slane %v1200, %v1216
  %v1218 = vlaneseq
  %v1219 = vshrl.u32 %v1218, 7
  %v1220 = vsub.s32 4, %v1219
  %v1221 = vrot.slane %v1200, %v1220
  %v1222 = vlaneseq
  %v1223 = vshrl.u32 %v1222, 7
  %v1224 = vsub.s32 5, %v1223
  %v1225 = vrot.slane %v1200, %v1224
  %v1304 = vunpack.c.l.b16 %v1128
  %v1305 = vunpack.c.h.b16 %v1128
  %v1306 = vunpack.c.l.b16 %v1129
  %v1307 = vunpack.c.h.b16 %v1129
  %v1308 = vunpack.c.l.b16 %v1130
  %v1309 = vunpack.c.h.b16 %v1130
  %v1310 = vunpack.c.l.b16 %v1131
  %v1311 = vunpack.c.h.b16 %v1131
  %v1312 = vunpack.c.l.b16 %v1132
  %v1313 = vunpack.c.h.b16 %v1132
  %v1314 = vunpack.c.l.b16 %v1133
  %v1315 = vunpack.c.h.b16 %v1133
  %v1316 = vunpack.c.l.b16 %v1134
  %v1317 = vunpack.c.h.b16 %v1134
  %v1318 = vunpack.c.l.b16 %v1135
  %v1319 = vunpack.c.h.b16 %v1135
  %v1320 = vunpack.c.l.b16 %v1136
  %v1321 = vunpack.c.h.b16 %v1136
  %v1322 = vunpack.c.l.b16 %v1137
  %v1323 = vunpack.c.h.b16 %v1137
  %v1324 = vunpack.c.l.b16 %v1138
  %v1325 = vunpack.c.h.b16 %v1138
  %v1326 = vunpack.c.l.b16 %v1139
  %v1327 = vunpack.c.h.b16 %v1139
  %v1328 = vunpack.c.l.b16 %v1140
  %v1329 = vunpack.c.h.b16 %v1140
  %v1330 = vunpack.c.l.b16 %v1141
  %v1331 = vunpack.c.h.b16 %v1141
  %v1332 = vunpack.c.l.b16 %v1142
  %v1333 = vunpack.c.h.b16 %v1142
  %v1334 = vunpack.c.l.b16 %v1143
  %v1335 = vunpack.c.h.b16 %v1143
  %v1336 = vunpack.c.l.b16 %v1144
  %v1337 = vunpack.c.h.b16 %v1144
  %v1338 = vunpack.c.l.b16 %v1145
  %v1339 = vunpack.c.h.b16 %v1145
  %v1340 = vunpack.c.l.b16 %v1146
  %v1341 = vunpack.c.h.b16 %v1146
  %v1342 = vunpack.c.l.b16 %v1147
  %v1343 = vunpack.c.h.b16 %v1147
  %v1344 = vunpack.c.l.b16 %v1148
  %v1345 = vunpack.c.h.b16 %v1148
  %v1346 = vunpack.c.l.b16 %v1149
  %v1347 = vunpack.c.h.b16 %v1149
  %v1348 = vunpack.c.l.b16 %v1150
  %v1349 = vunpack.c.h.b16 %v1150
  %v1350 = vunpack.c.l.b16 %v1151
  %v1351 = vunpack.c.h.b16 %v1151
  %v1352 = vunpack.c.l.b16 %v1152
  %v1353 = vunpack.c.h.b16 %v1152
  %v1354 = vunpack.c.l.b16 %v1153
  %v1355 = vunpack.c.h.b16 %v1153
  %v1356 = vunpack.c.l.b16 %v1154
  %v1357 = vunpack.c.h.b16 %v1154
  %v1358 = vunpack.c.l.b16 %v1155
  %v1359 = vunpack.c.h.b16 %v1155
  %v1360 = vunpack.c.l.b16 %v1156
  %v1361 = vunpack.c.h.b16 %v1156
  %v1362 = vunpack.c.l.b16 %v1157
  %v1363 = vunpack.c.h.b16 %v1157
  %v1364 = vunpack.c.l.b16 %v1158
  %v1365 = vunpack.c.h.b16 %v1158
  %v1366 = vunpack.c.l.b16 %v1159
  %v1367 = vunpack.c.h.b16 %v1159
  %v1368 = vunpack.c.l.b16 %v1160
  %v1369 = vunpack.c.h.b16 %v1160
  %v1370 = vunpack.c.l.b16 %v1161
  %v1371 = vunpack.c.h.b16 %v1161
  %v1372 = vunpack.c.l.b16 %v1162
  %v1373 = vunpack.c.h.b16 %v1162
  %v1374 = vunpack.c.l.b16 %v1163
  %v1375 = vunpack.c.h.b16 %v1163
  %v1376 = vunpack.c.l.b16 %v1164
  %v1377 = vunpack.c.h.b16 %v1164
  %v1378 = vunpack.c.l.b16 %v1165
  %v1379 = vunpack.c.h.b16 %v1165
  %v1380 = vunpack.c.l.b16 %v1166
  %v1381 = vunpack.c.h.b16 %v1166
  %v1382 = vunpack.c.l.b16 %v1167
  %v1383 = vunpack.c.h.b16 %v1167
  %v1384 = vunpack.c.l.b16 %v1168
  %v1385 = vunpack.c.h.b16 %v1168
  %v1386 = vunpack.c.l.b16 %v1169
  %v1387 = vunpack.c.h.b16 %v1169
  %v1388 = vunpack.c.l.b16 %v1170
  %v1389 = vunpack.c.h.b16 %v1170
  %v1390 = vunpack.c.l.b16 %v1171
  %v1391 = vunpack.c.h.b16 %v1171
  %v1392 = vunpack.c.l.b16 %v1172
  %v1393 = vunpack.c.h.b16 %v1172
  %v1394 = vunpack.c.l.b16 %v1173
  %v1395 = vunpack.c.h.b16 %v1173
  %v1396 = vunpack.c.l.b16 %v1174
  %v1397 = vunpack.c.h.b16 %v1174
  %v1398 = vunpack.c.l.b16 %v1175
  %v1399 = vunpack.c.h.b16 %v1175
  %v1400 = vunpack.c.l.b16 %v1176
  %v1401 = vunpack.c.h.b16 %v1176
  %v1402 = vunpack.c.l.b16 %v1177
  %v1403 = vunpack.c.h.b16 %v1177
  %v1404 = vunpack.c.l.b16 %v1178
  %v1405 = vunpack.c.h.b16 %v1178
  %v1406 = vunpack.c.l.b16 %v1179
  %v1407 = vunpack.c.h.b16 %v1179
  %v1408 = vunpack.c.l.b16 %v1180
  %v1409 = vunpack.c.h.b16 %v1180
  %v1410 = vunpack.c.l.b16 %v1181
  %v1411 = vunpack.c.h.b16 %v1181
  %v1412 = vunpack.c.l.b16 %v1182
  %v1413 = vunpack.c.h.b16 %v1182
  %v1414 = vunpack.c.l.b16 %v1183
  %v1415 = vunpack.c.h.b16 %v1183
  %v1416 = vunpack.c.l.b16 %v1184
  %v1417 = vunpack.c.h.b16 %v1184
  %v1418 = vunpack.c.l.b16 %v1185
  %v1419 = vunpack.c.h.b16 %v1185
  %v1420 = vunpack.c.l.b16 %v1186
  %v1421 = vunpack.c.h.b16 %v1186
  %v1422 = vunpack.c.l.b16 %v1187
  %v1423 = vunpack.c.h.b16 %v1187
  %v1424 = vunpack.c.l.b16 %v1188
  %v1425 = vunpack.c.h.b16 %v1188
  %v1426 = vunpack.c.l.b16 %v1189
  %v1427 = vunpack.c.h.b16 %v1189
  %v1428 = vunpack.c.l.b16 %v1190
  %v1429 = vunpack.c.h.b16 %v1190
  %v1430 = vunpack.c.l.b16 %v1191
  %v1431 = vunpack.c.h.b16 %v1191
  %v1432 = vunpack.c.l.b16 %v1192
  %v1433 = vunpack.c.h.b16 %v1192
  %v1434 = vunpack.c.l.b16 %v1193
  %v1435 = vunpack.c.h.b16 %v1193
  %v1436 = vunpack.c.l.b16 %v1194
  %v1437 = vunpack.c.h.b16 %v1194
  %v1438 = vunpack.c.l.b16 %v1195
  %v1439 = vunpack.c.h.b16 %v1195
  %v1440 = vunpack.c.l.b16 %v1196
  %v1441 = vunpack.c.h.b16 %v1196
  %v1442 = vunpack.c.l.b16 %v1197
  %v1443 = vunpack.c.h.b16 %v1197
  %v1444 = vunpack.c.l.b16 %v1198
  %v1445 = vunpack.c.h.b16 %v1198
  %v1446 = vunpack.c.l.b16 %v1199
  %v1447 = vunpack.c.h.b16 %v1199
  %v1448 = vpack.c.b16 %v1310, %v1304
  %v1449 = vpack.c.b16 %v1311, %v1305
  %v1450 = vpack.c.b16 %v1312, %v1306
  %v1451 = vpack.c.b16 %v1313, %v1307
  %v1452 = vpack.c.b16 %v1314, %v1308
  %v1453 = vpack.c.b16 %v1315, %v1309
  %v1454 = vpack.c.b16 %v1322, %v1316
  %v1455 = vpack.c.b16 %v1323, %v1317
  %v1456 = vpack.c.b16 %v1324, %v1318
  %v1457 = vpack.c.b16 %v1325, %v1319
  %v1458 = vpack.c.b16 %v1326, %v1320
  %v1459 = vpack.c.b16 %v1327, %v1321
  %v1460 = vpack.c.b16 %v1334, %v1328
  %v1461 = vpack.c.b16 %v1335, %v1329
  %v1462 = vpack.c.b16 %v1336, %v1330
  %v1463 = vpack.c.b16 %v1337, %v1331
  %v1464 = vpack.c.b16 %v1338, %v1332
  %v1465 = vpack.c.b16 %v1339, %v1333
  %v1466 = vpack.c.b16 %v1346, %v1340
  %v1467 = vpack.c.b16 %v1347, %v1341
  %v1468 = vpack.c.b16 %v1348, %v1342
  %v1469 = vpack.c.b16 %v1349, %v1343
  %v1470 = vpack.c.b16 %v1350, %v1344
  %v1471 = vpack.c.b16 %v1351, %v1345
  %v1472 = vpack.c.b16 %v1358, %v1352
  %v1473 = vpack.c.b16 %v1359, %v1353
  %v1474 = vpack.c.b16 %v1360, %v1354
  %v1475 = vpack.c.b16 %v1361, %v1355
  %v1476 = vpack.c.b16 %v1362, %v1356
  %v1477 = vpack.c.b16 %v1363, %v1357
  %v1478 = vpack.c.b16 %v1370, %v1364
  %v1479 = vpack.c.b16 %v1371, %v1365
  %v1480 = vpack.c.b16 %v1372, %v1366
  %v1481 = vpack.c.b16 %v1373, %v1367
  %v1482 = vpack.c.b16 %v1374, %v1368
  %v1483 = vpack.c.b16 %v1375, %v1369
  %v1484 = vpack.c.b16 %v1382, %v1376
  %v1485 = vpack.c.b16 %v1383, %v1377
  %v1486 = vpack.c.b16 %v1384, %v1378
  %v1487 = vpack.c.b16 %v1385, %v1379
  %v1488 = vpack.c.b16 %v1386, %v1380
  %v1489 = vpack.c.b16 %v1387, %v1381
  %v1490 = vpack.c.b16 %v1394, %v1388
  %v1491 = vpack.c.b16 %v1395, %v1389
  %v1492 = vpack.c.b16 %v1396, %v1390
  %v1493 = vpack.c.b16 %v1397, %v1391
  %v1494 = vpack.c.b16 %v1398, %v1392
  %v1495 = vpack.c.b16 %v1399, %v1393
  %v1496 = vpack.c.b16 %v1406, %v1400
  %v1497 = vpack.c.b16 %v1407, %v1401
  %v1498 = vpack.c.b16 %v1408, %v1402
  %v1499 = vpack.c.b16 %v1409, %v1403
  %v1500 = vpack.c.b16 %v1410, %v1404
  %v1501 = vpack.c.b16 %v1411, %v1405
  %v1502 = vpack.c.b16 %v1418, %v1412
  %v1503 = vpack.c.b16 %v1419, %v1413
  %v1504 = vpack.c.b16 %v1420, %v1414
  %v1505 = vpack.c.b16 %v1421, %v1415
  %v1506 = vpack.c.b16 %v1422, %v1416
  %v1507 = vpack.c.b16 %v1423, %v1417
  %v1508 = vpack.c.b16 %v1430, %v1424
  %v1509 = vpack.c.b16 %v1431, %v1425
  %v1510 = vpack.c.b16 %v1432, %v1426
  %v1511 = vpack.c.b16 %v1433, %v1427
  %v1512 = vpack.c.b16 %v1434, %v1428
  %v1513 = vpack.c.b16 %v1435, %v1429
  %v1514 = vpack.c.b16 %v1442, %v1436
  %v1515 = vpack.c.b16 %v1443, %v1437
  %v1516 = vpack.c.b16 %v1444, %v1438
  %v1517 = vpack.c.b16 %v1445, %v1439
  %v1518 = vpack.c.b16 %v1446, %v1440
  %v1519 = vpack.c.b16 %v1447, %v1441
  %v1593 = vsel %vm461, %v1091, 0
  %v1596 = vsel %vm461, %v1093, 0
  %v1599 = vsel %vm461, %v1095, 0
  %v1602 = vsel %vm461, %v1097, 0
  %v1605 = vsel %vm461, %v1099, 0
  %v1608 = vsel %vm461, %v1101, 0
  %v1611 = vsel %vm461, %v1103, 0
  %v1614 = vsel %vm461, %v1105, 0
  %v1617 = vsel %vm461, %v1107, 0
  %v1620 = vsel %vm461, %v1109, 0
  %v1623 = vsel %vm461, %v1111, 0
  %v1626 = vsel %vm461, %v1113, 0
  %v1629 = vsel %vm461, %v1115, 0
  %v1632 = vsel %vm461, %v1117, 0
  %v1635 = vsel %vm461, %v1119, 0
  %v1638 = vsel %vm461, %v1121, 0
  %v1641 = vsel %vm461, %v1123, 0
  %v1644 = vsel %vm461, %v1125, 0
  %v1647 = vsel %vm461, %v1127, 0
  %1649 = vmatprep.subr.bf16.mxu0 %v1449
  %1650 = vmatpush1.bf16.msra.mxu0 %v1448
  %1651 = vmatprep.subr.bf16.mxu0 %v1455
  %1652 = vmatpush1.bf16.msra.mxu0 %v1454
  %1653 = vmatprep.subr.bf16.mxu0 %v1461
  %1654 = vmatpush1.bf16.msra.mxu0 %v1460
  %1655 = vmatprep.subr.bf16.mxu0 %v1467
  %1656 = vmatpush1.bf16.msra.mxu0 %v1466
  %1657 = vmatprep.subr.bf16.mxu0 %v1473
  %1658 = vmatpush1.bf16.msra.mxu0 %v1472
  %1659 = vmatprep.subr.bf16.mxu0 %v1479
  %1660 = vmatpush1.bf16.msra.mxu0 %v1478
  %1661 = vmatprep.subr.bf16.mxu0 %v1485
  %1662 = vmatpush1.bf16.msra.mxu0 %v1484
  %1663 = vmatprep.subr.bf16.mxu0 %v1491
  %1664 = vmatpush1.bf16.msra.mxu0 %v1490
  %1665 = vmatprep.subr.bf16.mxu0 %v1497
  %1666 = vmatpush1.bf16.msra.mxu0 %v1496
  %1667 = vmatprep.subr.bf16.mxu0 %v1503
  %1668 = vmatpush1.bf16.msra.mxu0 %v1502
  %1669 = vmatprep.subr.bf16.mxu0 %v1509
  %1670 = vmatpush1.bf16.msra.mxu0 %v1508
  %1671 = vmatprep.subr.bf16.mxu0 %v1515
  %1672 = vmatpush1.bf16.msra.mxu0 %v1514
  %1673 = vmatprep.subr.bf16.mxu0 0
  %1674 = vmatpush1.bf16.msra.mxu0 0
  %1675 = vmatprep.subr.bf16.mxu0 0
  %1676 = vmatpush1.bf16.msra.mxu0 0
  %1677 = vmatprep.subr.bf16.mxu0 0
  %1678 = vmatpush1.bf16.msra.mxu0 0
  %1679 = vmatprep.subr.bf16.mxu0 0
  %1680 = vmatpush1.bf16.msra.mxu0 0
  %1681 = vmatprep.mubr.bf16.mxu0 %v1593
  %1682 = vmatmul.mubr.bf16.gmra.mrb[0].mxu0 %v1090
  %v1683 = vpop.f32.mrb[0].mxu0
  %v1684 = vadd.f32 %v1205, %v1683
  %v1685 = vpop.f32.mrb[0].mxu0
  %v1686 = vadd.f32 %v1209, %v1685
  %v1687 = vpop.f32.mrb[0].mxu0
  %v1688 = vadd.f32 %v1205, %v1687
  %v1689 = vpop.f32.mrb[0].mxu0
  %v1690 = vadd.f32 %v1209, %v1689
  %1691 = vmatprep.mubr.bf16.mxu0 %v1596
  %1692 = vmatmul.mubr.bf16.gmra.mrb[0].mxu0 %v1092
  %v1693 = vpop.f32.mrb[0].mxu0
  %v1694 = vadd.f32 %v1205, %v1693
  %v1695 = vpop.f32.mrb[0].mxu0
  %v1696 = vadd.f32 %v1209, %v1695
  %v1697 = vpop.f32.mrb[0].mxu0
  %v1698 = vadd.f32 %v1205, %v1697
  %v1699 = vpop.f32.mrb[0].mxu0
  %v1700 = vadd.f32 %v1209, %v1699
  %1701 = vmatprep.mubr.bf16.mxu0 %v1599
  %1702 = vmatmul.mubr.bf16.gmra.mrb[0].mxu0 %v1094
  %v1703 = vpop.f32.mrb[0].mxu0
  %v1704 = vadd.f32 %v1205, %v1703
  %v1705 = vpop.f32.mrb[0].mxu0
  %v1706 = vadd.f32 %v1209, %v1705
  %v1707 = vpop.f32.mrb[0].mxu0
  %v1708 = vadd.f32 %v1205, %v1707
  %v1709 = vpop.f32.mrb[0].mxu0
  %v1710 = vadd.f32 %v1209, %v1709
  %1711 = vmatprep.mubr.bf16.mxu0 %v1602
  %1712 = vmatmul.mubr.bf16.gmra.mrb[0].mxu0 %v1096
  %v1713 = vpop.f32.mrb[0].mxu0
  %v1714 = vadd.f32 %v1205, %v1713
  %v1715 = vpop.f32.mrb[0].mxu0
  %v1716 = vadd.f32 %v1209, %v1715
  %v1717 = vpop.f32.mrb[0].mxu0
  %v1718 = vadd.f32 %v1205, %v1717
  %v1719 = vpop.f32.mrb[0].mxu0
  %v1720 = vadd.f32 %v1209, %v1719
  %1721 = vmatprep.mubr.bf16.mxu0 %v1605
  %1722 = vmatmul.mubr.bf16.gmra.mrb[0].mxu0 %v1098
  %v1723 = vpop.f32.mrb[0].mxu0
  %v1724 = vadd.f32 %v1205, %v1723
  %v1725 = vpop.f32.mrb[0].mxu0
  %v1726 = vadd.f32 %v1209, %v1725
  %v1727 = vpop.f32.mrb[0].mxu0
  %v1728 = vadd.f32 %v1205, %v1727
  %v1729 = vpop.f32.mrb[0].mxu0
  %v1730 = vadd.f32 %v1209, %v1729
  %1731 = vmatprep.mubr.bf16.mxu0 %v1608
  %1732 = vmatmul.mubr.bf16.gmra.mrb[0].mxu0 %v1100
  %v1733 = vpop.f32.mrb[0].mxu0
  %v1734 = vadd.f32 %v1205, %v1733
  %v1735 = vpop.f32.mrb[0].mxu0
  %v1736 = vadd.f32 %v1209, %v1735
  %v1737 = vpop.f32.mrb[0].mxu0
  %v1738 = vadd.f32 %v1205, %v1737
  %v1739 = vpop.f32.mrb[0].mxu0
  %v1740 = vadd.f32 %v1209, %v1739
  %1741 = vmatprep.mubr.bf16.mxu0 %v1611
  %1742 = vmatmul.mubr.bf16.gmra.mrb[0].mxu0 %v1102
  %v1743 = vpop.f32.mrb[0].mxu0
  %v1744 = vadd.f32 %v1205, %v1743
  %v1745 = vpop.f32.mrb[0].mxu0
  %v1746 = vadd.f32 %v1209, %v1745
  %v1747 = vpop.f32.mrb[0].mxu0
  %v1748 = vadd.f32 %v1205, %v1747
  %v1749 = vpop.f32.mrb[0].mxu0
  %v1750 = vadd.f32 %v1209, %v1749
  %1751 = vmatprep.mubr.bf16.mxu0 %v1614
  %1752 = vmatmul.mubr.bf16.gmra.mrb[0].mxu0 %v1104
  %v1753 = vpop.f32.mrb[0].mxu0
  %v1754 = vadd.f32 %v1205, %v1753
  %v1755 = vpop.f32.mrb[0].mxu0
  %v1756 = vadd.f32 %v1209, %v1755
  %v1757 = vpop.f32.mrb[0].mxu0
  %v1758 = vadd.f32 %v1205, %v1757
  %v1759 = vpop.f32.mrb[0].mxu0
  %v1760 = vadd.f32 %v1209, %v1759
  %1761 = vmatprep.mubr.bf16.mxu0 %v1617
  %1762 = vmatmul.mubr.bf16.gmra.mrb[0].mxu0 %v1106
  %v1763 = vpop.f32.mrb[0].mxu0
  %v1764 = vadd.f32 %v1205, %v1763
  %v1765 = vpop.f32.mrb[0].mxu0
  %v1766 = vadd.f32 %v1209, %v1765
  %v1767 = vpop.f32.mrb[0].mxu0
  %v1768 = vadd.f32 %v1205, %v1767
  %v1769 = vpop.f32.mrb[0].mxu0
  %v1770 = vadd.f32 %v1209, %v1769
  %1771 = vmatprep.mubr.bf16.mxu0 %v1620
  %1772 = vmatmul.mubr.bf16.gmra.mrb[0].mxu0 %v1108
  %v1773 = vpop.f32.mrb[0].mxu0
  %v1774 = vadd.f32 %v1205, %v1773
  %v1775 = vpop.f32.mrb[0].mxu0
  %v1776 = vadd.f32 %v1209, %v1775
  %v1777 = vpop.f32.mrb[0].mxu0
  %v1778 = vadd.f32 %v1205, %v1777
  %v1779 = vpop.f32.mrb[0].mxu0
  %v1780 = vadd.f32 %v1209, %v1779
  %1781 = vmatprep.mubr.bf16.mxu0 %v1623
  %1782 = vmatmul.mubr.bf16.gmra.mrb[0].mxu0 %v1110
  %v1783 = vpop.f32.mrb[0].mxu0
  %v1784 = vadd.f32 %v1205, %v1783
  %v1785 = vpop.f32.mrb[0].mxu0
  %v1786 = vadd.f32 %v1209, %v1785
  %v1787 = vpop.f32.mrb[0].mxu0
  %v1788 = vadd.f32 %v1205, %v1787
  %v1789 = vpop.f32.mrb[0].mxu0
  %v1790 = vadd.f32 %v1209, %v1789
  %1791 = vmatprep.mubr.bf16.mxu0 %v1626
  %1792 = vmatmul.mubr.bf16.gmra.mrb[0].mxu0 %v1112
  %v1793 = vpop.f32.mrb[0].mxu0
  %v1794 = vadd.f32 %v1205, %v1793
  %v1795 = vpop.f32.mrb[0].mxu0
  %v1796 = vadd.f32 %v1209, %v1795
  %v1797 = vpop.f32.mrb[0].mxu0
  %v1798 = vadd.f32 %v1205, %v1797
  %v1799 = vpop.f32.mrb[0].mxu0
  %v1800 = vadd.f32 %v1209, %v1799
  %1801 = vmatprep.mubr.bf16.mxu0 %v1629
  %1802 = vmatmul.mubr.bf16.gmra.mrb[0].mxu0 %v1114
  %v1803 = vpop.f32.mrb[0].mxu0
  %v1804 = vadd.f32 %v1205, %v1803
  %v1805 = vpop.f32.mrb[0].mxu0
  %v1806 = vadd.f32 %v1209, %v1805
  %v1807 = vpop.f32.mrb[0].mxu0
  %v1808 = vadd.f32 %v1205, %v1807
  %v1809 = vpop.f32.mrb[0].mxu0
  %v1810 = vadd.f32 %v1209, %v1809
  %1811 = vmatprep.mubr.bf16.mxu0 %v1632
  %1812 = vmatmul.mubr.bf16.gmra.mrb[0].mxu0 %v1116
  %v1813 = vpop.f32.mrb[0].mxu0
  %v1814 = vadd.f32 %v1205, %v1813
  %v1815 = vpop.f32.mrb[0].mxu0
  %v1816 = vadd.f32 %v1209, %v1815
  %v1817 = vpop.f32.mrb[0].mxu0
  %v1818 = vadd.f32 %v1205, %v1817
  %v1819 = vpop.f32.mrb[0].mxu0
  %v1820 = vadd.f32 %v1209, %v1819
  %1821 = vmatprep.mubr.bf16.mxu0 %v1635
  %1822 = vmatmul.mubr.bf16.gmra.mrb[0].mxu0 %v1118
  %v1823 = vpop.f32.mrb[0].mxu0
  %v1824 = vadd.f32 %v1205, %v1823
  %v1825 = vpop.f32.mrb[0].mxu0
  %v1826 = vadd.f32 %v1209, %v1825
  %v1827 = vpop.f32.mrb[0].mxu0
  %v1828 = vadd.f32 %v1205, %v1827
  %v1829 = vpop.f32.mrb[0].mxu0
  %v1830 = vadd.f32 %v1209, %v1829
  %1831 = vmatprep.mubr.bf16.mxu0 %v1638
  %1832 = vmatmul.mubr.bf16.gmra.mrb[0].mxu0 %v1120
  %v1833 = vpop.f32.mrb[0].mxu0
  %v1834 = vadd.f32 %v1205, %v1833
  %v1835 = vpop.f32.mrb[0].mxu0
  %v1836 = vadd.f32 %v1209, %v1835
  %v1837 = vpop.f32.mrb[0].mxu0
  %v1838 = vadd.f32 %v1205, %v1837
  %v1839 = vpop.f32.mrb[0].mxu0
  %v1840 = vadd.f32 %v1209, %v1839
  %1841 = vmatprep.mubr.bf16.mxu0 %v1641
  %1842 = vmatmul.mubr.bf16.gmra.mrb[0].mxu0 %v1122
  %v1843 = vpop.f32.mrb[0].mxu0
  %v1844 = vadd.f32 %v1205, %v1843
  %v1845 = vpop.f32.mrb[0].mxu0
  %v1846 = vadd.f32 %v1209, %v1845
  %v1847 = vpop.f32.mrb[0].mxu0
  %v1848 = vadd.f32 %v1205, %v1847
  %v1849 = vpop.f32.mrb[0].mxu0
  %v1850 = vadd.f32 %v1209, %v1849
  %1851 = vmatprep.mubr.bf16.mxu0 %v1644
  %1852 = vmatmul.mubr.bf16.gmra.mrb[0].mxu0 %v1124
  %v1853 = vpop.f32.mrb[0].mxu0
  %v1854 = vadd.f32 %v1205, %v1853
  %v1855 = vpop.f32.mrb[0].mxu0
  %v1856 = vadd.f32 %v1209, %v1855
  %v1857 = vpop.f32.mrb[0].mxu0
  %v1858 = vadd.f32 %v1205, %v1857
  %v1859 = vpop.f32.mrb[0].mxu0
  %v1860 = vadd.f32 %v1209, %v1859
  %1861 = vmatprep.mubr.bf16.mxu0 %v1647
  %1862 = vmatmul.mubr.bf16.gmra.mrb[0].mxu0 %v1126
  %v1863 = vpop.f32.mrb[0].mxu0
  %v1864 = vadd.f32 %v1205, %v1863
  %v1865 = vpop.f32.mrb[0].mxu0
  %v1866 = vadd.f32 %v1209, %v1865
  %v1867 = vpop.f32.mrb[0].mxu0
  %v1868 = vadd.f32 %v1205, %v1867
  %v1869 = vpop.f32.mrb[0].mxu0
  %v1870 = vadd.f32 %v1209, %v1869
  %1871 = vdwg.mxu0
  %1872 = vmatprep.subr.bf16.mxu0 %v1451
  %1873 = vmatpush1.bf16.msra.mxu0 %v1450
  %1874 = vmatprep.subr.bf16.mxu0 %v1457
  %1875 = vmatpush1.bf16.msra.mxu0 %v1456
  %1876 = vmatprep.subr.bf16.mxu0 %v1463
  %1877 = vmatpush1.bf16.msra.mxu0 %v1462
  %1878 = vmatprep.subr.bf16.mxu0 %v1469
  %1879 = vmatpush1.bf16.msra.mxu0 %v1468
  %1880 = vmatprep.subr.bf16.mxu0 %v1475
  %1881 = vmatpush1.bf16.msra.mxu0 %v1474
  %1882 = vmatprep.subr.bf16.mxu0 %v1481
  %1883 = vmatpush1.bf16.msra.mxu0 %v1480
  %1884 = vmatprep.subr.bf16.mxu0 %v1487
  %1885 = vmatpush1.bf16.msra.mxu0 %v1486
  %1886 = vmatprep.subr.bf16.mxu0 %v1493
  %1887 = vmatpush1.bf16.msra.mxu0 %v1492
  %1888 = vmatprep.subr.bf16.mxu0 %v1499
  %1889 = vmatpush1.bf16.msra.mxu0 %v1498
  %1890 = vmatprep.subr.bf16.mxu0 %v1505
  %1891 = vmatpush1.bf16.msra.mxu0 %v1504
  %1892 = vmatprep.subr.bf16.mxu0 %v1511
  %1893 = vmatpush1.bf16.msra.mxu0 %v1510
  %1894 = vmatprep.subr.bf16.mxu0 %v1517
  %1895 = vmatpush1.bf16.msra.mxu0 %v1516
  %1896 = vmatprep.subr.bf16.mxu0 0
  %1897 = vmatpush1.bf16.msra.mxu0 0
  %1898 = vmatprep.subr.bf16.mxu0 0
  %1899 = vmatpush1.bf16.msra.mxu0 0
  %1900 = vmatprep.subr.bf16.mxu0 0
  %1901 = vmatpush1.bf16.msra.mxu0 0
  %1902 = vmatprep.subr.bf16.mxu0 0
  %1903 = vmatpush1.bf16.msra.mxu0 0
  %1904 = vmatprep.mubr.bf16.mxu0 %v1593
  %1905 = vmatmul.mubr.bf16.gmra.mrb[0].mxu0 %v1090
  %v1906 = vpop.f32.mrb[0].mxu0
  %v1907 = vadd.f32 %v1213, %v1906
  %v1908 = vpop.f32.mrb[0].mxu0
  %v1909 = vadd.f32 %v1217, %v1908
  %v1910 = vpop.f32.mrb[0].mxu0
  %v1911 = vadd.f32 %v1213, %v1910
  %v1912 = vpop.f32.mrb[0].mxu0
  %v1913 = vadd.f32 %v1217, %v1912
  %1914 = vmatprep.mubr.bf16.mxu0 %v1596
  %1915 = vmatmul.mubr.bf16.gmra.mrb[0].mxu0 %v1092
  %v1916 = vpop.f32.mrb[0].mxu0
  %v1917 = vadd.f32 %v1213, %v1916
  %v1918 = vpop.f32.mrb[0].mxu0
  %v1919 = vadd.f32 %v1217, %v1918
  %v1920 = vpop.f32.mrb[0].mxu0
  %v1921 = vadd.f32 %v1213, %v1920
  %v1922 = vpop.f32.mrb[0].mxu0
  %v1923 = vadd.f32 %v1217, %v1922
  %1924 = vmatprep.mubr.bf16.mxu0 %v1599
  %1925 = vmatmul.mubr.bf16.gmra.mrb[0].mxu0 %v1094
  %v1926 = vpop.f32.mrb[0].mxu0
  %v1927 = vadd.f32 %v1213, %v1926
  %v1928 = vpop.f32.mrb[0].mxu0
  %v1929 = vadd.f32 %v1217, %v1928
  %v1930 = vpop.f32.mrb[0].mxu0
  %v1931 = vadd.f32 %v1213, %v1930
  %v1932 = vpop.f32.mrb[0].mxu0
  %v1933 = vadd.f32 %v1217, %v1932
  %1934 = vmatprep.mubr.bf16.mxu0 %v1602
  %1935 = vmatmul.mubr.bf16.gmra.mrb[0].mxu0 %v1096
  %v1936 = vpop.f32.mrb[0].mxu0
  %v1937 = vadd.f32 %v1213, %v1936
  %v1938 = vpop.f32.mrb[0].mxu0
  %v1939 = vadd.f32 %v1217, %v1938
  %v1940 = vpop.f32.mrb[0].mxu0
  %v1941 = vadd.f32 %v1213, %v1940
  %v1942 = vpop.f32.mrb[0].mxu0
  %v1943 = vadd.f32 %v1217, %v1942
  %1944 = vmatprep.mubr.bf16.mxu0 %v1605
  %1945 = vmatmul.mubr.bf16.gmra.mrb[0].mxu0 %v1098
  %v1946 = vpop.f32.mrb[0].mxu0
  %v1947 = vadd.f32 %v1213, %v1946
  %v1948 = vpop.f32.mrb[0].mxu0
  %v1949 = vadd.f32 %v1217, %v1948
  %v1950 = vpop.f32.mrb[0].mxu0
  %v1951 = vadd.f32 %v1213, %v1950
  %v1952 = vpop.f32.mrb[0].mxu0
  %v1953 = vadd.f32 %v1217, %v1952
  %1954 = vmatprep.mubr.bf16.mxu0 %v1608
  %1955 = vmatmul.mubr.bf16.gmra.mrb[0].mxu0 %v1100
  %v1956 = vpop.f32.mrb[0].mxu0
  %v1957 = vadd.f32 %v1213, %v1956
  %v1958 = vpop.f32.mrb[0].mxu0
  %v1959 = vadd.f32 %v1217, %v1958
  %v1960 = vpop.f32.mrb[0].mxu0
  %v1961 = vadd.f32 %v1213, %v1960
  %v1962 = vpop.f32.mrb[0].mxu0
  %v1963 = vadd.f32 %v1217, %v1962
  %1964 = vmatprep.mubr.bf16.mxu0 %v1611
  %1965 = vmatmul.mubr.bf16.gmra.mrb[0].mxu0 %v1102
  %v1966 = vpop.f32.mrb[0].mxu0
  %v1967 = vadd.f32 %v1213, %v1966
  %v1968 = vpop.f32.mrb[0].mxu0
  %v1969 = vadd.f32 %v1217, %v1968
  %v1970 = vpop.f32.mrb[0].mxu0
  %v1971 = vadd.f32 %v1213, %v1970
  %v1972 = vpop.f32.mrb[0].mxu0
  %v1973 = vadd.f32 %v1217, %v1972
  %1974 = vmatprep.mubr.bf16.mxu0 %v1614
  %1975 = vmatmul.mubr.bf16.gmra.mrb[0].mxu0 %v1104
  %v1976 = vpop.f32.mrb[0].mxu0
  %v1977 = vadd.f32 %v1213, %v1976
  %v1978 = vpop.f32.mrb[0].mxu0
  %v1979 = vadd.f32 %v1217, %v1978
  %v1980 = vpop.f32.mrb[0].mxu0
  %v1981 = vadd.f32 %v1213, %v1980
  %v1982 = vpop.f32.mrb[0].mxu0
  %v1983 = vadd.f32 %v1217, %v1982
  %1984 = vmatprep.mubr.bf16.mxu0 %v1617
  %1985 = vmatmul.mubr.bf16.gmra.mrb[0].mxu0 %v1106
  %v1986 = vpop.f32.mrb[0].mxu0
  %v1987 = vadd.f32 %v1213, %v1986
  %v1988 = vpop.f32.mrb[0].mxu0
  %v1989 = vadd.f32 %v1217, %v1988
  %v1990 = vpop.f32.mrb[0].mxu0
  %v1991 = vadd.f32 %v1213, %v1990
  %v1992 = vpop.f32.mrb[0].mxu0
  %v1993 = vadd.f32 %v1217, %v1992
  %1994 = vmatprep.mubr.bf16.mxu0 %v1620
  %1995 = vmatmul.mubr.bf16.gmra.mrb[0].mxu0 %v1108
  %v1996 = vpop.f32.mrb[0].mxu0
  %v1997 = vadd.f32 %v1213, %v1996
  %v1998 = vpop.f32.mrb[0].mxu0
  %v1999 = vadd.f32 %v1217, %v1998
  %v2000 = vpop.f32.mrb[0].mxu0
  %v2001 = vadd.f32 %v1213, %v2000
  %v2002 = vpop.f32.mrb[0].mxu0
  %v2003 = vadd.f32 %v1217, %v2002
  %2004 = vmatprep.mubr.bf16.mxu0 %v1623
  %2005 = vmatmul.mubr.bf16.gmra.mrb[0].mxu0 %v1110
  %v2006 = vpop.f32.mrb[0].mxu0
  %v2007 = vadd.f32 %v1213, %v2006
  %v2008 = vpop.f32.mrb[0].mxu0
  %v2009 = vadd.f32 %v1217, %v2008
  %v2010 = vpop.f32.mrb[0].mxu0
  %v2011 = vadd.f32 %v1213, %v2010
  %v2012 = vpop.f32.mrb[0].mxu0
  %v2013 = vadd.f32 %v1217, %v2012
  %2014 = vmatprep.mubr.bf16.mxu0 %v1626
  %2015 = vmatmul.mubr.bf16.gmra.mrb[0].mxu0 %v1112
  %v2016 = vpop.f32.mrb[0].mxu0
  %v2017 = vadd.f32 %v1213, %v2016
  %v2018 = vpop.f32.mrb[0].mxu0
  %v2019 = vadd.f32 %v1217, %v2018
  %v2020 = vpop.f32.mrb[0].mxu0
  %v2021 = vadd.f32 %v1213, %v2020
  %v2022 = vpop.f32.mrb[0].mxu0
  %v2023 = vadd.f32 %v1217, %v2022
  %2024 = vmatprep.mubr.bf16.mxu0 %v1629
  %2025 = vmatmul.mubr.bf16.gmra.mrb[0].mxu0 %v1114
  %v2026 = vpop.f32.mrb[0].mxu0
  %v2027 = vadd.f32 %v1213, %v2026
  %v2028 = vpop.f32.mrb[0].mxu0
  %v2029 = vadd.f32 %v1217, %v2028
  %v2030 = vpop.f32.mrb[0].mxu0
  %v2031 = vadd.f32 %v1213, %v2030
  %v2032 = vpop.f32.mrb[0].mxu0
  %v2033 = vadd.f32 %v1217, %v2032
  %2034 = vmatprep.mubr.bf16.mxu0 %v1632
  %2035 = vmatmul.mubr.bf16.gmra.mrb[0].mxu0 %v1116
  %v2036 = vpop.f32.mrb[0].mxu0
  %v2037 = vadd.f32 %v1213, %v2036
  %v2038 = vpop.f32.mrb[0].mxu0
  %v2039 = vadd.f32 %v1217, %v2038
  %v2040 = vpop.f32.mrb[0].mxu0
  %v2041 = vadd.f32 %v1213, %v2040
  %v2042 = vpop.f32.mrb[0].mxu0
  %v2043 = vadd.f32 %v1217, %v2042
  %2044 = vmatprep.mubr.bf16.mxu0 %v1635
  %2045 = vmatmul.mubr.bf16.gmra.mrb[0].mxu0 %v1118
  %v2046 = vpop.f32.mrb[0].mxu0
  %v2047 = vadd.f32 %v1213, %v2046
  %v2048 = vpop.f32.mrb[0].mxu0
  %v2049 = vadd.f32 %v1217, %v2048
  %v2050 = vpop.f32.mrb[0].mxu0
  %v2051 = vadd.f32 %v1213, %v2050
  %v2052 = vpop.f32.mrb[0].mxu0
  %v2053 = vadd.f32 %v1217, %v2052
  %2054 = vmatprep.mubr.bf16.mxu0 %v1638
  %2055 = vmatmul.mubr.bf16.gmra.mrb[0].mxu0 %v1120
  %v2056 = vpop.f32.mrb[0].mxu0
  %v2057 = vadd.f32 %v1213, %v2056
  %v2058 = vpop.f32.mrb[0].mxu0
  %v2059 = vadd.f32 %v1217, %v2058
  %v2060 = vpop.f32.mrb[0].mxu0
  %v2061 = vadd.f32 %v1213, %v2060
  %v2062 = vpop.f32.mrb[0].mxu0
  %v2063 = vadd.f32 %v1217, %v2062
  %2064 = vmatprep.mubr.bf16.mxu0 %v1641
  %2065 = vmatmul.mubr.bf16.gmra.mrb[0].mxu0 %v1122
  %v2066 = vpop.f32.mrb[0].mxu0
  %v2067 = vadd.f32 %v1213, %v2066
  %v2068 = vpop.f32.mrb[0].mxu0
  %v2069 = vadd.f32 %v1217, %v2068
  %v2070 = vpop.f32.mrb[0].mxu0
  %v2071 = vadd.f32 %v1213, %v2070
  %v2072 = vpop.f32.mrb[0].mxu0
  %v2073 = vadd.f32 %v1217, %v2072
  %2074 = vmatprep.mubr.bf16.mxu0 %v1644
  %2075 = vmatmul.mubr.bf16.gmra.mrb[0].mxu0 %v1124
  %v2076 = vpop.f32.mrb[0].mxu0
  %v2077 = vadd.f32 %v1213, %v2076
  %v2078 = vpop.f32.mrb[0].mxu0
  %v2079 = vadd.f32 %v1217, %v2078
  %v2080 = vpop.f32.mrb[0].mxu0
  %v2081 = vadd.f32 %v1213, %v2080
  %v2082 = vpop.f32.mrb[0].mxu0
  %v2083 = vadd.f32 %v1217, %v2082
  %2084 = vmatprep.mubr.bf16.mxu0 %v1647
  %2085 = vmatmul.mubr.bf16.gmra.mrb[0].mxu0 %v1126
  %v2086 = vpop.f32.mrb[0].mxu0
  %v2087 = vadd.f32 %v1213, %v2086
  %v2088 = vpop.f32.mrb[0].mxu0
  %v2089 = vadd.f32 %v1217, %v2088
  %v2090 = vpop.f32.mrb[0].mxu0
  %v2091 = vadd.f32 %v1213, %v2090
  %v2092 = vpop.f32.mrb[0].mxu0
  %v2093 = vadd.f32 %v1217, %v2092
  %2094 = vdwg.mxu0
  %2095 = vmatprep.subr.bf16.mxu0 %v1453
  %2096 = vmatpush1.bf16.msra.mxu0 %v1452
  %2097 = vmatprep.subr.bf16.mxu0 %v1459
  %2098 = vmatpush1.bf16.msra.mxu0 %v1458
  %2099 = vmatprep.subr.bf16.mxu0 %v1465
  %2100 = vmatpush1.bf16.msra.mxu0 %v1464
  %2101 = vmatprep.subr.bf16.mxu0 %v1471
  %2102 = vmatpush1.bf16.msra.mxu0 %v1470
  %2103 = vmatprep.subr.bf16.mxu0 %v1477
  %2104 = vmatpush1.bf16.msra.mxu0 %v1476
  %2105 = vmatprep.subr.bf16.mxu0 %v1483
  %2106 = vmatpush1.bf16.msra.mxu0 %v1482
  %2107 = vmatprep.subr.bf16.mxu0 %v1489
  %2108 = vmatpush1.bf16.msra.mxu0 %v1488
  %2109 = vmatprep.subr.bf16.mxu0 %v1495
  %2110 = vmatpush1.bf16.msra.mxu0 %v1494
  %2111 = vmatprep.subr.bf16.mxu0 %v1501
  %2112 = vmatpush1.bf16.msra.mxu0 %v1500
  %2113 = vmatprep.subr.bf16.mxu0 %v1507
  %2114 = vmatpush1.bf16.msra.mxu0 %v1506
  %2115 = vmatprep.subr.bf16.mxu0 %v1513
  %2116 = vmatpush1.bf16.msra.mxu0 %v1512
  %2117 = vmatprep.subr.bf16.mxu0 %v1519
  %2118 = vmatpush1.bf16.msra.mxu0 %v1518
  %2119 = vmatprep.subr.bf16.mxu0 0
  %2120 = vmatpush1.bf16.msra.mxu0 0
  %2121 = vmatprep.subr.bf16.mxu0 0
  %2122 = vmatpush1.bf16.msra.mxu0 0
  %2123 = vmatprep.subr.bf16.mxu0 0
  %2124 = vmatpush1.bf16.msra.mxu0 0
  %2125 = vmatprep.subr.bf16.mxu0 0
  %2126 = vmatpush1.bf16.msra.mxu0 0
  %2127 = vmatprep.mubr.bf16.mxu0 %v1593
  %2128 = vmatmul.mubr.bf16.gmra.mrb[0].mxu0 %v1090
  %v2129 = vpop.f32.mrb[0].mxu0
  %v2130 = vadd.f32 %v1221, %v2129
  %v2131 = vpop.f32.mrb[0].mxu0
  %v2132 = vadd.f32 %v1225, %v2131
  %v2133 = vpop.f32.mrb[0].mxu0
  %v2134 = vadd.f32 %v1221, %v2133
  %v2135 = vpop.f32.mrb[0].mxu0
  %v2136 = vadd.f32 %v1225, %v2135
  %2137 = vmatprep.mubr.bf16.mxu0 %v1596
  %2138 = vmatmul.mubr.bf16.gmra.mrb[0].mxu0 %v1092
  %v2139 = vpop.f32.mrb[0].mxu0
  %v2140 = vadd.f32 %v1221, %v2139
  %v2141 = vpop.f32.mrb[0].mxu0
  %v2142 = vadd.f32 %v1225, %v2141
  %v2143 = vpop.f32.mrb[0].mxu0
  %v2144 = vadd.f32 %v1221, %v2143
  %v2145 = vpop.f32.mrb[0].mxu0
  %v2146 = vadd.f32 %v1225, %v2145
  %2147 = vmatprep.mubr.bf16.mxu0 %v1599
  %2148 = vmatmul.mubr.bf16.gmra.mrb[0].mxu0 %v1094
  %v2149 = vpop.f32.mrb[0].mxu0
  %v2150 = vadd.f32 %v1221, %v2149
  %v2151 = vpop.f32.mrb[0].mxu0
  %v2152 = vadd.f32 %v1225, %v2151
  %v2153 = vpop.f32.mrb[0].mxu0
  %v2154 = vadd.f32 %v1221, %v2153
  %v2155 = vpop.f32.mrb[0].mxu0
  %v2156 = vadd.f32 %v1225, %v2155
  %2157 = vmatprep.mubr.bf16.mxu0 %v1602
  %2158 = vmatmul.mubr.bf16.gmra.mrb[0].mxu0 %v1096
  %v2159 = vpop.f32.mrb[0].mxu0
  %v2160 = vadd.f32 %v1221, %v2159
  %v2161 = vpop.f32.mrb[0].mxu0
  %v2162 = vadd.f32 %v1225, %v2161
  %v2163 = vpop.f32.mrb[0].mxu0
  %v2164 = vadd.f32 %v1221, %v2163
  %v2165 = vpop.f32.mrb[0].mxu0
  %v2166 = vadd.f32 %v1225, %v2165
  %2167 = vmatprep.mubr.bf16.mxu0 %v1605
  %2168 = vmatmul.mubr.bf16.gmra.mrb[0].mxu0 %v1098
  %v2169 = vpop.f32.mrb[0].mxu0
  %v2170 = vadd.f32 %v1221, %v2169
  %v2171 = vpop.f32.mrb[0].mxu0
  %v2172 = vadd.f32 %v1225, %v2171
  %v2173 = vpop.f32.mrb[0].mxu0
  %v2174 = vadd.f32 %v1221, %v2173
  %v2175 = vpop.f32.mrb[0].mxu0
  %v2176 = vadd.f32 %v1225, %v2175
  %2177 = vmatprep.mubr.bf16.mxu0 %v1608
  %2178 = vmatmul.mubr.bf16.gmra.mrb[0].mxu0 %v1100
  %v2179 = vpop.f32.mrb[0].mxu0
  %v2180 = vadd.f32 %v1221, %v2179
  %v2181 = vpop.f32.mrb[0].mxu0
  %v2182 = vadd.f32 %v1225, %v2181
  %v2183 = vpop.f32.mrb[0].mxu0
  %v2184 = vadd.f32 %v1221, %v2183
  %v2185 = vpop.f32.mrb[0].mxu0
  %v2186 = vadd.f32 %v1225, %v2185
  %2187 = vmatprep.mubr.bf16.mxu0 %v1611
  %2188 = vmatmul.mubr.bf16.gmra.mrb[0].mxu0 %v1102
  %v2189 = vpop.f32.mrb[0].mxu0
  %v2190 = vadd.f32 %v1221, %v2189
  %v2191 = vpop.f32.mrb[0].mxu0
  %v2192 = vadd.f32 %v1225, %v2191
  %v2193 = vpop.f32.mrb[0].mxu0
  %v2194 = vadd.f32 %v1221, %v2193
  %v2195 = vpop.f32.mrb[0].mxu0
  %v2196 = vadd.f32 %v1225, %v2195
  %2197 = vmatprep.mubr.bf16.mxu0 %v1614
  %2198 = vmatmul.mubr.bf16.gmra.mrb[0].mxu0 %v1104
  %v2199 = vpop.f32.mrb[0].mxu0
  %v2200 = vadd.f32 %v1221, %v2199
  %v2201 = vpop.f32.mrb[0].mxu0
  %v2202 = vadd.f32 %v1225, %v2201
  %v2203 = vpop.f32.mrb[0].mxu0
  %v2204 = vadd.f32 %v1221, %v2203
  %v2205 = vpop.f32.mrb[0].mxu0
  %v2206 = vadd.f32 %v1225, %v2205
  %2207 = vmatprep.mubr.bf16.mxu0 %v1617
  %2208 = vmatmul.mubr.bf16.gmra.mrb[0].mxu0 %v1106
  %v2209 = vpop.f32.mrb[0].mxu0
  %v2210 = vadd.f32 %v1221, %v2209
  %v2211 = vpop.f32.mrb[0].mxu0
  %v2212 = vadd.f32 %v1225, %v2211
  %v2213 = vpop.f32.mrb[0].mxu0
  %v2214 = vadd.f32 %v1221, %v2213
  %v2215 = vpop.f32.mrb[0].mxu0
  %v2216 = vadd.f32 %v1225, %v2215
  %2217 = vmatprep.mubr.bf16.mxu0 %v1620
  %2218 = vmatmul.mubr.bf16.gmra.mrb[0].mxu0 %v1108
  %v2219 = vpop.f32.mrb[0].mxu0
  %v2220 = vadd.f32 %v1221, %v2219
  %v2221 = vpop.f32.mrb[0].mxu0
  %v2222 = vadd.f32 %v1225, %v2221
  %v2223 = vpop.f32.mrb[0].mxu0
  %v2224 = vadd.f32 %v1221, %v2223
  %v2225 = vpop.f32.mrb[0].mxu0
  %v2226 = vadd.f32 %v1225, %v2225
  %2227 = vmatprep.mubr.bf16.mxu0 %v1623
  %2228 = vmatmul.mubr.bf16.gmra.mrb[0].mxu0 %v1110
  %v2229 = vpop.f32.mrb[0].mxu0
  %v2230 = vadd.f32 %v1221, %v2229
  %v2231 = vpop.f32.mrb[0].mxu0
  %v2232 = vadd.f32 %v1225, %v2231
  %v2233 = vpop.f32.mrb[0].mxu0
  %v2234 = vadd.f32 %v1221, %v2233
  %v2235 = vpop.f32.mrb[0].mxu0
  %v2236 = vadd.f32 %v1225, %v2235
  %2237 = vmatprep.mubr.bf16.mxu0 %v1626
  %2238 = vmatmul.mubr.bf16.gmra.mrb[0].mxu0 %v1112
  %v2239 = vpop.f32.mrb[0].mxu0
  %v2240 = vadd.f32 %v1221, %v2239
  %v2241 = vpop.f32.mrb[0].mxu0
  %v2242 = vadd.f32 %v1225, %v2241
  %v2243 = vpop.f32.mrb[0].mxu0
  %v2244 = vadd.f32 %v1221, %v2243
  %v2245 = vpop.f32.mrb[0].mxu0
  %v2246 = vadd.f32 %v1225, %v2245
  %2247 = vmatprep.mubr.bf16.mxu0 %v1629
  %2248 = vmatmul.mubr.bf16.gmra.mrb[0].mxu0 %v1114
  %v2249 = vpop.f32.mrb[0].mxu0
  %v2250 = vadd.f32 %v1221, %v2249
  %v2251 = vpop.f32.mrb[0].mxu0
  %v2252 = vadd.f32 %v1225, %v2251
  %v2253 = vpop.f32.mrb[0].mxu0
  %v2254 = vadd.f32 %v1221, %v2253
  %v2255 = vpop.f32.mrb[0].mxu0
  %v2256 = vadd.f32 %v1225, %v2255
  %2257 = vmatprep.mubr.bf16.mxu0 %v1632
  %2258 = vmatmul.mubr.bf16.gmra.mrb[0].mxu0 %v1116
  %v2259 = vpop.f32.mrb[0].mxu0
  %v2260 = vadd.f32 %v1221, %v2259
  %v2261 = vpop.f32.mrb[0].mxu0
  %v2262 = vadd.f32 %v1225, %v2261
  %v2263 = vpop.f32.mrb[0].mxu0
  %v2264 = vadd.f32 %v1221, %v2263
  %v2265 = vpop.f32.mrb[0].mxu0
  %v2266 = vadd.f32 %v1225, %v2265
  %2267 = vmatprep.mubr.bf16.mxu0 %v1635
  %2268 = vmatmul.mubr.bf16.gmra.mrb[0].mxu0 %v1118
  %v2269 = vpop.f32.mrb[0].mxu0
  %v2270 = vadd.f32 %v1221, %v2269
  %v2271 = vpop.f32.mrb[0].mxu0
  %v2272 = vadd.f32 %v1225, %v2271
  %v2273 = vpop.f32.mrb[0].mxu0
  %v2274 = vadd.f32 %v1221, %v2273
  %v2275 = vpop.f32.mrb[0].mxu0
  %v2276 = vadd.f32 %v1225, %v2275
  %2277 = vmatprep.mubr.bf16.mxu0 %v1638
  %2278 = vmatmul.mubr.bf16.gmra.mrb[0].mxu0 %v1120
  %v2279 = vpop.f32.mrb[0].mxu0
  %v2280 = vadd.f32 %v1221, %v2279
  %v2281 = vpop.f32.mrb[0].mxu0
  %v2282 = vadd.f32 %v1225, %v2281
  %v2283 = vpop.f32.mrb[0].mxu0
  %v2284 = vadd.f32 %v1221, %v2283
  %v2285 = vpop.f32.mrb[0].mxu0
  %v2286 = vadd.f32 %v1225, %v2285
  %2287 = vmatprep.mubr.bf16.mxu0 %v1641
  %2288 = vmatmul.mubr.bf16.gmra.mrb[0].mxu0 %v1122
  %v2289 = vpop.f32.mrb[0].mxu0
  %v2290 = vadd.f32 %v1221, %v2289
  %v2291 = vpop.f32.mrb[0].mxu0
  %v2292 = vadd.f32 %v1225, %v2291
  %v2293 = vpop.f32.mrb[0].mxu0
  %v2294 = vadd.f32 %v1221, %v2293
  %v2295 = vpop.f32.mrb[0].mxu0
  %v2296 = vadd.f32 %v1225, %v2295
  %2297 = vmatprep.mubr.bf16.mxu0 %v1644
  %2298 = vmatmul.mubr.bf16.gmra.mrb[0].mxu0 %v1124
  %v2299 = vpop.f32.mrb[0].mxu0
  %v2300 = vadd.f32 %v1221, %v2299
  %v2301 = vpop.f32.mrb[0].mxu0
  %v2302 = vadd.f32 %v1225, %v2301
  %v2303 = vpop.f32.mrb[0].mxu0
  %v2304 = vadd.f32 %v1221, %v2303
  %v2305 = vpop.f32.mrb[0].mxu0
  %v2306 = vadd.f32 %v1225, %v2305
  %2307 = vmatprep.mubr.bf16.mxu0 %v1647
  %2308 = vmatmul.mubr.bf16.gmra.mrb[0].mxu0 %v1126
  %v2309 = vpop.f32.mrb[0].mxu0
  %v2310 = vadd.f32 %v1221, %v2309
  %v2311 = vpop.f32.mrb[0].mxu0
  %v2312 = vadd.f32 %v1225, %v2311
  %v2313 = vpop.f32.mrb[0].mxu0
  %v2314 = vadd.f32 %v1221, %v2313
  %v2315 = vpop.f32.mrb[0].mxu0
  %v2316 = vadd.f32 %v1225, %v2315
  %2317 = vdwg.mxu0
  %v2318 = vmax.f32 %v1684, 0.0
  %v2319 = vmax.f32 %v1686, 0.0
  %v2320 = vmax.f32 %v1907, 0.0
  %v2321 = vmax.f32 %v1909, 0.0
  %v2322 = vmax.f32 %v2130, 0.0
  %v2323 = vmax.f32 %v2132, 0.0
  %v2324 = vmax.f32 %v1688, 0.0
  %v2325 = vmax.f32 %v1690, 0.0
  %v2326 = vmax.f32 %v1911, 0.0
  %v2327 = vmax.f32 %v1913, 0.0
  %v2328 = vmax.f32 %v2134, 0.0
  %v2329 = vmax.f32 %v2136, 0.0
  %v2330 = vmax.f32 %v1694, 0.0
  %v2331 = vmax.f32 %v1696, 0.0
  %v2332 = vmax.f32 %v1917, 0.0
  %v2333 = vmax.f32 %v1919, 0.0
  %v2334 = vmax.f32 %v2140, 0.0
  %v2335 = vmax.f32 %v2142, 0.0
  %v2336 = vmax.f32 %v1698, 0.0
  %v2337 = vmax.f32 %v1700, 0.0
  %v2338 = vmax.f32 %v1921, 0.0
  %v2339 = vmax.f32 %v1923, 0.0
  %v2340 = vmax.f32 %v2144, 0.0
  %v2341 = vmax.f32 %v2146, 0.0
  %v2342 = vmax.f32 %v1704, 0.0
  %v2343 = vmax.f32 %v1706, 0.0
  %v2344 = vmax.f32 %v1927, 0.0
  %v2345 = vmax.f32 %v1929, 0.0
  %v2346 = vmax.f32 %v2150, 0.0
  %v2347 = vmax.f32 %v2152, 0.0
  %v2348 = vmax.f32 %v1708, 0.0
  %v2349 = vmax.f32 %v1710, 0.0
  %v2350 = vmax.f32 %v1931, 0.0
  %v2351 = vmax.f32 %v1933, 0.0
  %v2352 = vmax.f32 %v2154, 0.0
  %v2353 = vmax.f32 %v2156, 0.0
  %v2354 = vmax.f32 %v1714, 0.0
  %v2355 = vmax.f32 %v1716, 0.0
  %v2356 = vmax.f32 %v1937, 0.0
  %v2357 = vmax.f32 %v1939, 0.0
  %v2358 = vmax.f32 %v2160, 0.0
  %v2359 = vmax.f32 %v2162, 0.0
  %v2360 = vmax.f32 %v1718, 0.0
  %v2361 = vmax.f32 %v1720, 0.0
  %v2362 = vmax.f32 %v1941, 0.0
  %v2363 = vmax.f32 %v1943, 0.0
  %v2364 = vmax.f32 %v2164, 0.0
  %v2365 = vmax.f32 %v2166, 0.0
  %v2366 = vmax.f32 %v1724, 0.0
  %v2367 = vmax.f32 %v1726, 0.0
  %v2368 = vmax.f32 %v1947, 0.0
  %v2369 = vmax.f32 %v1949, 0.0
  %v2370 = vmax.f32 %v2170, 0.0
  %v2371 = vmax.f32 %v2172, 0.0
  %v2372 = vmax.f32 %v1728, 0.0
  %v2373 = vmax.f32 %v1730, 0.0
  %v2374 = vmax.f32 %v1951, 0.0
  %v2375 = vmax.f32 %v1953, 0.0
  %v2376 = vmax.f32 %v2174, 0.0
  %v2377 = vmax.f32 %v2176, 0.0
  %v2378 = vmax.f32 %v1734, 0.0
  %v2379 = vmax.f32 %v1736, 0.0
  %v2380 = vmax.f32 %v1957, 0.0
  %v2381 = vmax.f32 %v1959, 0.0
  %v2382 = vmax.f32 %v2180, 0.0
  %v2383 = vmax.f32 %v2182, 0.0
  %v2384 = vmax.f32 %v1738, 0.0
  %v2385 = vmax.f32 %v1740, 0.0
  %v2386 = vmax.f32 %v1961, 0.0
  %v2387 = vmax.f32 %v1963, 0.0
  %v2388 = vmax.f32 %v2184, 0.0
  %v2389 = vmax.f32 %v2186, 0.0
  %v2390 = vmax.f32 %v1744, 0.0
  %v2391 = vmax.f32 %v1746, 0.0
  %v2392 = vmax.f32 %v1967, 0.0
  %v2393 = vmax.f32 %v1969, 0.0
  %v2394 = vmax.f32 %v2190, 0.0
  %v2395 = vmax.f32 %v2192, 0.0
  %v2396 = vmax.f32 %v1748, 0.0
  %v2397 = vmax.f32 %v1750, 0.0
  %v2398 = vmax.f32 %v1971, 0.0
  %v2399 = vmax.f32 %v1973, 0.0
  %v2400 = vmax.f32 %v2194, 0.0
  %v2401 = vmax.f32 %v2196, 0.0
  %v2402 = vmax.f32 %v1754, 0.0
  %v2403 = vmax.f32 %v1756, 0.0
  %v2404 = vmax.f32 %v1977, 0.0
  %v2405 = vmax.f32 %v1979, 0.0
  %v2406 = vmax.f32 %v2200, 0.0
  %v2407 = vmax.f32 %v2202, 0.0
  %v2408 = vmax.f32 %v1758, 0.0
  %v2409 = vmax.f32 %v1760, 0.0
  %v2410 = vmax.f32 %v1981, 0.0
  %v2411 = vmax.f32 %v1983, 0.0
  %v2412 = vmax.f32 %v2204, 0.0
  %v2413 = vmax.f32 %v2206, 0.0
  %v2414 = vmax.f32 %v1764, 0.0
  %v2415 = vmax.f32 %v1766, 0.0
  %v2416 = vmax.f32 %v1987, 0.0
  %v2417 = vmax.f32 %v1989, 0.0
  %v2418 = vmax.f32 %v2210, 0.0
  %v2419 = vmax.f32 %v2212, 0.0
  %v2420 = vmax.f32 %v1768, 0.0
  %v2421 = vmax.f32 %v1770, 0.0
  %v2422 = vmax.f32 %v1991, 0.0
  %v2423 = vmax.f32 %v1993, 0.0
  %v2424 = vmax.f32 %v2214, 0.0
  %v2425 = vmax.f32 %v2216, 0.0
  %v2426 = vmax.f32 %v1774, 0.0
  %v2427 = vmax.f32 %v1776, 0.0
  %v2428 = vmax.f32 %v1997, 0.0
  %v2429 = vmax.f32 %v1999, 0.0
  %v2430 = vmax.f32 %v2220, 0.0
  %v2431 = vmax.f32 %v2222, 0.0
  %v2432 = vmax.f32 %v1778, 0.0
  %v2433 = vmax.f32 %v1780, 0.0
  %v2434 = vmax.f32 %v2001, 0.0
  %v2435 = vmax.f32 %v2003, 0.0
  %v2436 = vmax.f32 %v2224, 0.0
  %v2437 = vmax.f32 %v2226, 0.0
  %v2438 = vmax.f32 %v1784, 0.0
  %v2439 = vmax.f32 %v1786, 0.0
  %v2440 = vmax.f32 %v2007, 0.0
  %v2441 = vmax.f32 %v2009, 0.0
  %v2442 = vmax.f32 %v2230, 0.0
  %v2443 = vmax.f32 %v2232, 0.0
  %v2444 = vmax.f32 %v1788, 0.0
  %v2445 = vmax.f32 %v1790, 0.0
  %v2446 = vmax.f32 %v2011, 0.0
  %v2447 = vmax.f32 %v2013, 0.0
  %v2448 = vmax.f32 %v2234, 0.0
  %v2449 = vmax.f32 %v2236, 0.0
  %v2450 = vmax.f32 %v1794, 0.0
  %v2451 = vmax.f32 %v1796, 0.0
  %v2452 = vmax.f32 %v2017, 0.0
  %v2453 = vmax.f32 %v2019, 0.0
  %v2454 = vmax.f32 %v2240, 0.0
  %v2455 = vmax.f32 %v2242, 0.0
  %v2456 = vmax.f32 %v1798, 0.0
  %v2457 = vmax.f32 %v1800, 0.0
  %v2458 = vmax.f32 %v2021, 0.0
  %v2459 = vmax.f32 %v2023, 0.0
  %v2460 = vmax.f32 %v2244, 0.0
  %v2461 = vmax.f32 %v2246, 0.0
  %v2462 = vmax.f32 %v1804, 0.0
  %v2463 = vmax.f32 %v1806, 0.0
  %v2464 = vmax.f32 %v2027, 0.0
  %v2465 = vmax.f32 %v2029, 0.0
  %v2466 = vmax.f32 %v2250, 0.0
  %v2467 = vmax.f32 %v2252, 0.0
  %v2468 = vmax.f32 %v1808, 0.0
  %v2469 = vmax.f32 %v1810, 0.0
  %v2470 = vmax.f32 %v2031, 0.0
  %v2471 = vmax.f32 %v2033, 0.0
  %v2472 = vmax.f32 %v2254, 0.0
  %v2473 = vmax.f32 %v2256, 0.0
  %v2474 = vmax.f32 %v1814, 0.0
  %v2475 = vmax.f32 %v1816, 0.0
  %v2476 = vmax.f32 %v2037, 0.0
  %v2477 = vmax.f32 %v2039, 0.0
  %v2478 = vmax.f32 %v2260, 0.0
  %v2479 = vmax.f32 %v2262, 0.0
  %v2480 = vmax.f32 %v1818, 0.0
  %v2481 = vmax.f32 %v1820, 0.0
  %v2482 = vmax.f32 %v2041, 0.0
  %v2483 = vmax.f32 %v2043, 0.0
  %v2484 = vmax.f32 %v2264, 0.0
  %v2485 = vmax.f32 %v2266, 0.0
  %v2486 = vmax.f32 %v1824, 0.0
  %v2487 = vmax.f32 %v1826, 0.0
  %v2488 = vmax.f32 %v2047, 0.0
  %v2489 = vmax.f32 %v2049, 0.0
  %v2490 = vmax.f32 %v2270, 0.0
  %v2491 = vmax.f32 %v2272, 0.0
  %v2492 = vmax.f32 %v1828, 0.0
  %v2493 = vmax.f32 %v1830, 0.0
  %v2494 = vmax.f32 %v2051, 0.0
  %v2495 = vmax.f32 %v2053, 0.0
  %v2496 = vmax.f32 %v2274, 0.0
  %v2497 = vmax.f32 %v2276, 0.0
  %v2498 = vmax.f32 %v1834, 0.0
  %v2499 = vmax.f32 %v1836, 0.0
  %v2500 = vmax.f32 %v2057, 0.0
  %v2501 = vmax.f32 %v2059, 0.0
  %v2502 = vmax.f32 %v2280, 0.0
  %v2503 = vmax.f32 %v2282, 0.0
  %v2504 = vmax.f32 %v1838, 0.0
  %v2505 = vmax.f32 %v1840, 0.0
  %v2506 = vmax.f32 %v2061, 0.0
  %v2507 = vmax.f32 %v2063, 0.0
  %v2508 = vmax.f32 %v2284, 0.0
  %v2509 = vmax.f32 %v2286, 0.0
  %v2510 = vmax.f32 %v1844, 0.0
  %v2511 = vmax.f32 %v1846, 0.0
  %v2512 = vmax.f32 %v2067, 0.0
  %v2513 = vmax.f32 %v2069, 0.0
  %v2514 = vmax.f32 %v2290, 0.0
  %v2515 = vmax.f32 %v2292, 0.0
  %v2516 = vmax.f32 %v1848, 0.0
  %v2517 = vmax.f32 %v1850, 0.0
  %v2518 = vmax.f32 %v2071, 0.0
  %v2519 = vmax.f32 %v2073, 0.0
  %v2520 = vmax.f32 %v2294, 0.0
  %v2521 = vmax.f32 %v2296, 0.0
  %v2522 = vmax.f32 %v1854, 0.0
  %v2523 = vmax.f32 %v1856, 0.0
  %v2524 = vmax.f32 %v2077, 0.0
  %v2525 = vmax.f32 %v2079, 0.0
  %v2526 = vmax.f32 %v2300, 0.0
  %v2527 = vmax.f32 %v2302, 0.0
  %v2528 = vmax.f32 %v1858, 0.0
  %v2529 = vmax.f32 %v1860, 0.0
  %v2530 = vmax.f32 %v2081, 0.0
  %v2531 = vmax.f32 %v2083, 0.0
  %v2532 = vmax.f32 %v2304, 0.0
  %v2533 = vmax.f32 %v2306, 0.0
  %v2534 = vmax.f32 %v1864, 0.0
  %v2535 = vmax.f32 %v1866, 0.0
  %v2536 = vmax.f32 %v2087, 0.0
  %v2537 = vmax.f32 %v2089, 0.0
  %v2538 = vmax.f32 %v2310, 0.0
  %v2539 = vmax.f32 %v2312, 0.0
  %v2540 = vmax.f32 %v1868, 0.0
  %v2541 = vmax.f32 %v1870, 0.0
  %v2542 = vmax.f32 %v2091, 0.0
  %v2543 = vmax.f32 %v2093, 0.0
  %v2544 = vmax.f32 %v2314, 0.0
  %v2545 = vmax.f32 %v2316, 0.0
  %v2546 = vpack.c.bf16 %v2324, %v2318
  %v2547 = vpack.c.bf16 %v2325, %v2319
  %v2548 = vpack.c.bf16 %v2326, %v2320
  %v2549 = vpack.c.bf16 %v2327, %v2321
  %v2550 = vpack.c.bf16 %v2328, %v2322
  %v2551 = vpack.c.bf16 %v2329, %v2323
  %v2552 = vpack.c.bf16 %v2336, %v2330
  %v2553 = vpack.c.bf16 %v2337, %v2331
  %v2554 = vpack.c.bf16 %v2338, %v2332
  %v2555 = vpack.c.bf16 %v2339, %v2333
  %v2556 = vpack.c.bf16 %v2340, %v2334
  %v2557 = vpack.c.bf16 %v2341, %v2335
  %v2558 = vpack.c.bf16 %v2348, %v2342
  %v2559 = vpack.c.bf16 %v2349, %v2343
  %v2560 = vpack.c.bf16 %v2350, %v2344
  %v2561 = vpack.c.bf16 %v2351, %v2345
  %v2562 = vpack.c.bf16 %v2352, %v2346
  %v2563 = vpack.c.bf16 %v2353, %v2347
  %v2564 = vpack.c.bf16 %v2360, %v2354
  %v2565 = vpack.c.bf16 %v2361, %v2355
  %v2566 = vpack.c.bf16 %v2362, %v2356
  %v2567 = vpack.c.bf16 %v2363, %v2357
  %v2568 = vpack.c.bf16 %v2364, %v2358
  %v2569 = vpack.c.bf16 %v2365, %v2359
  %v2570 = vpack.c.bf16 %v2372, %v2366
  %v2571 = vpack.c.bf16 %v2373, %v2367
  %v2572 = vpack.c.bf16 %v2374, %v2368
  %v2573 = vpack.c.bf16 %v2375, %v2369
  %v2574 = vpack.c.bf16 %v2376, %v2370
  %v2575 = vpack.c.bf16 %v2377, %v2371
  %v2576 = vpack.c.bf16 %v2384, %v2378
  %v2577 = vpack.c.bf16 %v2385, %v2379
  %v2578 = vpack.c.bf16 %v2386, %v2380
  %v2579 = vpack.c.bf16 %v2387, %v2381
  %v2580 = vpack.c.bf16 %v2388, %v2382
  %v2581 = vpack.c.bf16 %v2389, %v2383
  %v2582 = vpack.c.bf16 %v2396, %v2390
  %v2583 = vpack.c.bf16 %v2397, %v2391
  %v2584 = vpack.c.bf16 %v2398, %v2392
  %v2585 = vpack.c.bf16 %v2399, %v2393
  %v2586 = vpack.c.bf16 %v2400, %v2394
  %v2587 = vpack.c.bf16 %v2401, %v2395
  %v2588 = vpack.c.bf16 %v2408, %v2402
  %v2589 = vpack.c.bf16 %v2409, %v2403
  %v2590 = vpack.c.bf16 %v2410, %v2404
  %v2591 = vpack.c.bf16 %v2411, %v2405
  %v2592 = vpack.c.bf16 %v2412, %v2406
  %v2593 = vpack.c.bf16 %v2413, %v2407
  %v2594 = vpack.c.bf16 %v2420, %v2414
  %v2595 = vpack.c.bf16 %v2421, %v2415
  %v2596 = vpack.c.bf16 %v2422, %v2416
  %v2597 = vpack.c.bf16 %v2423, %v2417
  %v2598 = vpack.c.bf16 %v2424, %v2418
  %v2599 = vpack.c.bf16 %v2425, %v2419
  %v2600 = vpack.c.bf16 %v2432, %v2426
  %v2601 = vpack.c.bf16 %v2433, %v2427
  %v2602 = vpack.c.bf16 %v2434, %v2428
  %v2603 = vpack.c.bf16 %v2435, %v2429
  %v2604 = vpack.c.bf16 %v2436, %v2430
  %v2605 = vpack.c.bf16 %v2437, %v2431
  %v2606 = vpack.c.bf16 %v2444, %v2438
  %v2607 = vpack.c.bf16 %v2445, %v2439
  %v2608 = vpack.c.bf16 %v2446, %v2440
  %v2609 = vpack.c.bf16 %v2447, %v2441
  %v2610 = vpack.c.bf16 %v2448, %v2442
  %v2611 = vpack.c.bf16 %v2449, %v2443
  %v2612 = vpack.c.bf16 %v2456, %v2450
  %v2613 = vpack.c.bf16 %v2457, %v2451
  %v2614 = vpack.c.bf16 %v2458, %v2452
  %v2615 = vpack.c.bf16 %v2459, %v2453
  %v2616 = vpack.c.bf16 %v2460, %v2454
  %v2617 = vpack.c.bf16 %v2461, %v2455
  %v2618 = vpack.c.bf16 %v2468, %v2462
  %v2619 = vpack.c.bf16 %v2469, %v2463
  %v2620 = vpack.c.bf16 %v2470, %v2464
  %v2621 = vpack.c.bf16 %v2471, %v2465
  %v2622 = vpack.c.bf16 %v2472, %v2466
  %v2623 = vpack.c.bf16 %v2473, %v2467
  %v2624 = vpack.c.bf16 %v2480, %v2474
  %v2625 = vpack.c.bf16 %v2481, %v2475
  %v2626 = vpack.c.bf16 %v2482, %v2476
  %v2627 = vpack.c.bf16 %v2483, %v2477
  %v2628 = vpack.c.bf16 %v2484, %v2478
  %v2629 = vpack.c.bf16 %v2485, %v2479
  %v2630 = vpack.c.bf16 %v2492, %v2486
  %v2631 = vpack.c.bf16 %v2493, %v2487
  %v2632 = vpack.c.bf16 %v2494, %v2488
  %v2633 = vpack.c.bf16 %v2495, %v2489
  %v2634 = vpack.c.bf16 %v2496, %v2490
  %v2635 = vpack.c.bf16 %v2497, %v2491
  %v2636 = vpack.c.bf16 %v2504, %v2498
  %v2637 = vpack.c.bf16 %v2505, %v2499
  %v2638 = vpack.c.bf16 %v2506, %v2500
  %v2639 = vpack.c.bf16 %v2507, %v2501
  %v2640 = vpack.c.bf16 %v2508, %v2502
  %v2641 = vpack.c.bf16 %v2509, %v2503
  %v2642 = vpack.c.bf16 %v2516, %v2510
  %v2643 = vpack.c.bf16 %v2517, %v2511
  %v2644 = vpack.c.bf16 %v2518, %v2512
  %v2645 = vpack.c.bf16 %v2519, %v2513
  %v2646 = vpack.c.bf16 %v2520, %v2514
  %v2647 = vpack.c.bf16 %v2521, %v2515
  %v2648 = vpack.c.bf16 %v2528, %v2522
  %v2649 = vpack.c.bf16 %v2529, %v2523
  %v2650 = vpack.c.bf16 %v2530, %v2524
  %v2651 = vpack.c.bf16 %v2531, %v2525
  %v2652 = vpack.c.bf16 %v2532, %v2526
  %v2653 = vpack.c.bf16 %v2533, %v2527
  %v2654 = vpack.c.bf16 %v2540, %v2534
  %v2655 = vpack.c.bf16 %v2541, %v2535
  %v2656 = vpack.c.bf16 %v2542, %v2536
  %v2657 = vpack.c.bf16 %v2543, %v2537
  %v2658 = vpack.c.bf16 %v2544, %v2538
  %v2659 = vpack.c.bf16 %v2545, %v2539
  %v2660 = vld [vmem:[%s4] sm:$0xf]
  %v2661 = vld [vmem:[%s4 + $0x4] sm:$0xf]
  %v2662 = vld [vmem:[%s4 + $0x8] sm:$0xf]
  %v2663 = vld [vmem:[%s4 + $0xc] sm:$0xf]
  %v2664 = vld [vmem:[%s4 + $0x10] sm:$0xf]
  %v2665 = vld [vmem:[%s4 + $0x14] sm:$0xf]
  %v2666 = vld [vmem:[%s4 + $0x18] sm:$0xf]
  %v2667 = vld [vmem:[%s4 + $0x1c] sm:$0xf]
  %v2668 = vld [vmem:[%s4 + $0x20] sm:$0xf]
  %v2669 = vld [vmem:[%s4 + $0x24] sm:$0xf]
  %v2670 = vld [vmem:[%s4 + $0x28] sm:$0xf]
  %v2671 = vld [vmem:[%s4 + $0x2c] sm:$0xf]
  %v2672 = vld [vmem:[%s4 + $0x30] sm:$0xf]
  %v2673 = vld [vmem:[%s4 + $0x34] sm:$0xf]
  %v2674 = vld [vmem:[%s4 + $0x38] sm:$0xf]
  %v2675 = vld [vmem:[%s4 + $0x3c] sm:$0xf]
  %v2676 = vld [vmem:[%s4 + $0x40] sm:$0xf]
  %v2677 = vld [vmem:[%s4 + $0x44] sm:$0xf]
  %v2678 = vld [vmem:[%s4 + $0x48] sm:$0xf]
  %v2679 = vld [vmem:[%s4 + $0x4c] sm:$0xf]
  %v2680 = vld [vmem:[%s4 + $0x50] sm:$0xf]
  %v2681 = vld [vmem:[%s4 + $0x54] sm:$0xf]
  %v2682 = vld [vmem:[%s4 + $0x58] sm:$0xf]
  %v2683 = vld [vmem:[%s4 + $0x5c] sm:$0xf]
  %v2684 = vld [vmem:[%s4 + $0x60] sm:$0xf]
  %v2685 = vld [vmem:[%s4 + $0x64] sm:$0xf]
  %v2686 = vld [vmem:[%s4 + $0x68] sm:$0xf]
  %v2687 = vld [vmem:[%s4 + $0x6c] sm:$0xf]
  %v2688 = vld [vmem:[%s4 + $0x70] sm:$0xf]
  %v2689 = vld [vmem:[%s4 + $0x74] sm:$0xf]
  %v2690 = vld [vmem:[%s4 + $0x78] sm:$0xf]
  %v2691 = vld [vmem:[%s4 + $0x7c] sm:$0xf]
  %v2692 = vld [vmem:[%s4 + $0x80] sm:$0xf]
  %v2693 = vld [vmem:[%s4 + $0x84] sm:$0xf]
  %v2694 = vld [vmem:[%s4 + $0x88] sm:$0xf]
  %v2695 = vld [vmem:[%s4 + $0x8c] sm:$0xf]
  %v2696 = vld [vmem:[%s4 + $0x90] sm:$0xf]
  %v2697 = vld [vmem:[%s4 + $0x94] sm:$0xf]
  %v2698 = vld [vmem:[%s4 + $0x98] sm:$0xf]
  %v2699 = vld [vmem:[%s4 + $0x9c] sm:$0xf]
  %v2700 = vld [vmem:[%s4 + $0xa0] sm:$0xf]
  %v2701 = vld [vmem:[%s4 + $0xa4] sm:$0xf]
  %v2702 = vld [vmem:[%s4 + $0xa8] sm:$0xf]
  %v2703 = vld [vmem:[%s4 + $0xac] sm:$0xf]
  %v2704 = vld [vmem:[%s4 + $0xb0] sm:$0xf]
  %v2705 = vld [vmem:[%s4 + $0xb4] sm:$0xf]
  %v2706 = vld [vmem:[%s4 + $0xb8] sm:$0xf]
  %v2707 = vld [vmem:[%s4 + $0xbc] sm:$0xf]
  %v2708 = vld [vmem:[%s4 + $0xc0] sm:$0xf]
  %v2709 = vld [vmem:[%s4 + $0xc4] sm:$0xf]
  %v2710 = vld [vmem:[%s4 + $0xc8] sm:$0xf]
  %v2711 = vld [vmem:[%s4 + $0xcc] sm:$0xf]
  %v2712 = vld [vmem:[%s4 + $0xd0] sm:$0xf]
  %v2713 = vld [vmem:[%s4 + $0xd4] sm:$0xf]
  %v2714 = vld [vmem:[%s4 + $0xd8] sm:$0xf]
  %v2715 = vld [vmem:[%s4 + $0xdc] sm:$0xf]
  %v2716 = vld [vmem:[%s4 + $0xe0] sm:$0xf]
  %v2717 = vld [vmem:[%s4 + $0xe4] sm:$0xf]
  %v2718 = vld [vmem:[%s4 + $0xe8] sm:$0xf]
  %v2719 = vld [vmem:[%s4 + $0xec] sm:$0xf]
  %v2720 = vld [vmem:[%s4 + $0xf0] sm:$0xf]
  %v2721 = vld [vmem:[%s4 + $0xf4] sm:$0xf]
  %v2722 = vld [vmem:[%s4 + $0xf8] sm:$0xf]
  %v2723 = vld [vmem:[%s4 + $0xfc] sm:$0xf]
  %v2724 = vld [vmem:[%s4 + $0x100] sm:$0xf]
  %v2725 = vld [vmem:[%s4 + $0x104] sm:$0xf]
  %v2726 = vld [vmem:[%s4 + $0x108] sm:$0xf]
  %v2727 = vld [vmem:[%s4 + $0x10c] sm:$0xf]
  %v2728 = vld [vmem:[%s4 + $0x110] sm:$0xf]
  %v2729 = vld [vmem:[%s4 + $0x114] sm:$0xf]
  %v2730 = vld [vmem:[%s4 + $0x118] sm:$0xf]
  %v2731 = vld [vmem:[%s4 + $0x11c] sm:$0xf]
  %v2732 = vld [vmem:[%s4 + $0x120] sm:$0xf]
  %v2733 = vld [vmem:[%s4 + $0x124] sm:$0xf]
  %v2734 = vld [vmem:[%s4 + $0x128] sm:$0xf]
  %v2735 = vld [vmem:[%s4 + $0x12c] sm:$0xf]
  %v2736 = vld [vmem:[%s4 + $0x130] sm:$0xf]
  %v2737 = vld [vmem:[%s4 + $0x134] sm:$0xf]
  %v2738 = vld [vmem:[%s4 + $0x138] sm:$0xf]
  %v2739 = vld [vmem:[%s4 + $0x13c] sm:$0xf]
  %v2740 = vld [vmem:[%s4 + $0x140] sm:$0xf]
  %v2741 = vld [vmem:[%s4 + $0x144] sm:$0xf]
  %v2742 = vld [vmem:[%s4 + $0x148] sm:$0xf]
  %v2743 = vld [vmem:[%s4 + $0x14c] sm:$0xf]
  %v2744 = vld [vmem:[%s4 + $0x150] sm:$0xf]
  %v2745 = vld [vmem:[%s4 + $0x154] sm:$0xf]
  %v2746 = vld [vmem:[%s4 + $0x158] sm:$0xf]
  %v2747 = vld [vmem:[%s4 + $0x15c] sm:$0xf]
  %v2748 = vld [vmem:[%s4 + $0x160] sm:$0xf]
  %v2749 = vld [vmem:[%s4 + $0x164] sm:$0xf]
  %v2750 = vld [vmem:[%s4 + $0x168] sm:$0xf]
  %v2751 = vld [vmem:[%s4 + $0x16c] sm:$0xf]
  %v2752 = vld [vmem:[%s4 + $0x170] sm:$0xf]
  %v2753 = vld [vmem:[%s4 + $0x174] sm:$0xf]
  %v2754 = vld [vmem:[%s4 + $0x178] sm:$0xf]
  %v2755 = vld [vmem:[%s4 + $0x17c] sm:$0xf]
  %v2756 = vld [vmem:[%s5] sm:$0x1]
  %v2758 = vlaneseq
  %v2759 = vshrl.u32 %v2758, 7
  %v2760 = vsub.s32 0, %v2759
  %v2761 = vrot.slane %v2756, %v2760
  %v2859 = vunpack.c.l.b16 %v2660
  %v2860 = vunpack.c.l.b16 %v2661
  %v2861 = vunpack.c.l.b16 %v2662
  %v2862 = vunpack.c.l.b16 %v2663
  %v2863 = vunpack.c.l.b16 %v2664
  %v2864 = vunpack.c.l.b16 %v2665
  %v2865 = vunpack.c.l.b16 %v2666
  %v2866 = vunpack.c.l.b16 %v2667
  %v2867 = vunpack.c.l.b16 %v2668
  %v2868 = vunpack.c.l.b16 %v2669
  %v2869 = vunpack.c.l.b16 %v2670
  %v2870 = vunpack.c.l.b16 %v2671
  %v2871 = vunpack.c.l.b16 %v2672
  %v2872 = vunpack.c.l.b16 %v2673
  %v2873 = vunpack.c.l.b16 %v2674
  %v2874 = vunpack.c.l.b16 %v2675
  %v2875 = vunpack.c.l.b16 %v2676
  %v2876 = vunpack.c.l.b16 %v2677
  %v2877 = vunpack.c.l.b16 %v2678
  %v2878 = vunpack.c.l.b16 %v2679
  %v2879 = vunpack.c.l.b16 %v2680
  %v2880 = vunpack.c.l.b16 %v2681
  %v2881 = vunpack.c.l.b16 %v2682
  %v2882 = vunpack.c.l.b16 %v2683
  %v2883 = vunpack.c.l.b16 %v2684
  %v2884 = vunpack.c.l.b16 %v2685
  %v2885 = vunpack.c.l.b16 %v2686
  %v2886 = vunpack.c.l.b16 %v2687
  %v2887 = vunpack.c.l.b16 %v2688
  %v2888 = vunpack.c.l.b16 %v2689
  %v2889 = vunpack.c.l.b16 %v2690
  %v2890 = vunpack.c.l.b16 %v2691
  %v2891 = vunpack.c.l.b16 %v2692
  %v2892 = vunpack.c.l.b16 %v2693
  %v2893 = vunpack.c.l.b16 %v2694
  %v2894 = vunpack.c.l.b16 %v2695
  %v2895 = vunpack.c.l.b16 %v2696
  %v2896 = vunpack.c.l.b16 %v2697
  %v2897 = vunpack.c.l.b16 %v2698
  %v2898 = vunpack.c.l.b16 %v2699
  %v2899 = vunpack.c.l.b16 %v2700
  %v2900 = vunpack.c.l.b16 %v2701
  %v2901 = vunpack.c.l.b16 %v2702
  %v2902 = vunpack.c.l.b16 %v2703
  %v2903 = vunpack.c.l.b16 %v2704
  %v2904 = vunpack.c.l.b16 %v2705
  %v2905 = vunpack.c.l.b16 %v2706
  %v2906 = vunpack.c.l.b16 %v2707
  %v2907 = vunpack.c.l.b16 %v2708
  %v2908 = vunpack.c.l.b16 %v2709
  %v2909 = vunpack.c.l.b16 %v2710
  %v2910 = vunpack.c.l.b16 %v2711
  %v2911 = vunpack.c.l.b16 %v2712
  %v2912 = vunpack.c.l.b16 %v2713
  %v2913 = vunpack.c.l.b16 %v2714
  %v2914 = vunpack.c.l.b16 %v2715
  %v2915 = vunpack.c.l.b16 %v2716
  %v2916 = vunpack.c.l.b16 %v2717
  %v2917 = vunpack.c.l.b16 %v2718
  %v2918 = vunpack.c.l.b16 %v2719
  %v2919 = vunpack.c.l.b16 %v2720
  %v2920 = vunpack.c.l.b16 %v2721
  %v2921 = vunpack.c.l.b16 %v2722
  %v2922 = vunpack.c.l.b16 %v2723
  %v2923 = vunpack.c.l.b16 %v2724
  %v2924 = vunpack.c.l.b16 %v2725
  %v2925 = vunpack.c.l.b16 %v2726
  %v2926 = vunpack.c.l.b16 %v2727
  %v2927 = vunpack.c.l.b16 %v2728
  %v2928 = vunpack.c.l.b16 %v2729
  %v2929 = vunpack.c.l.b16 %v2730
  %v2930 = vunpack.c.l.b16 %v2731
  %v2931 = vunpack.c.l.b16 %v2732
  %v2932 = vunpack.c.l.b16 %v2733
  %v2933 = vunpack.c.l.b16 %v2734
  %v2934 = vunpack.c.l.b16 %v2735
  %v2935 = vunpack.c.l.b16 %v2736
  %v2936 = vunpack.c.l.b16 %v2737
  %v2937 = vunpack.c.l.b16 %v2738
  %v2938 = vunpack.c.l.b16 %v2739
  %v2939 = vunpack.c.l.b16 %v2740
  %v2940 = vunpack.c.l.b16 %v2741
  %v2941 = vunpack.c.l.b16 %v2742
  %v2942 = vunpack.c.l.b16 %v2743
  %v2943 = vunpack.c.l.b16 %v2744
  %v2944 = vunpack.c.l.b16 %v2745
  %v2945 = vunpack.c.l.b16 %v2746
  %v2946 = vunpack.c.l.b16 %v2747
  %v2947 = vunpack.c.l.b16 %v2748
  %v2948 = vunpack.c.l.b16 %v2749
  %v2949 = vunpack.c.l.b16 %v2750
  %v2950 = vunpack.c.l.b16 %v2751
  %v2951 = vunpack.c.l.b16 %v2752
  %v2952 = vunpack.c.l.b16 %v2753
  %v2953 = vunpack.c.l.b16 %v2754
  %v2954 = vunpack.c.l.b16 %v2755
  %v2955 = vpack.c.b16 %v2860, %v2859
  %v2956 = vpack.c.b16 %v2862, %v2861
  %v2957 = vpack.c.b16 %v2864, %v2863
  %v2958 = vpack.c.b16 %v2866, %v2865
  %v2959 = vpack.c.b16 %v2868, %v2867
  %v2960 = vpack.c.b16 %v2870, %v2869
  %v2961 = vpack.c.b16 %v2872, %v2871
  %v2962 = vpack.c.b16 %v2874, %v2873
  %v2963 = vpack.c.b16 %v2876, %v2875
  %v2964 = vpack.c.b16 %v2878, %v2877
  %v2965 = vpack.c.b16 %v2880, %v2879
  %v2966 = vpack.c.b16 %v2882, %v2881
  %v2967 = vpack.c.b16 %v2884, %v2883
  %v2968 = vpack.c.b16 %v2886, %v2885
  %v2969 = vpack.c.b16 %v2888, %v2887
  %v2970 = vpack.c.b16 %v2890, %v2889
  %v2971 = vpack.c.b16 %v2892, %v2891
  %v2972 = vpack.c.b16 %v2894, %v2893
  %v2973 = vpack.c.b16 %v2896, %v2895
  %v2974 = vpack.c.b16 %v2898, %v2897
  %v2975 = vpack.c.b16 %v2900, %v2899
  %v2976 = vpack.c.b16 %v2902, %v2901
  %v2977 = vpack.c.b16 %v2904, %v2903
  %v2978 = vpack.c.b16 %v2906, %v2905
  %v2979 = vpack.c.b16 %v2908, %v2907
  %v2980 = vpack.c.b16 %v2910, %v2909
  %v2981 = vpack.c.b16 %v2912, %v2911
  %v2982 = vpack.c.b16 %v2914, %v2913
  %v2983 = vpack.c.b16 %v2916, %v2915
  %v2984 = vpack.c.b16 %v2918, %v2917
  %v2985 = vpack.c.b16 %v2920, %v2919
  %v2986 = vpack.c.b16 %v2922, %v2921
  %v2987 = vpack.c.b16 %v2924, %v2923
  %v2988 = vpack.c.b16 %v2926, %v2925
  %v2989 = vpack.c.b16 %v2928, %v2927
  %v2990 = vpack.c.b16 %v2930, %v2929
  %v2991 = vpack.c.b16 %v2932, %v2931
  %v2992 = vpack.c.b16 %v2934, %v2933
  %v2993 = vpack.c.b16 %v2936, %v2935
  %v2994 = vpack.c.b16 %v2938, %v2937
  %v2995 = vpack.c.b16 %v2940, %v2939
  %v2996 = vpack.c.b16 %v2942, %v2941
  %v2997 = vpack.c.b16 %v2944, %v2943
  %v2998 = vpack.c.b16 %v2946, %v2945
  %v2999 = vpack.c.b16 %v2948, %v2947
  %v3000 = vpack.c.b16 %v2950, %v2949
  %v3001 = vpack.c.b16 %v2952, %v2951
  %v3002 = vpack.c.b16 %v2954, %v2953
  %3051 = vmatprep.subr.bf16.mxu0 0
  %3052 = vmatpush1.bf16.msra.mxu0 %v2955
  %3053 = vmatprep.subr.bf16.mxu0 0
  %3054 = vmatpush1.bf16.msra.mxu0 %v2956
  %3055 = vmatprep.subr.bf16.mxu0 0
  %3056 = vmatpush1.bf16.msra.mxu0 %v2957
  %3057 = vmatprep.subr.bf16.mxu0 0
  %3058 = vmatpush1.bf16.msra.mxu0 %v2958
  %3059 = vmatprep.subr.bf16.mxu0 0
  %3060 = vmatpush1.bf16.msra.mxu0 %v2959
  %3061 = vmatprep.subr.bf16.mxu0 0
  %3062 = vmatpush1.bf16.msra.mxu0 %v2960
  %3063 = vmatprep.subr.bf16.mxu0 0
  %3064 = vmatpush1.bf16.msra.mxu0 %v2961
  %3065 = vmatprep.subr.bf16.mxu0 0
  %3066 = vmatpush1.bf16.msra.mxu0 %v2962
  %3067 = vmatprep.subr.bf16.mxu0 0
  %3068 = vmatpush1.bf16.msra.mxu0 %v2963
  %3069 = vmatprep.subr.bf16.mxu0 0
  %3070 = vmatpush1.bf16.msra.mxu0 %v2964
  %3071 = vmatprep.subr.bf16.mxu0 0
  %3072 = vmatpush1.bf16.msra.mxu0 %v2965
  %3073 = vmatprep.subr.bf16.mxu0 0
  %3074 = vmatpush1.bf16.msra.mxu0 %v2966
  %3075 = vmatprep.subr.bf16.mxu0 0
  %3076 = vmatpush1.bf16.msra.mxu0 %v2967
  %3077 = vmatprep.subr.bf16.mxu0 0
  %3078 = vmatpush1.bf16.msra.mxu0 %v2968
  %3079 = vmatprep.subr.bf16.mxu0 0
  %3080 = vmatpush1.bf16.msra.mxu0 %v2969
  %3081 = vmatprep.subr.bf16.mxu0 0
  %3082 = vmatpush1.bf16.msra.mxu0 %v2970
  %3083 = vmatprep.mubr.bf16.mxu0 %v2547
  %3084 = vmatmul.mubr.bf16.gmra.mrb[0].mxu0 %v2546
  %v3085 = vpop.f32.mrb[0].mxu0
  %v3086 = vadd.f32 %v2761, %v3085
  %v3087 = vpop.f32.mrb[0].mxu0
  %v3088 = vpop.f32.mrb[0].mxu0
  %v3089 = vadd.f32 %v2761, %v3088
  %v3090 = vpop.f32.mrb[0].mxu0
  %3091 = vmatprep.mubr.bf16.mxu0 %v2553
  %3092 = vmatmul.mubr.bf16.gmra.mrb[0].mxu0 %v2552
  %v3093 = vpop.f32.mrb[0].mxu0
  %v3094 = vadd.f32 %v2761, %v3093
  %v3095 = vpop.f32.mrb[0].mxu0
  %v3096 = vpop.f32.mrb[0].mxu0
  %v3097 = vadd.f32 %v2761, %v3096
  %v3098 = vpop.f32.mrb[0].mxu0
  %3099 = vmatprep.mubr.bf16.mxu0 %v2559
  %3100 = vmatmul.mubr.bf16.gmra.mrb[0].mxu0 %v2558
  %v3101 = vpop.f32.mrb[0].mxu0
  %v3102 = vadd.f32 %v2761, %v3101
  %v3103 = vpop.f32.mrb[0].mxu0
  %v3104 = vpop.f32.mrb[0].mxu0
  %v3105 = vadd.f32 %v2761, %v3104
  %v3106 = vpop.f32.mrb[0].mxu0
  %3107 = vmatprep.mubr.bf16.mxu0 %v2565
  %3108 = vmatmul.mubr.bf16.gmra.mrb[0].mxu0 %v2564
  %v3109 = vpop.f32.mrb[0].mxu0
  %v3110 = vadd.f32 %v2761, %v3109
  %v3111 = vpop.f32.mrb[0].mxu0
  %v3112 = vpop.f32.mrb[0].mxu0
  %v3113 = vadd.f32 %v2761, %v3112
  %v3114 = vpop.f32.mrb[0].mxu0
  %3115 = vmatprep.mubr.bf16.mxu0 %v2571
  %3116 = vmatmul.mubr.bf16.gmra.mrb[0].mxu0 %v2570
  %v3117 = vpop.f32.mrb[0].mxu0
  %v3118 = vadd.f32 %v2761, %v3117
  %v3119 = vpop.f32.mrb[0].mxu0
  %v3120 = vpop.f32.mrb[0].mxu0
  %v3121 = vadd.f32 %v2761, %v3120
  %v3122 = vpop.f32.mrb[0].mxu0
  %3123 = vmatprep.mubr.bf16.mxu0 %v2577
  %3124 = vmatmul.mubr.bf16.gmra.mrb[0].mxu0 %v2576
  %v3125 = vpop.f32.mrb[0].mxu0
  %v3126 = vadd.f32 %v2761, %v3125
  %v3127 = vpop.f32.mrb[0].mxu0
  %v3128 = vpop.f32.mrb[0].mxu0
  %v3129 = vadd.f32 %v2761, %v3128
  %v3130 = vpop.f32.mrb[0].mxu0
  %3131 = vmatprep.mubr.bf16.mxu0 %v2583
  %3132 = vmatmul.mubr.bf16.gmra.mrb[0].mxu0 %v2582
  %v3133 = vpop.f32.mrb[0].mxu0
  %v3134 = vadd.f32 %v2761, %v3133
  %v3135 = vpop.f32.mrb[0].mxu0
  %v3136 = vpop.f32.mrb[0].mxu0
  %v3137 = vadd.f32 %v2761, %v3136
  %v3138 = vpop.f32.mrb[0].mxu0
  %3139 = vmatprep.mubr.bf16.mxu0 %v2589
  %3140 = vmatmul.mubr.bf16.gmra.mrb[0].mxu0 %v2588
  %v3141 = vpop.f32.mrb[0].mxu0
  %v3142 = vadd.f32 %v2761, %v3141
  %v3143 = vpop.f32.mrb[0].mxu0
  %v3144 = vpop.f32.mrb[0].mxu0
  %v3145 = vadd.f32 %v2761, %v3144
  %v3146 = vpop.f32.mrb[0].mxu0
  %3147 = vmatprep.mubr.bf16.mxu0 %v2595
  %3148 = vmatmul.mubr.bf16.gmra.mrb[0].mxu0 %v2594
  %v3149 = vpop.f32.mrb[0].mxu0
  %v3150 = vadd.f32 %v2761, %v3149
  %v3151 = vpop.f32.mrb[0].mxu0
  %v3152 = vpop.f32.mrb[0].mxu0
  %v3153 = vadd.f32 %v2761, %v3152
  %v3154 = vpop.f32.mrb[0].mxu0
  %3155 = vmatprep.mubr.bf16.mxu0 %v2601
  %3156 = vmatmul.mubr.bf16.gmra.mrb[0].mxu0 %v2600
  %v3157 = vpop.f32.mrb[0].mxu0
  %v3158 = vadd.f32 %v2761, %v3157
  %v3159 = vpop.f32.mrb[0].mxu0
  %v3160 = vpop.f32.mrb[0].mxu0
  %v3161 = vadd.f32 %v2761, %v3160
  %v3162 = vpop.f32.mrb[0].mxu0
  %3163 = vmatprep.mubr.bf16.mxu0 %v2607
  %3164 = vmatmul.mubr.bf16.gmra.mrb[0].mxu0 %v2606
  %v3165 = vpop.f32.mrb[0].mxu0
  %v3166 = vadd.f32 %v2761, %v3165
  %v3167 = vpop.f32.mrb[0].mxu0
  %v3168 = vpop.f32.mrb[0].mxu0
  %v3169 = vadd.f32 %v2761, %v3168
  %v3170 = vpop.f32.mrb[0].mxu0
  %3171 = vmatprep.mubr.bf16.mxu0 %v2613
  %3172 = vmatmul.mubr.bf16.gmra.mrb[0].mxu0 %v2612
  %v3173 = vpop.f32.mrb[0].mxu0
  %v3174 = vadd.f32 %v2761, %v3173
  %v3175 = vpop.f32.mrb[0].mxu0
  %v3176 = vpop.f32.mrb[0].mxu0
  %v3177 = vadd.f32 %v2761, %v3176
  %v3178 = vpop.f32.mrb[0].mxu0
  %3179 = vmatprep.mubr.bf16.mxu0 %v2619
  %3180 = vmatmul.mubr.bf16.gmra.mrb[0].mxu0 %v2618
  %v3181 = vpop.f32.mrb[0].mxu0
  %v3182 = vadd.f32 %v2761, %v3181
  %v3183 = vpop.f32.mrb[0].mxu0
  %v3184 = vpop.f32.mrb[0].mxu0
  %v3185 = vadd.f32 %v2761, %v3184
  %v3186 = vpop.f32.mrb[0].mxu0
  %3187 = vmatprep.mubr.bf16.mxu0 %v2625
  %3188 = vmatmul.mubr.bf16.gmra.mrb[0].mxu0 %v2624
  %v3189 = vpop.f32.mrb[0].mxu0
  %v3190 = vadd.f32 %v2761, %v3189
  %v3191 = vpop.f32.mrb[0].mxu0
  %v3192 = vpop.f32.mrb[0].mxu0
  %v3193 = vadd.f32 %v2761, %v3192
  %v3194 = vpop.f32.mrb[0].mxu0
  %3195 = vmatprep.mubr.bf16.mxu0 %v2631
  %3196 = vmatmul.mubr.bf16.gmra.mrb[0].mxu0 %v2630
  %v3197 = vpop.f32.mrb[0].mxu0
  %v3198 = vadd.f32 %v2761, %v3197
  %v3199 = vpop.f32.mrb[0].mxu0
  %v3200 = vpop.f32.mrb[0].mxu0
  %v3201 = vadd.f32 %v2761, %v3200
  %v3202 = vpop.f32.mrb[0].mxu0
  %3203 = vmatprep.mubr.bf16.mxu0 %v2637
  %3204 = vmatmul.mubr.bf16.gmra.mrb[0].mxu0 %v2636
  %v3205 = vpop.f32.mrb[0].mxu0
  %v3206 = vadd.f32 %v2761, %v3205
  %v3207 = vpop.f32.mrb[0].mxu0
  %v3208 = vpop.f32.mrb[0].mxu0
  %v3209 = vadd.f32 %v2761, %v3208
  %v3210 = vpop.f32.mrb[0].mxu0
  %3211 = vmatprep.mubr.bf16.mxu0 %v2643
  %3212 = vmatmul.mubr.bf16.gmra.mrb[0].mxu0 %v2642
  %v3213 = vpop.f32.mrb[0].mxu0
  %v3214 = vadd.f32 %v2761, %v3213
  %v3215 = vpop.f32.mrb[0].mxu0
  %v3216 = vpop.f32.mrb[0].mxu0
  %v3217 = vadd.f32 %v2761, %v3216
  %v3218 = vpop.f32.mrb[0].mxu0
  %3219 = vmatprep.mubr.bf16.mxu0 %v2649
  %3220 = vmatmul.mubr.bf16.gmra.mrb[0].mxu0 %v2648
  %v3221 = vpop.f32.mrb[0].mxu0
  %v3222 = vadd.f32 %v2761, %v3221
  %v3223 = vpop.f32.mrb[0].mxu0
  %v3224 = vpop.f32.mrb[0].mxu0
  %v3225 = vadd.f32 %v2761, %v3224
  %v3226 = vpop.f32.mrb[0].mxu0
  %3227 = vmatprep.mubr.bf16.mxu0 %v2655
  %3228 = vmatmul.mubr.bf16.gmra.mrb[0].mxu0 %v2654
  %v3229 = vpop.f32.mrb[0].mxu0
  %v3230 = vadd.f32 %v2761, %v3229
  %v3231 = vpop.f32.mrb[0].mxu0
  %v3232 = vpop.f32.mrb[0].mxu0
  %v3233 = vadd.f32 %v2761, %v3232
  %v3234 = vpop.f32.mrb[0].mxu0
  %3235 = vdwg.mxu0
  %3236 = vmatprep.subr.bf16.mxu0 0
  %3237 = vmatpush1.bf16.msra.mxu0 %v2971
  %3238 = vmatprep.subr.bf16.mxu0 0
  %3239 = vmatpush1.bf16.msra.mxu0 %v2972
  %3240 = vmatprep.subr.bf16.mxu0 0
  %3241 = vmatpush1.bf16.msra.mxu0 %v2973
  %3242 = vmatprep.subr.bf16.mxu0 0
  %3243 = vmatpush1.bf16.msra.mxu0 %v2974
  %3244 = vmatprep.subr.bf16.mxu0 0
  %3245 = vmatpush1.bf16.msra.mxu0 %v2975
  %3246 = vmatprep.subr.bf16.mxu0 0
  %3247 = vmatpush1.bf16.msra.mxu0 %v2976
  %3248 = vmatprep.subr.bf16.mxu0 0
  %3249 = vmatpush1.bf16.msra.mxu0 %v2977
  %3250 = vmatprep.subr.bf16.mxu0 0
  %3251 = vmatpush1.bf16.msra.mxu0 %v2978
  %3252 = vmatprep.subr.bf16.mxu0 0
  %3253 = vmatpush1.bf16.msra.mxu0 %v2979
  %3254 = vmatprep.subr.bf16.mxu0 0
  %3255 = vmatpush1.bf16.msra.mxu0 %v2980
  %3256 = vmatprep.subr.bf16.mxu0 0
  %3257 = vmatpush1.bf16.msra.mxu0 %v2981
  %3258 = vmatprep.subr.bf16.mxu0 0
  %3259 = vmatpush1.bf16.msra.mxu0 %v2982
  %3260 = vmatprep.subr.bf16.mxu0 0
  %3261 = vmatpush1.bf16.msra.mxu0 %v2983
  %3262 = vmatprep.subr.bf16.mxu0 0
  %3263 = vmatpush1.bf16.msra.mxu0 %v2984
  %3264 = vmatprep.subr.bf16.mxu0 0
  %3265 = vmatpush1.bf16.msra.mxu0 %v2985
  %3266 = vmatprep.subr.bf16.mxu0 0
  %3267 = vmatpush1.bf16.msra.mxu0 %v2986
  %3268 = vmatprep.mubr.bf16.mxu0 %v2549
  %3269 = vmatmul.mubr.bf16.gmra.mrb[0].mxu0 %v2548
  %v3270 = vpop.f32.mrb[0].mxu0
  %v3271 = vadd.f32 %v3086, %v3270
  %v3272 = vpop.f32.mrb[0].mxu0
  %v3273 = vpop.f32.mrb[0].mxu0
  %v3274 = vadd.f32 %v3089, %v3273
  %v3275 = vpop.f32.mrb[0].mxu0
  %3276 = vmatprep.mubr.bf16.mxu0 %v2555
  %3277 = vmatmul.mubr.bf16.gmra.mrb[0].mxu0 %v2554
  %v3278 = vpop.f32.mrb[0].mxu0
  %v3279 = vadd.f32 %v3094, %v3278
  %v3280 = vpop.f32.mrb[0].mxu0
  %v3281 = vpop.f32.mrb[0].mxu0
  %v3282 = vadd.f32 %v3097, %v3281
  %v3283 = vpop.f32.mrb[0].mxu0
  %3284 = vmatprep.mubr.bf16.mxu0 %v2561
  %3285 = vmatmul.mubr.bf16.gmra.mrb[0].mxu0 %v2560
  %v3286 = vpop.f32.mrb[0].mxu0
  %v3287 = vadd.f32 %v3102, %v3286
  %v3288 = vpop.f32.mrb[0].mxu0
  %v3289 = vpop.f32.mrb[0].mxu0
  %v3290 = vadd.f32 %v3105, %v3289
  %v3291 = vpop.f32.mrb[0].mxu0
  %3292 = vmatprep.mubr.bf16.mxu0 %v2567
  %3293 = vmatmul.mubr.bf16.gmra.mrb[0].mxu0 %v2566
  %v3294 = vpop.f32.mrb[0].mxu0
  %v3295 = vadd.f32 %v3110, %v3294
  %v3296 = vpop.f32.mrb[0].mxu0
  %v3297 = vpop.f32.mrb[0].mxu0
  %v3298 = vadd.f32 %v3113, %v3297
  %v3299 = vpop.f32.mrb[0].mxu0
  %3300 = vmatprep.mubr.bf16.mxu0 %v2573
  %3301 = vmatmul.mubr.bf16.gmra.mrb[0].mxu0 %v2572
  %v3302 = vpop.f32.mrb[0].mxu0
  %v3303 = vadd.f32 %v3118, %v3302
  %v3304 = vpop.f32.mrb[0].mxu0
  %v3305 = vpop.f32.mrb[0].mxu0
  %v3306 = vadd.f32 %v3121, %v3305
  %v3307 = vpop.f32.mrb[0].mxu0
  %3308 = vmatprep.mubr.bf16.mxu0 %v2579
  %3309 = vmatmul.mubr.bf16.gmra.mrb[0].mxu0 %v2578
  %v3310 = vpop.f32.mrb[0].mxu0
  %v3311 = vadd.f32 %v3126, %v3310
  %v3312 = vpop.f32.mrb[0].mxu0
  %v3313 = vpop.f32.mrb[0].mxu0
  %v3314 = vadd.f32 %v3129, %v3313
  %v3315 = vpop.f32.mrb[0].mxu0
  %3316 = vmatprep.mubr.bf16.mxu0 %v2585
  %3317 = vmatmul.mubr.bf16.gmra.mrb[0].mxu0 %v2584
  %v3318 = vpop.f32.mrb[0].mxu0
  %v3319 = vadd.f32 %v3134, %v3318
  %v3320 = vpop.f32.mrb[0].mxu0
  %v3321 = vpop.f32.mrb[0].mxu0
  %v3322 = vadd.f32 %v3137, %v3321
  %v3323 = vpop.f32.mrb[0].mxu0
  %3324 = vmatprep.mubr.bf16.mxu0 %v2591
  %3325 = vmatmul.mubr.bf16.gmra.mrb[0].mxu0 %v2590
  %v3326 = vpop.f32.mrb[0].mxu0
  %v3327 = vadd.f32 %v3142, %v3326
  %v3328 = vpop.f32.mrb[0].mxu0
  %v3329 = vpop.f32.mrb[0].mxu0
  %v3330 = vadd.f32 %v3145, %v3329
  %v3331 = vpop.f32.mrb[0].mxu0
  %3332 = vmatprep.mubr.bf16.mxu0 %v2597
  %3333 = vmatmul.mubr.bf16.gmra.mrb[0].mxu0 %v2596
  %v3334 = vpop.f32.mrb[0].mxu0
  %v3335 = vadd.f32 %v3150, %v3334
  %v3336 = vpop.f32.mrb[0].mxu0
  %v3337 = vpop.f32.mrb[0].mxu0
  %v3338 = vadd.f32 %v3153, %v3337
  %v3339 = vpop.f32.mrb[0].mxu0
  %3340 = vmatprep.mubr.bf16.mxu0 %v2603
  %3341 = vmatmul.mubr.bf16.gmra.mrb[0].mxu0 %v2602
  %v3342 = vpop.f32.mrb[0].mxu0
  %v3343 = vadd.f32 %v3158, %v3342
  %v3344 = vpop.f32.mrb[0].mxu0
  %v3345 = vpop.f32.mrb[0].mxu0
  %v3346 = vadd.f32 %v3161, %v3345
  %v3347 = vpop.f32.mrb[0].mxu0
  %3348 = vmatprep.mubr.bf16.mxu0 %v2609
  %3349 = vmatmul.mubr.bf16.gmra.mrb[0].mxu0 %v2608
  %v3350 = vpop.f32.mrb[0].mxu0
  %v3351 = vadd.f32 %v3166, %v3350
  %v3352 = vpop.f32.mrb[0].mxu0
  %v3353 = vpop.f32.mrb[0].mxu0
  %v3354 = vadd.f32 %v3169, %v3353
  %v3355 = vpop.f32.mrb[0].mxu0
  %3356 = vmatprep.mubr.bf16.mxu0 %v2615
  %3357 = vmatmul.mubr.bf16.gmra.mrb[0].mxu0 %v2614
  %v3358 = vpop.f32.mrb[0].mxu0
  %v3359 = vadd.f32 %v3174, %v3358
  %v3360 = vpop.f32.mrb[0].mxu0
  %v3361 = vpop.f32.mrb[0].mxu0
  %v3362 = vadd.f32 %v3177, %v3361
  %v3363 = vpop.f32.mrb[0].mxu0
  %3364 = vmatprep.mubr.bf16.mxu0 %v2621
  %3365 = vmatmul.mubr.bf16.gmra.mrb[0].mxu0 %v2620
  %v3366 = vpop.f32.mrb[0].mxu0
  %v3367 = vadd.f32 %v3182, %v3366
  %v3368 = vpop.f32.mrb[0].mxu0
  %v3369 = vpop.f32.mrb[0].mxu0
  %v3370 = vadd.f32 %v3185, %v3369
  %v3371 = vpop.f32.mrb[0].mxu0
  %3372 = vmatprep.mubr.bf16.mxu0 %v2627
  %3373 = vmatmul.mubr.bf16.gmra.mrb[0].mxu0 %v2626
  %v3374 = vpop.f32.mrb[0].mxu0
  %v3375 = vadd.f32 %v3190, %v3374
  %v3376 = vpop.f32.mrb[0].mxu0
  %v3377 = vpop.f32.mrb[0].mxu0
  %v3378 = vadd.f32 %v3193, %v3377
  %v3379 = vpop.f32.mrb[0].mxu0
  %3380 = vmatprep.mubr.bf16.mxu0 %v2633
  %3381 = vmatmul.mubr.bf16.gmra.mrb[0].mxu0 %v2632
  %v3382 = vpop.f32.mrb[0].mxu0
  %v3383 = vadd.f32 %v3198, %v3382
  %v3384 = vpop.f32.mrb[0].mxu0
  %v3385 = vpop.f32.mrb[0].mxu0
  %v3386 = vadd.f32 %v3201, %v3385
  %v3387 = vpop.f32.mrb[0].mxu0
  %3388 = vmatprep.mubr.bf16.mxu0 %v2639
  %3389 = vmatmul.mubr.bf16.gmra.mrb[0].mxu0 %v2638
  %v3390 = vpop.f32.mrb[0].mxu0
  %v3391 = vadd.f32 %v3206, %v3390
  %v3392 = vpop.f32.mrb[0].mxu0
  %v3393 = vpop.f32.mrb[0].mxu0
  %v3394 = vadd.f32 %v3209, %v3393
  %v3395 = vpop.f32.mrb[0].mxu0
  %3396 = vmatprep.mubr.bf16.mxu0 %v2645
  %3397 = vmatmul.mubr.bf16.gmra.mrb[0].mxu0 %v2644
  %v3398 = vpop.f32.mrb[0].mxu0
  %v3399 = vadd.f32 %v3214, %v3398
  %v3400 = vpop.f32.mrb[0].mxu0
  %v3401 = vpop.f32.mrb[0].mxu0
  %v3402 = vadd.f32 %v3217, %v3401
  %v3403 = vpop.f32.mrb[0].mxu0
  %3404 = vmatprep.mubr.bf16.mxu0 %v2651
  %3405 = vmatmul.mubr.bf16.gmra.mrb[0].mxu0 %v2650
  %v3406 = vpop.f32.mrb[0].mxu0
  %v3407 = vadd.f32 %v3222, %v3406
  %v3408 = vpop.f32.mrb[0].mxu0
  %v3409 = vpop.f32.mrb[0].mxu0
  %v3410 = vadd.f32 %v3225, %v3409
  %v3411 = vpop.f32.mrb[0].mxu0
  %3412 = vmatprep.mubr.bf16.mxu0 %v2657
  %3413 = vmatmul.mubr.bf16.gmra.mrb[0].mxu0 %v2656
  %v3414 = vpop.f32.mrb[0].mxu0
  %v3415 = vadd.f32 %v3230, %v3414
  %v3416 = vpop.f32.mrb[0].mxu0
  %v3417 = vpop.f32.mrb[0].mxu0
  %v3418 = vadd.f32 %v3233, %v3417
  %v3419 = vpop.f32.mrb[0].mxu0
  %3420 = vdwg.mxu0
  %3421 = vmatprep.subr.bf16.mxu0 0
  %3422 = vmatpush1.bf16.msra.mxu0 %v2987
  %3423 = vmatprep.subr.bf16.mxu0 0
  %3424 = vmatpush1.bf16.msra.mxu0 %v2988
  %3425 = vmatprep.subr.bf16.mxu0 0
  %3426 = vmatpush1.bf16.msra.mxu0 %v2989
  %3427 = vmatprep.subr.bf16.mxu0 0
  %3428 = vmatpush1.bf16.msra.mxu0 %v2990
  %3429 = vmatprep.subr.bf16.mxu0 0
  %3430 = vmatpush1.bf16.msra.mxu0 %v2991
  %3431 = vmatprep.subr.bf16.mxu0 0
  %3432 = vmatpush1.bf16.msra.mxu0 %v2992
  %3433 = vmatprep.subr.bf16.mxu0 0
  %3434 = vmatpush1.bf16.msra.mxu0 %v2993
  %3435 = vmatprep.subr.bf16.mxu0 0
  %3436 = vmatpush1.bf16.msra.mxu0 %v2994
  %3437 = vmatprep.subr.bf16.mxu0 0
  %3438 = vmatpush1.bf16.msra.mxu0 %v2995
  %3439 = vmatprep.subr.bf16.mxu0 0
  %3440 = vmatpush1.bf16.msra.mxu0 %v2996
  %3441 = vmatprep.subr.bf16.mxu0 0
  %3442 = vmatpush1.bf16.msra.mxu0 %v2997
  %3443 = vmatprep.subr.bf16.mxu0 0
  %3444 = vmatpush1.bf16.msra.mxu0 %v2998
  %3445 = vmatprep.subr.bf16.mxu0 0
  %3446 = vmatpush1.bf16.msra.mxu0 %v2999
  %3447 = vmatprep.subr.bf16.mxu0 0
  %3448 = vmatpush1.bf16.msra.mxu0 %v3000
  %3449 = vmatprep.subr.bf16.mxu0 0
  %3450 = vmatpush1.bf16.msra.mxu0 %v3001
  %3451 = vmatprep.subr.bf16.mxu0 0
  %3452 = vmatpush1.bf16.msra.mxu0 %v3002
  %3453 = vmatprep.mubr.bf16.mxu0 %v2551
  %3454 = vmatmul.mubr.bf16.gmra.mrb[0].mxu0 %v2550
  %v3455 = vpop.f32.mrb[0].mxu0
  %v3456 = vadd.f32 %v3271, %v3455
  %v3457 = vpop.f32.mrb[0].mxu0
  %v3458 = vpop.f32.mrb[0].mxu0
  %v3459 = vadd.f32 %v3274, %v3458
  %v3460 = vpop.f32.mrb[0].mxu0
  %3461 = vmatprep.mubr.bf16.mxu0 %v2557
  %3462 = vmatmul.mubr.bf16.gmra.mrb[0].mxu0 %v2556
  %v3463 = vpop.f32.mrb[0].mxu0
  %v3464 = vadd.f32 %v3279, %v3463
  %v3465 = vpop.f32.mrb[0].mxu0
  %v3466 = vpop.f32.mrb[0].mxu0
  %v3467 = vadd.f32 %v3282, %v3466
  %v3468 = vpop.f32.mrb[0].mxu0
  %3469 = vmatprep.mubr.bf16.mxu0 %v2563
  %3470 = vmatmul.mubr.bf16.gmra.mrb[0].mxu0 %v2562
  %v3471 = vpop.f32.mrb[0].mxu0
  %v3472 = vadd.f32 %v3287, %v3471
  %v3473 = vpop.f32.mrb[0].mxu0
  %v3474 = vpop.f32.mrb[0].mxu0
  %v3475 = vadd.f32 %v3290, %v3474
  %v3476 = vpop.f32.mrb[0].mxu0
  %3477 = vmatprep.mubr.bf16.mxu0 %v2569
  %3478 = vmatmul.mubr.bf16.gmra.mrb[0].mxu0 %v2568
  %v3479 = vpop.f32.mrb[0].mxu0
  %v3480 = vadd.f32 %v3295, %v3479
  %v3481 = vpop.f32.mrb[0].mxu0
  %v3482 = vpop.f32.mrb[0].mxu0
  %v3483 = vadd.f32 %v3298, %v3482
  %v3484 = vpop.f32.mrb[0].mxu0
  %3485 = vmatprep.mubr.bf16.mxu0 %v2575
  %3486 = vmatmul.mubr.bf16.gmra.mrb[0].mxu0 %v2574
  %v3487 = vpop.f32.mrb[0].mxu0
  %v3488 = vadd.f32 %v3303, %v3487
  %v3489 = vpop.f32.mrb[0].mxu0
  %v3490 = vpop.f32.mrb[0].mxu0
  %v3491 = vadd.f32 %v3306, %v3490
  %v3492 = vpop.f32.mrb[0].mxu0
  %3493 = vmatprep.mubr.bf16.mxu0 %v2581
  %3494 = vmatmul.mubr.bf16.gmra.mrb[0].mxu0 %v2580
  %v3495 = vpop.f32.mrb[0].mxu0
  %v3496 = vadd.f32 %v3311, %v3495
  %v3497 = vpop.f32.mrb[0].mxu0
  %v3498 = vpop.f32.mrb[0].mxu0
  %v3499 = vadd.f32 %v3314, %v3498
  %v3500 = vpop.f32.mrb[0].mxu0
  %3501 = vmatprep.mubr.bf16.mxu0 %v2587
  %3502 = vmatmul.mubr.bf16.gmra.mrb[0].mxu0 %v2586
  %v3503 = vpop.f32.mrb[0].mxu0
  %v3504 = vadd.f32 %v3319, %v3503
  %v3505 = vpop.f32.mrb[0].mxu0
  %v3506 = vpop.f32.mrb[0].mxu0
  %v3507 = vadd.f32 %v3322, %v3506
  %v3508 = vpop.f32.mrb[0].mxu0
  %3509 = vmatprep.mubr.bf16.mxu0 %v2593
  %3510 = vmatmul.mubr.bf16.gmra.mrb[0].mxu0 %v2592
  %v3511 = vpop.f32.mrb[0].mxu0
  %v3512 = vadd.f32 %v3327, %v3511
  %v3513 = vpop.f32.mrb[0].mxu0
  %v3514 = vpop.f32.mrb[0].mxu0
  %v3515 = vadd.f32 %v3330, %v3514
  %v3516 = vpop.f32.mrb[0].mxu0
  %3517 = vmatprep.mubr.bf16.mxu0 %v2599
  %3518 = vmatmul.mubr.bf16.gmra.mrb[0].mxu0 %v2598
  %v3519 = vpop.f32.mrb[0].mxu0
  %v3520 = vadd.f32 %v3335, %v3519
  %v3521 = vpop.f32.mrb[0].mxu0
  %v3522 = vpop.f32.mrb[0].mxu0
  %v3523 = vadd.f32 %v3338, %v3522
  %v3524 = vpop.f32.mrb[0].mxu0
  %3525 = vmatprep.mubr.bf16.mxu0 %v2605
  %3526 = vmatmul.mubr.bf16.gmra.mrb[0].mxu0 %v2604
  %v3527 = vpop.f32.mrb[0].mxu0
  %v3528 = vadd.f32 %v3343, %v3527
  %v3529 = vpop.f32.mrb[0].mxu0
  %v3530 = vpop.f32.mrb[0].mxu0
  %v3531 = vadd.f32 %v3346, %v3530
  %v3532 = vpop.f32.mrb[0].mxu0
  %3533 = vmatprep.mubr.bf16.mxu0 %v2611
  %3534 = vmatmul.mubr.bf16.gmra.mrb[0].mxu0 %v2610
  %v3535 = vpop.f32.mrb[0].mxu0
  %v3536 = vadd.f32 %v3351, %v3535
  %v3537 = vpop.f32.mrb[0].mxu0
  %v3538 = vpop.f32.mrb[0].mxu0
  %v3539 = vadd.f32 %v3354, %v3538
  %v3540 = vpop.f32.mrb[0].mxu0
  %3541 = vmatprep.mubr.bf16.mxu0 %v2617
  %3542 = vmatmul.mubr.bf16.gmra.mrb[0].mxu0 %v2616
  %v3543 = vpop.f32.mrb[0].mxu0
  %v3544 = vadd.f32 %v3359, %v3543
  %v3545 = vpop.f32.mrb[0].mxu0
  %v3546 = vpop.f32.mrb[0].mxu0
  %v3547 = vadd.f32 %v3362, %v3546
  %v3548 = vpop.f32.mrb[0].mxu0
  %3549 = vmatprep.mubr.bf16.mxu0 %v2623
  %3550 = vmatmul.mubr.bf16.gmra.mrb[0].mxu0 %v2622
  %v3551 = vpop.f32.mrb[0].mxu0
  %v3552 = vadd.f32 %v3367, %v3551
  %v3553 = vpop.f32.mrb[0].mxu0
  %v3554 = vpop.f32.mrb[0].mxu0
  %v3555 = vadd.f32 %v3370, %v3554
  %v3556 = vpop.f32.mrb[0].mxu0
  %3557 = vmatprep.mubr.bf16.mxu0 %v2629
  %3558 = vmatmul.mubr.bf16.gmra.mrb[0].mxu0 %v2628
  %v3559 = vpop.f32.mrb[0].mxu0
  %v3560 = vadd.f32 %v3375, %v3559
  %v3561 = vpop.f32.mrb[0].mxu0
  %v3562 = vpop.f32.mrb[0].mxu0
  %v3563 = vadd.f32 %v3378, %v3562
  %v3564 = vpop.f32.mrb[0].mxu0
  %3565 = vmatprep.mubr.bf16.mxu0 %v2635
  %3566 = vmatmul.mubr.bf16.gmra.mrb[0].mxu0 %v2634
  %v3567 = vpop.f32.mrb[0].mxu0
  %v3568 = vadd.f32 %v3383, %v3567
  %v3569 = vpop.f32.mrb[0].mxu0
  %v3570 = vpop.f32.mrb[0].mxu0
  %v3571 = vadd.f32 %v3386, %v3570
  %v3572 = vpop.f32.mrb[0].mxu0
  %3573 = vmatprep.mubr.bf16.mxu0 %v2641
  %3574 = vmatmul.mubr.bf16.gmra.mrb[0].mxu0 %v2640
  %v3575 = vpop.f32.mrb[0].mxu0
  %v3576 = vadd.f32 %v3391, %v3575
  %v3577 = vpop.f32.mrb[0].mxu0
  %v3578 = vpop.f32.mrb[0].mxu0
  %v3579 = vadd.f32 %v3394, %v3578
  %v3580 = vpop.f32.mrb[0].mxu0
  %3581 = vmatprep.mubr.bf16.mxu0 %v2647
  %3582 = vmatmul.mubr.bf16.gmra.mrb[0].mxu0 %v2646
  %v3583 = vpop.f32.mrb[0].mxu0
  %v3584 = vadd.f32 %v3399, %v3583
  %v3585 = vpop.f32.mrb[0].mxu0
  %v3586 = vpop.f32.mrb[0].mxu0
  %v3587 = vadd.f32 %v3402, %v3586
  %v3588 = vpop.f32.mrb[0].mxu0
  %3589 = vmatprep.mubr.bf16.mxu0 %v2653
  %3590 = vmatmul.mubr.bf16.gmra.mrb[0].mxu0 %v2652
  %v3591 = vpop.f32.mrb[0].mxu0
  %v3592 = vadd.f32 %v3407, %v3591
  %v3593 = vpop.f32.mrb[0].mxu0
  %v3594 = vpop.f32.mrb[0].mxu0
  %v3595 = vadd.f32 %v3410, %v3594
  %v3596 = vpop.f32.mrb[0].mxu0
  %3597 = vmatprep.mubr.bf16.mxu0 %v2659
  %3598 = vmatmul.mubr.bf16.gmra.mrb[0].mxu0 %v2658
  %v3599 = vpop.f32.mrb[0].mxu0
  %v3600 = vadd.f32 %v3415, %v3599
  %v3601 = vpop.f32.mrb[0].mxu0
  %v3602 = vpop.f32.mrb[0].mxu0
  %v3603 = vadd.f32 %v3418, %v3602
  %v3604 = vpop.f32.mrb[0].mxu0
  %3605 = vdwg.mxu0
  %vm3606 = vcmask 261120
  %3607 = vst.msk [vmem:[%s6] sm:$0xff] %vm3606, %v3456
  %3608 = vst.msk [vmem:[%s6 + $0x8] sm:$0xff] %vm3606, %v3459
  %3609 = vst.msk [vmem:[%s6 + $0x10] sm:$0xff] %vm3606, %v3464
  %3610 = vst.msk [vmem:[%s6 + $0x18] sm:$0xff] %vm3606, %v3467
  %3611 = vst.msk [vmem:[%s6 + $0x20] sm:$0xff] %vm3606, %v3472
  %3612 = vst.msk [vmem:[%s6 + $0x28] sm:$0xff] %vm3606, %v3475
  %3613 = vst.msk [vmem:[%s6 + $0x30] sm:$0xff] %vm3606, %v3480
  %3614 = vst.msk [vmem:[%s6 + $0x38] sm:$0xff] %vm3606, %v3483
  %3615 = vst.msk [vmem:[%s6 + $0x40] sm:$0xff] %vm3606, %v3488
  %3616 = vst.msk [vmem:[%s6 + $0x48] sm:$0xff] %vm3606, %v3491
  %3617 = vst.msk [vmem:[%s6 + $0x50] sm:$0xff] %vm3606, %v3496
  %3618 = vst.msk [vmem:[%s6 + $0x58] sm:$0xff] %vm3606, %v3499
  %3619 = vst.msk [vmem:[%s6 + $0x60] sm:$0xff] %vm3606, %v3504
  %3620 = vst.msk [vmem:[%s6 + $0x68] sm:$0xff] %vm3606, %v3507
  %3621 = vst.msk [vmem:[%s6 + $0x70] sm:$0xff] %vm3606, %v3512
  %3622 = vst.msk [vmem:[%s6 + $0x78] sm:$0xff] %vm3606, %v3515
  %3623 = vst.msk [vmem:[%s6 + $0x80] sm:$0xff] %vm3606, %v3520
  %3624 = vst.msk [vmem:[%s6 + $0x88] sm:$0xff] %vm3606, %v3523
  %3625 = vst.msk [vmem:[%s6 + $0x90] sm:$0xff] %vm3606, %v3528
  %3626 = vst.msk [vmem:[%s6 + $0x98] sm:$0xff] %vm3606, %v3531
  %3627 = vst.msk [vmem:[%s6 + $0xa0] sm:$0xff] %vm3606, %v3536
  %3628 = vst.msk [vmem:[%s6 + $0xa8] sm:$0xff] %vm3606, %v3539
  %3629 = vst.msk [vmem:[%s6 + $0xb0] sm:$0xff] %vm3606, %v3544
  %3630 = vst.msk [vmem:[%s6 + $0xb8] sm:$0xff] %vm3606, %v3547
  %3631 = vst.msk [vmem:[%s6 + $0xc0] sm:$0xff] %vm3606, %v3552
  %3632 = vst.msk [vmem:[%s6 + $0xc8] sm:$0xff] %vm3606, %v3555
  %3633 = vst.msk [vmem:[%s6 + $0xd0] sm:$0xff] %vm3606, %v3560
  %3634 = vst.msk [vmem:[%s6 + $0xd8] sm:$0xff] %vm3606, %v3563
  %3635 = vst.msk [vmem:[%s6 + $0xe0] sm:$0xff] %vm3606, %v3568
  %3636 = vst.msk [vmem:[%s6 + $0xe8] sm:$0xff] %vm3606, %v3571
  %3637 = vst.msk [vmem:[%s6 + $0xf0] sm:$0xff] %vm3606, %v3576
  %3638 = vst.msk [vmem:[%s6 + $0xf8] sm:$0xff] %vm3606, %v3579
  %3639 = vst.msk [vmem:[%s6 + $0x100] sm:$0xff] %vm3606, %v3584
  %3640 = vst.msk [vmem:[%s6 + $0x108] sm:$0xff] %vm3606, %v3587
  %3641 = vst.msk [vmem:[%s6 + $0x110] sm:$0xff] %vm3606, %v3592
  %3642 = vst.msk [vmem:[%s6 + $0x118] sm:$0xff] %vm3606, %v3595
  %3643 = vst.msk [vmem:[%s6 + $0x120] sm:$0xff] %vm3606, %v3600
  %3644 = vst.msk [vmem:[%s6 + $0x128] sm:$0xff] %vm3606, %v3603
  // Predicated region
  $region26: #{tpu_custom_call.1} parent=0 // pred_check
    _
  $region27: #{tpu_custom_call.1} parent=0 // pred_check_branch
    %3646 = sbr.rel (0) target = $region29
  $region28: #{tpu_custom_call.1} parent=0 // pred_region
    _
  $region29: #{tpu_custom_call.1} parent=0 // pred_fallthru
    _
  // Predicated region
  $region30: #{tpu_custom_call.1} parent=0 // pred_check
    _
  $region31: #{tpu_custom_call.1} parent=0 // pred_check_branch
    %3648 = sbr.rel (0) target = $region33
  $region32: #{tpu_custom_call.1} parent=0 // pred_region
    _
  $region33: #{tpu_custom_call.1} parent=0 // pred_fallthru
    _

</llo_original>
